<compile_context>
chip_gen: v5e
topology: v5e:2x2
jax: 0.10.0
libtpu: 0.0.40
codegen_flags: <defaults>
</compile_context>

<pallas_src>
import functools

import jax
import jax.numpy as jnp
from jax.experimental import pallas as pl
from jax.experimental.pallas import tpu as pltpu

_VMEM_LIMIT = 64 * 1024 * 1024   # <= physical VMEM on v5e/v6e (128 MiB) and v7x (64 MiB)


def _round_up(x, m):
    return ((x + m - 1) // m) * m


def _pick_time_block(T, max_block=32):
    """Prefer a large divisor of T (no padded steps); otherwise pad T instead of
    degrading to t_block=1 (the prime-T performance cliff)."""
    cap = min(T, max_block)
    for tb in range(cap, 0, -1):
        if T % tb == 0 and tb >= max(1, cap // 2):
            return tb
    return cap   # e.g. prime T: time axis will be padded to a multiple of cap


def _pad_gate_cols(w, H, Hp):
    """Pad each of the 4 PyTorch-ordered [i,f,g,o] gate column blocks from H to Hp."""
    if Hp == H:
        return w
    parts = [jnp.pad(w[:, k * H:(k + 1) * H], ((0, 0), (0, Hp - H))) for k in range(4)]
    return jnp.concatenate(parts, axis=1)


# ----------------------------------------------------------------------------
# Kernel 1: fused LSTM layer (input projection + serial recurrence).
# Grid = (batch blocks ['parallel'], time blocks ['arbitrary']).
# Gate order matches PyTorch: [i, f, g, o] along the 4Hp axis.
# ----------------------------------------------------------------------------
def lstm_layer_kernel(x_ref, wih_ref, whh_ref, b_ref, h0_ref, c0_ref,
                      y_ref, hn_ref, cn_ref, h_s, c_s,
                      *, hp, t_block, last_tb, last_tt):
    tb = pl.program_id(1)

    @pl.when(tb == 0)
    def _():
        h_s[...] = h0_ref[...]
        c_s[...] = c0_ref[...]

    bb = h_s.shape[0]
    e_in = x_ref.shape[-1]

    # Fused input projection for the whole time block: one big MXU matmul.
    # gx lives only in VMEM — no f32 gates_x HBM round trip.
    gx = (jnp.dot(x_ref[...].reshape(t_block * bb, e_in), wih_ref[...],
                  preferred_element_type=jnp.float32)
          + b_ref[...])                                   # (t_block*bb, 4Hp) f32

    h = h_s[...]
    c = c_s[...]
    # Statically unrolled serial recurrence: only h @ W_hh per step.
    for tt in range(t_block):
        gates = gx[tt * bb:(tt + 1) * bb] + jnp.dot(
            h.astype(whh_ref.dtype), whh_ref[...],
            preferred_element_type=jnp.float32)
        i_g = jax.nn.sigmoid(gates[:, 0 * hp:1 * hp])
        f_g = jax.nn.sigmoid(gates[:, 1 * hp:2 * hp])
        g_g = jnp.tanh(gates[:, 2 * hp:3 * hp])
        o_g = jax.nn.sigmoid(gates[:, 3 * hp:4 * hp])
        c = f_g * c + i_g * g_g
        h = o_g * jnp.tanh(c)
        y_ref[tt] = h.astype(y_ref.dtype)                 # bf16 inter-layer activations
        if tt == last_tt:                                 # static: true last real timestep
            @pl.when(tb == last_tb)
            def _(h=h, c=c):
                hn_ref[...] = h
                cn_ref[...] = c
    h_s[...] = h
    c_s[...] = c


def lstm_layer(x, wih, whh, bias, h0, c0, *, t_block, t_real):
    """x: (Tp, Bp, E) bf16; wih: (E, 4Hp) bf16; whh: (Hp, 4Hp) bf16;
    bias: (1, 4Hp) f32; h0/c0: (Bp, Hp) f32.
    Returns y (Tp, Bp, Hp) bf16, hn/cn (Bp, Hp) f32."""
    Tp, Bp, E = x.shape
    Hp = h0.shape[-1]
    # Use both TensorCores for the recurrence when the (padded) batch allows it.
    bb = Bp // 2 if (Bp >= 16 and Bp % 16 == 0) else Bp
    nb = Bp // bb
    nt = Tp // t_block
    last_tb = (t_real - 1) // t_block
    last_tt = (t_real - 1) % t_block

    kernel = functools.partial(lstm_layer_kernel, hp=Hp, t_block=t_block,
                               last_tb=last_tb, last_tt=last_tt)
    y, hn, cn = pl.pallas_call(
        kernel,
        out_shape=(jax.ShapeDtypeStruct((Tp, Bp, Hp), jnp.bfloat16),
                   jax.ShapeDtypeStruct((Bp, Hp), jnp.float32),
                   jax.ShapeDtypeStruct((Bp, Hp), jnp.float32)),
        grid_spec=pltpu.PrefetchScalarGridSpec(
            num_scalar_prefetch=0,
            grid=(nb, nt),
            in_specs=[
                pl.BlockSpec((t_block, bb, E), lambda b, t: (t, b, 0)),   # x (bf16)
                pl.BlockSpec((E, 4 * Hp), lambda b, t: (0, 0)),           # W_ih^T resident
                pl.BlockSpec((Hp, 4 * Hp), lambda b, t: (0, 0)),          # W_hh^T resident
                pl.BlockSpec((1, 4 * Hp), lambda b, t: (0, 0)),           # bias resident
                pl.BlockSpec((bb, Hp), lambda b, t: (b, 0)),              # h0
                pl.BlockSpec((bb, Hp), lambda b, t: (b, 0)),              # c0
            ],
            out_specs=(
                pl.BlockSpec((t_block, bb, Hp), lambda b, t: (t, b, 0)),  # y (bf16)
                pl.BlockSpec((bb, Hp), lambda b, t: (b, 0)),              # h_n
                pl.BlockSpec((bb, Hp), lambda b, t: (b, 0)),              # c_n
            ),
            scratch_shapes=[pltpu.VMEM((bb, Hp), jnp.float32),
                            pltpu.VMEM((bb, Hp), jnp.float32)],
        ),
        compiler_params=pltpu.CompilerParams(
            dimension_semantics=("parallel", "arbitrary"),
            vmem_limit_bytes=_VMEM_LIMIT),
    )(x, wih, whh, bias, h0, c0)
    return y, hn, cn


# ----------------------------------------------------------------------------
# Kernel 2: fused LayerNorm + Linear head, tiled over (T*B) rows and V columns.
# LayerNorm is computed once per row tile (j == 0) into bf16 VMEM scratch and
# reused for every vocab column tile (only MXU work per j).
# ----------------------------------------------------------------------------
def ln_fc_kernel(x_ref, gamma_ref, beta_ref, w_ref, b_ref, out_ref, y_s, *, eps):
    @pl.when(pl.program_id(1) == 0)
    def _():
        x = x_ref[...].astype(jnp.float32)
        mean = jnp.mean(x, axis=-1, keepdims=True)
        xc = x - mean
        var = jnp.mean(xc * xc, axis=-1, keepdims=True)   # biased, like torch LN
        y = xc * jax.lax.rsqrt(var + eps)
        y_s[...] = (y * gamma_ref[...] + beta_ref[...]).astype(y_s.dtype)
    out_ref[...] = (jnp.dot(y_s[...], w_ref[...], preferred_element_type=jnp.float32)
                    + b_ref[...])


def ln_fc(hseq, gamma, beta, fc_w, fc_b, eps=1e-5):
    """hseq: (M, H) bf16; gamma/beta: (1, H) f32; fc_w: (H, V) bf16; fc_b: (1, V) f32."""
    M, H = hseq.shape
    V = fc_w.shape[-1]
    tm = min(512, M)                       # M is always a multiple of 8 here
    Mp = _round_up(M, tm)
    tn = V if V <= 512 else 512            # V-tile the weight stream (lane-dense out)
    Vp = _round_up(V, tn)
    xp = jnp.pad(hseq, ((0, Mp - M), (0, 0))) if Mp != M else hseq
    wp = jnp.pad(fc_w, ((0, 0), (0, Vp - V))) if Vp != V else fc_w
    bp = jnp.pad(fc_b, ((0, 0), (0, Vp - V))) if Vp != V else fc_b

    kernel = functools.partial(ln_fc_kernel, eps=eps)
    out = pl.pallas_call(
        kernel,
        out_shape=jax.ShapeDtypeStruct((Mp, Vp), jnp.float32),
        grid_spec=pltpu.PrefetchScalarGridSpec(
            num_scalar_prefetch=0,
            grid=(Mp // tm, Vp // tn),
            in_specs=[
                pl.BlockSpec((tm, H), lambda i, j: (i, 0)),
                pl.BlockSpec((1, H), lambda i, j: (0, 0)),
                pl.BlockSpec((1, H), lambda i, j: (0, 0)),
                pl.BlockSpec((H, tn), lambda i, j: (0, j)),
                pl.BlockSpec((1, tn), lambda i, j: (0, j)),
            ],
            out_specs=pl.BlockSpec((tm, tn), lambda i, j: (i, j)),
            scratch_shapes=[pltpu.VMEM((tm, H), jnp.bfloat16)],
        ),
        compiler_params=pltpu.CompilerParams(
            dimension_semantics=("parallel", "arbitrary"),
            vmem_limit_bytes=_VMEM_LIMIT),
    )(xp, gamma, beta, wp, bp)
    return out[:M, :V]


# ----------------------------------------------------------------------------
# Parameter construction (deterministic) and full forward.
# ----------------------------------------------------------------------------
def init_params(key, vocab_size, embed_dim, hidden_dim, num_layers):
    keys = jax.random.split(key, 3 + 4 * num_layers)
    k = 1.0 / jnp.sqrt(hidden_dim)
    params = {
        "embedding": jax.random.normal(keys[0], (vocab_size, embed_dim), jnp.float32),
        "ln_gamma": jnp.ones((1, hidden_dim), jnp.float32),
        "ln_beta": jnp.zeros((1, hidden_dim), jnp.float32),
        # MXU operands in bf16 (f32 accumulation inside the kernels).
        "fc_w_t": jax.random.uniform(keys[1], (hidden_dim, vocab_size),
                                     jnp.float32, -k, k).astype(jnp.bfloat16),
        "fc_b": jax.random.uniform(keys[2], (1, vocab_size), jnp.float32, -k, k),
        "lstm": [],
    }
    for layer in range(num_layers):
        in_dim = embed_dim if layer == 0 else hidden_dim
        kw = keys[3 + 4 * layer: 3 + 4 * (layer + 1)]
        wih_t = jax.random.uniform(kw[0], (in_dim, 4 * hidden_dim),
                                   jnp.float32, -k, k).astype(jnp.bfloat16)
        whh_t = jax.random.uniform(kw[1], (hidden_dim, 4 * hidden_dim),
                                   jnp.float32, -k, k).astype(jnp.bfloat16)
        b_ih = jax.random.uniform(kw[2], (1, 4 * hidden_dim), jnp.float32, -k, k)
        b_hh = jax.random.uniform(kw[3], (1, 4 * hidden_dim), jnp.float32, -k, k)
        params["lstm"].append({"wih_t": wih_t, "whh_t": whh_t, "bias": b_ih + b_hh})
    return params


def rnn_model_forward(params, tokens, hidden=None):
    """tokens: int32 (B, T).  Returns (logits (B, T, V), (h_n, c_n) each (L, B, H))."""
    B, T = tokens.shape
    num_layers = len(params["lstm"])
    H = params["ln_gamma"].shape[-1]
    Hp = _round_up(H, 128)               # lane-aligned gate slices inside the kernel
    Bp = _round_up(B, 8)                 # pad batch to the f32 sublane tile
    t_block = _pick_time_block(T)
    Tp = _round_up(T, t_block)           # padded tail steps never feed real outputs

    # Embedding gather directly in time-major order; bf16 activations into layer 0.
    x = jnp.take(params["embedding"], tokens.T, axis=0).astype(jnp.bfloat16)  # (T,B,E)
    x = jnp.pad(x, ((0, Tp - T), (0, Bp - B), (0, 0)))

    if hidden is None:
        h0 = jnp.zeros((num_layers, Bp, Hp), jnp.float32)
        c0 = jnp.zeros((num_layers, Bp, Hp), jnp.float32)
    else:
        h0, c0 = hidden
        pad = ((0, 0), (0, Bp - B), (0, Hp - H))
        h0 = jnp.pad(h0.astype(jnp.float32), pad)
        c0 = jnp.pad(c0.astype(jnp.float32), pad)

    h_ns, c_ns = [], []
    for layer in range(num_layers):
        p = params["lstm"][layer]
        # Lane-align the 4 gate blocks (zero padding keeps padded state exactly 0).
        wih = _pad_gate_cols(p["wih_t"], H, Hp)
        if layer > 0:
            wih = jnp.pad(wih, ((0, Hp - H), (0, 0)))     # rows follow padded hidden
        whh = jnp.pad(_pad_gate_cols(p["whh_t"], H, Hp), ((0, Hp - H), (0, 0)))
        bias = _pad_gate_cols(p["bias"], H, Hp)
        x, hn, cn = lstm_layer(x, wih, whh, bias, h0[layer], c0[layer],
                               t_block=t_block, t_real=T)
        h_ns.append(hn[:B, :H])
        c_ns.append(cn[:B, :H])
        # TODO(synk): inter-layer LSTM dropout (training only) skipped — eval mode.

    # Fused LayerNorm + Linear head over (Tp*Bp, H) rows and V column tiles.
    x2 = x[..., :H].reshape(Tp * Bp, H)                   # bf16, drop hidden padding
    logits2d = ln_fc(x2, params["ln_gamma"], params["ln_beta"],
                     params["fc_w_t"], params["fc_b"])    # (Tp*Bp, V) f32
    V = logits2d.shape[-1]
    logits = logits2d.reshape(Tp, Bp, V)[:T, :B, :]       # drop time/batch padding
    logits = jnp.transpose(logits, (1, 0, 2))             # (B, T, V)
    return logits, (jnp.stack(h_ns, axis=0), jnp.stack(c_ns, axis=0))


# ----------------------------------------------------------------------------
# Pure-JAX reference (lax.scan) with matching numerics (bf16 MXU operands and
# bf16 inter-layer / pre-LN activations, f32 accumulation & elementwise).
# ----------------------------------------------------------------------------
def reference_forward(params, tokens, hidden=None):
    B, T = tokens.shape
    num_layers = len(params["lstm"])
    H = params["ln_gamma"].shape[-1]
    x = jnp.take(params["embedding"], tokens.T, axis=0).astype(jnp.float32)  # (T,B,E)
    if hidden is None:
        h0 = jnp.zeros((num_layers, B, H), jnp.float32)
        c0 = jnp.zeros((num_layers, B, H), jnp.float32)
    else:
        h0, c0 = hidden

    def bf16_dot(a, w):
        return jnp.dot(a.astype(jnp.bfloat16), w.astype(jnp.bfloat16),
                       preferred_element_type=jnp.float32)

    h_ns, c_ns = [], []
    for layer in range(num_layers):
        p = params["lstm"][layer]
        e_in = p["wih_t"].shape[0]
        gx = bf16_dot(x.reshape(T * B, e_in), p["wih_t"]).reshape(T, B, 4 * H)
        gx = gx + p["bias"]

        def step(carry, gx_t, p=p):
            h, c = carry
            gates = gx_t + bf16_dot(h, p["whh_t"])
            i = jax.nn.sigmoid(gates[:, :H])
            f = jax.nn.sigmoid(gates[:, H:2 * H])
            g = jnp.tanh(gates[:, 2 * H:3 * H])
            o = jax.nn.sigmoid(gates[:, 3 * H:])
            c = f * c + i * g
            h = o * jnp.tanh(c)
            return (h, c), h

        (hn, cn), x = jax.lax.scan(step, (h0[layer], c0[layer]), gx)
        h_ns.append(hn)
        c_ns.append(cn)

    # Kernel stores pre-LN activations in bf16; match that rounding.
    x = x.astype(jnp.bfloat16).astype(jnp.float32)
    mean = jnp.mean(x, axis=-1, keepdims=True)
    var = jnp.mean((x - mean) ** 2, axis=-1, keepdims=True)
    y = (x - mean) * jax.lax.rsqrt(var + 1e-5)
    y = y * params["ln_gamma"][0] + params["ln_beta"][0]
    logits = bf16_dot(y.reshape(T * B, H), params["fc_w_t"]).reshape(T, B, -1)
    logits = logits + params["fc_b"][0]
    return (jnp.transpose(logits, (1, 0, 2)),
            (jnp.stack(h_ns, axis=0), jnp.stack(c_ns, axis=0)))


if __name__ == "__main__":
    VOCAB, EMBED, HIDDEN, LAYERS = 32, 16, 32, 2
    BATCH, SEQ = 2, 8

    key = jax.random.PRNGKey(0)
    pkey, tkey = jax.random.split(key)
    params = init_params(pkey, VOCAB, EMBED, HIDDEN, LAYERS)
    tokens = jax.random.randint(tkey, (BATCH, SEQ), 0, VOCAB, dtype=jnp.int32)

    logits, (h_n, c_n) = rnn_model_forward(params, tokens)
    logits = jax.block_until_ready(logits)
    h_n = jax.block_until_ready(h_n)
    c_n = jax.block_until_ready(c_n)

    ref_logits, (ref_h, ref_c) = reference_forward(params, tokens)
    assert logits.shape == (BATCH, SEQ, VOCAB)
    assert h_n.shape == (LAYERS, BATCH, HIDDEN) and c_n.shape == (LAYERS, BATCH, HIDDEN)
    assert jnp.allclose(logits, ref_logits, atol=5e-3, rtol=5e-3)
    assert jnp.allclose(h_n, ref_h, atol=5e-3, rtol=5e-3)
    assert jnp.allclose(c_n, ref_c, atol=5e-3, rtol=5e-3)

    print("KERNEL_OK")
</pallas_src>

<mosaic_0001>
module attributes {stable_mosaic.version = 11 : i64} {
  func.func @lstm_layer_kernel(%arg0: i32, %arg1: i32, %arg2: memref<8x8x16xbf16, #tpu.memory_space<vmem>>, %arg3: memref<16x512xbf16, #tpu.memory_space<vmem>>, %arg4: memref<128x512xbf16, #tpu.memory_space<vmem>>, %arg5: memref<1x512xf32, #tpu.memory_space<vmem>>, %arg6: memref<8x128xf32, #tpu.memory_space<vmem>>, %arg7: memref<8x128xf32, #tpu.memory_space<vmem>>, %arg8: memref<8x8x128xbf16, #tpu.memory_space<vmem>>, %arg9: memref<8x128xf32, #tpu.memory_space<vmem>>, %arg10: memref<8x128xf32, #tpu.memory_space<vmem>>, %arg11: memref<8x128xf32, #tpu.memory_space<vmem>>, %arg12: memref<8x128xf32, #tpu.memory_space<vmem>>) attributes {dimension_semantics = [#tpu.dimension_semantics<parallel>, #tpu.dimension_semantics<arbitrary>], iteration_bounds = array<i64: 1, 1>, scalar_prefetch = 0 : i64, scratch_operands = 2 : i64, tpu.core_type = #tpu.core_type<tc>, window_params = [{transform_indices = @transform_0, window_bounds = array<i64: 8, 8, 16>}, {pipeline_mode = #tpu.pipeline_mode<synchronous>, transform_indices = @transform_1, window_bounds = array<i64: 16, 512>}, {pipeline_mode = #tpu.pipeline_mode<synchronous>, transform_indices = @transform_2, window_bounds = array<i64: 128, 512>}, {pipeline_mode = #tpu.pipeline_mode<synchronous>, transform_indices = @transform_3, window_bounds = array<i64: 1, 512>}, {transform_indices = @transform_4, window_bounds = array<i64: 8, 128>}, {transform_indices = @transform_5, window_bounds = array<i64: 8, 128>}, {transform_indices = @transform_6, window_bounds = array<i64: 8, 8, 128>}, {transform_indices = @transform_7, window_bounds = array<i64: 8, 128>}, {transform_indices = @transform_8, window_bounds = array<i64: 8, 128>}]} {
    %c0_i32 = arith.constant 0 : i32
    %0 = arith.cmpi eq, %arg1, %c0_i32 : i32
    %1 = arith.extui %0 : i1 to i32
    %c0_i32_0 = arith.constant 0 : i32
    %2 = arith.cmpi ne, %1, %c0_i32_0 : i32
    scf.if %2 {
      %c0_82 = arith.constant 0 : index
      %c0_83 = arith.constant 0 : index
      %289 = vector.load %arg6[%c0_82, %c0_83] : memref<8x128xf32, #tpu.memory_space<vmem>>, vector<8x128xf32>
      %c0_84 = arith.constant 0 : index
      %c0_85 = arith.constant 0 : index
      %290 = vector.load %arg11[%c0_84, %c0_85] : memref<8x128xf32, #tpu.memory_space<vmem>>, vector<8x128xf32>
      tpu.vector_store %arg11[%c0_84, %c0_85], %289 {strides = array<i32>} : memref<8x128xf32, #tpu.memory_space<vmem>>, vector<8x128xf32>,
      %c0_86 = arith.constant 0 : index
      %c0_87 = arith.constant 0 : index
      %291 = vector.load %arg7[%c0_86, %c0_87] : memref<8x128xf32, #tpu.memory_space<vmem>>, vector<8x128xf32>
      %c0_88 = arith.constant 0 : index
      %c0_89 = arith.constant 0 : index
      %292 = vector.load %arg12[%c0_88, %c0_89] : memref<8x128xf32, #tpu.memory_space<vmem>>, vector<8x128xf32>
      tpu.vector_store %arg12[%c0_88, %c0_89], %291 {strides = array<i32>} : memref<8x128xf32, #tpu.memory_space<vmem>>, vector<8x128xf32>,
    } else {
    }
    %c0 = arith.constant 0 : index
    %c0_1 = arith.constant 0 : index
    %c0_2 = arith.constant 0 : index
    %3 = vector.load %arg2[%c0, %c0_1, %c0_2] : memref<8x8x16xbf16, #tpu.memory_space<vmem>>, vector<8x8x16xbf16>
    %4 = vector.shape_cast %3 : vector<8x8x16xbf16> to vector<64x16xbf16>
    %c0_3 = arith.constant 0 : index
    %c0_4 = arith.constant 0 : index
    %5 = vector.load %arg3[%c0_3, %c0_4] : memref<16x512xbf16, #tpu.memory_space<vmem>>, vector<16x512xbf16>
    %cst = arith.constant dense<0.000000e+00> : vector<64x512xf32>
    %6 = tpu.matmul %4, %5, %cst {dimension_numbers = #tpu.dot_dimension_numbers<[1], [0], [0], [1], [0, 0, 1, 1], [], []>} : vector<64x16xbf16>, vector<16x512xbf16>, vector<64x512xf32> -> vector<64x512xf32>
    %c0_5 = arith.constant 0 : index
    %c0_6 = arith.constant 0 : index
    %7 = vector.load %arg5[%c0_5, %c0_6] : memref<1x512xf32, #tpu.memory_space<vmem>>, vector<1x512xf32>
    %8 = vector.broadcast %7 : vector<1x512xf32> to vector<64x512xf32>
    %9 = arith.addf %6, %8 : vector<64x512xf32>
    %c0_7 = arith.constant 0 : index
    %c0_8 = arith.constant 0 : index
    %10 = vector.load %arg11[%c0_7, %c0_8] : memref<8x128xf32, #tpu.memory_space<vmem>>, vector<8x128xf32>
    %c0_9 = arith.constant 0 : index
    %c0_10 = arith.constant 0 : index
    %11 = vector.load %arg12[%c0_9, %c0_10] : memref<8x128xf32, #tpu.memory_space<vmem>>, vector<8x128xf32>
    %12 = vector.extract_strided_slice %9 {offsets = [0, 0], sizes = [8, 512], strides = [1, 1]} : vector<64x512xf32> to vector<8x512xf32>
    %13 = arith.truncf %10 : vector<8x128xf32> to vector<8x128xbf16>
    %c0_11 = arith.constant 0 : index
    %c0_12 = arith.constant 0 : index
    %14 = vector.load %arg4[%c0_11, %c0_12] : memref<128x512xbf16, #tpu.memory_space<vmem>>, vector<128x512xbf16>
    %cst_13 = arith.constant dense<0.000000e+00> : vector<8x512xf32>
    %15 = tpu.matmul %13, %14, %cst_13 {dimension_numbers = #tpu.dot_dimension_numbers<[1], [0], [0], [1], [0, 0, 1, 1], [], []>} : vector<8x128xbf16>, vector<128x512xbf16>, vector<8x512xf32> -> vector<8x512xf32>
    %16 = arith.addf %12, %15 : vector<8x512xf32>
    %17 = vector.extract_strided_slice %16 {offsets = [0, 0], sizes = [8, 128], strides = [1, 1]} : vector<8x512xf32> to vector<8x128xf32>
    %18 = arith.negf %17 : vector<8x128xf32>
    %19 = math.exp %18 : vector<8x128xf32>
    %cst_14 = arith.constant 1.000000e+00 : f32
    %20 = vector.broadcast %cst_14 : f32 to vector<8x128xf32>
    %21 = arith.addf %20, %19 : vector<8x128xf32>
    %22 = arith.divf %20, %21 : vector<8x128xf32>
    %23 = vector.extract_strided_slice %16 {offsets = [0, 128], sizes = [8, 128], strides = [1, 1]} : vector<8x512xf32> to vector<8x128xf32>
    %24 = arith.negf %23 : vector<8x128xf32>
    %25 = math.exp %24 : vector<8x128xf32>
    %cst_15 = arith.constant 1.000000e+00 : f32
    %26 = vector.broadcast %cst_15 : f32 to vector<8x128xf32>
    %27 = arith.addf %26, %25 : vector<8x128xf32>
    %28 = arith.divf %26, %27 : vector<8x128xf32>
    %29 = vector.extract_strided_slice %16 {offsets = [0, 256], sizes = [8, 128], strides = [1, 1]} : vector<8x512xf32> to vector<8x128xf32>
    %30 = math.tanh %29 : vector<8x128xf32>
    %31 = vector.extract_strided_slice %16 {offsets = [0, 384], sizes = [8, 128], strides = [1, 1]} : vector<8x512xf32> to vector<8x128xf32>
    %32 = arith.negf %31 : vector<8x128xf32>
    %33 = math.exp %32 : vector<8x128xf32>
    %cst_16 = arith.constant 1.000000e+00 : f32
    %34 = vector.broadcast %cst_16 : f32 to vector<8x128xf32>
    %35 = arith.addf %34, %33 : vector<8x128xf32>
    %36 = arith.divf %34, %35 : vector<8x128xf32>
    %37 = arith.mulf %28, %11 : vector<8x128xf32>
    %38 = arith.mulf %22, %30 : vector<8x128xf32>
    %39 = arith.addf %37, %38 : vector<8x128xf32>
    %40 = math.tanh %39 : vector<8x128xf32>
    %41 = arith.mulf %36, %40 : vector<8x128xf32>
    %42 = arith.truncf %41 : vector<8x128xf32> to vector<8x128xbf16>
    %c0_17 = arith.constant 0 : index
    %c0_18 = arith.constant 0 : index
    %c0_19 = arith.constant 0 : index
    %43 = vector.load %arg8[%c0_17, %c0_18, %c0_19] : memref<8x8x128xbf16, #tpu.memory_space<vmem>>, vector<1x8x128xbf16>
    %44 = vector.shape_cast %43 : vector<1x8x128xbf16> to vector<8x128xbf16>
    %45 = vector.shape_cast %42 : vector<8x128xbf16> to vector<1x8x128xbf16>
    tpu.vector_store %arg8[%c0_17, %c0_18, %c0_19], %45 {strides = array<i32>} : memref<8x8x128xbf16, #tpu.memory_space<vmem>>, vector<1x8x128xbf16>,
    %46 = vector.extract_strided_slice %9 {offsets = [8, 0], sizes = [8, 512], strides = [1, 1]} : vector<64x512xf32> to vector<8x512xf32>
    %47 = arith.truncf %41 : vector<8x128xf32> to vector<8x128xbf16>
    %c0_20 = arith.constant 0 : index
    %c0_21 = arith.constant 0 : index
    %48 = vector.load %arg4[%c0_20, %c0_21] : memref<128x512xbf16, #tpu.memory_space<vmem>>, vector<128x512xbf16>
    %cst_22 = arith.constant dense<0.000000e+00> : vector<8x512xf32>
    %49 = tpu.matmul %47, %48, %cst_22 {dimension_numbers = #tpu.dot_dimension_numbers<[1], [0], [0], [1], [0, 0, 1, 1], [], []>} : vector<8x128xbf16>, vector<128x512xbf16>, vector<8x512xf32> -> vector<8x512xf32>
    %50 = arith.addf %46, %49 : vector<8x512xf32>
    %51 = vector.extract_strided_slice %50 {offsets = [0, 0], sizes = [8, 128], strides = [1, 1]} : vector<8x512xf32> to vector<8x128xf32>
    %52 = arith.negf %51 : vector<8x128xf32>
    %53 = math.exp %52 : vector<8x128xf32>
    %cst_23 = arith.constant 1.000000e+00 : f32
    %54 = vector.broadcast %cst_23 : f32 to vector<8x128xf32>
    %55 = arith.addf %54, %53 : vector<8x128xf32>
    %56 = arith.divf %54, %55 : vector<8x128xf32>
    %57 = vector.extract_strided_slice %50 {offsets = [0, 128], sizes = [8, 128], strides = [1, 1]} : vector<8x512xf32> to vector<8x128xf32>
    %58 = arith.negf %57 : vector<8x128xf32>
    %59 = math.exp %58 : vector<8x128xf32>
    %cst_24 = arith.constant 1.000000e+00 : f32
    %60 = vector.broadcast %cst_24 : f32 to vector<8x128xf32>
    %61 = arith.addf %60, %59 : vector<8x128xf32>
    %62 = arith.divf %60, %61 : vector<8x128xf32>
    %63 = vector.extract_strided_slice %50 {offsets = [0, 256], sizes = [8, 128], strides = [1, 1]} : vector<8x512xf32> to vector<8x128xf32>
    %64 = math.tanh %63 : vector<8x128xf32>
    %65 = vector.extract_strided_slice %50 {offsets = [0, 384], sizes = [8, 128], strides = [1, 1]} : vector<8x512xf32> to vector<8x128xf32>
    %66 = arith.negf %65 : vector<8x128xf32>
    %67 = math.exp %66 : vector<8x128xf32>
    %cst_25 = arith.constant 1.000000e+00 : f32
    %68 = vector.broadcast %cst_25 : f32 to vector<8x128xf32>
    %69 = arith.addf %68, %67 : vector<8x128xf32>
    %70 = arith.divf %68, %69 : vector<8x128xf32>
    %71 = arith.mulf %62, %39 : vector<8x128xf32>
    %72 = arith.mulf %56, %64 : vector<8x128xf32>
    %73 = arith.addf %71, %72 : vector<8x128xf32>
    %74 = math.tanh %73 : vector<8x128xf32>
    %75 = arith.mulf %70, %74 : vector<8x128xf32>
    %76 = arith.truncf %75 : vector<8x128xf32> to vector<8x128xbf16>
    %c1 = arith.constant 1 : index
    %c0_26 = arith.constant 0 : index
    %c0_27 = arith.constant 0 : index
    %77 = vector.load %arg8[%c1, %c0_26, %c0_27] : memref<8x8x128xbf16, #tpu.memory_space<vmem>>, vector<1x8x128xbf16>
    %78 = vector.shape_cast %77 : vector<1x8x128xbf16> to vector<8x128xbf16>
    %79 = vector.shape_cast %76 : vector<8x128xbf16> to vector<1x8x128xbf16>
    tpu.vector_store %arg8[%c1, %c0_26, %c0_27], %79 {strides = array<i32>} : memref<8x8x128xbf16, #tpu.memory_space<vmem>>, vector<1x8x128xbf16>,
    %80 = vector.extract_strided_slice %9 {offsets = [16, 0], sizes = [8, 512], strides = [1, 1]} : vector<64x512xf32> to vector<8x512xf32>
    %81 = arith.truncf %75 : vector<8x128xf32> to vector<8x128xbf16>
    %c0_28 = arith.constant 0 : index
    %c0_29 = arith.constant 0 : index
    %82 = vector.load %arg4[%c0_28, %c0_29] : memref<128x512xbf16, #tpu.memory_space<vmem>>, vector<128x512xbf16>
    %cst_30 = arith.constant dense<0.000000e+00> : vector<8x512xf32>
    %83 = tpu.matmul %81, %82, %cst_30 {dimension_numbers = #tpu.dot_dimension_numbers<[1], [0], [0], [1], [0, 0, 1, 1], [], []>} : vector<8x128xbf16>, vector<128x512xbf16>, vector<8x512xf32> -> vector<8x512xf32>
    %84 = arith.addf %80, %83 : vector<8x512xf32>
    %85 = vector.extract_strided_slice %84 {offsets = [0, 0], sizes = [8, 128], strides = [1, 1]} : vector<8x512xf32> to vector<8x128xf32>
    %86 = arith.negf %85 : vector<8x128xf32>
    %87 = math.exp %86 : vector<8x128xf32>
    %cst_31 = arith.constant 1.000000e+00 : f32
    %88 = vector.broadcast %cst_31 : f32 to vector<8x128xf32>
    %89 = arith.addf %88, %87 : vector<8x128xf32>
    %90 = arith.divf %88, %89 : vector<8x128xf32>
    %91 = vector.extract_strided_slice %84 {offsets = [0, 128], sizes = [8, 128], strides = [1, 1]} : vector<8x512xf32> to vector<8x128xf32>
    %92 = arith.negf %91 : vector<8x128xf32>
    %93 = math.exp %92 : vector<8x128xf32>
    %cst_32 = arith.constant 1.000000e+00 : f32
    %94 = vector.broadcast %cst_32 : f32 to vector<8x128xf32>
    %95 = arith.addf %94, %93 : vector<8x128xf32>
    %96 = arith.divf %94, %95 : vector<8x128xf32>
    %97 = vector.extract_strided_slice %84 {offsets = [0, 256], sizes = [8, 128], strides = [1, 1]} : vector<8x512xf32> to vector<8x128xf32>
    %98 = math.tanh %97 : vector<8x128xf32>
    %99 = vector.extract_strided_slice %84 {offsets = [0, 384], sizes = [8, 128], strides = [1, 1]} : vector<8x512xf32> to vector<8x128xf32>
    %100 = arith.negf %99 : vector<8x128xf32>
    %101 = math.exp %100 : vector<8x128xf32>
    %cst_33 = arith.constant 1.000000e+00 : f32
    %102 = vector.broadcast %cst_33 : f32 to vector<8x128xf32>
    %103 = arith.addf %102, %101 : vector<8x128xf32>
    %104 = arith.divf %102, %103 : vector<8x128xf32>
    %105 = arith.mulf %96, %73 : vector<8x128xf32>
    %106 = arith.mulf %90, %98 : vector<8x128xf32>
    %107 = arith.addf %105, %106 : vector<8x128xf32>
    %108 = math.tanh %107 : vector<8x128xf32>
    %109 = arith.mulf %104, %108 : vector<8x128xf32>
    %110 = arith.truncf %109 : vector<8x128xf32> to vector<8x128xbf16>
    %c2 = arith.constant 2 : index
    %c0_34 = arith.constant 0 : index
    %c0_35 = arith.constant 0 : index
    %111 = vector.load %arg8[%c2, %c0_34, %c0_35] : memref<8x8x128xbf16, #tpu.memory_space<vmem>>, vector<1x8x128xbf16>
    %112 = vector.shape_cast %111 : vector<1x8x128xbf16> to vector<8x128xbf16>
    %113 = vector.shape_cast %110 : vector<8x128xbf16> to vector<1x8x128xbf16>
    tpu.vector_store %arg8[%c2, %c0_34, %c0_35], %113 {strides = array<i32>} : memref<8x8x128xbf16, #tpu.memory_space<vmem>>, vector<1x8x128xbf16>,
    %114 = vector.extract_strided_slice %9 {offsets = [24, 0], sizes = [8, 512], strides = [1, 1]} : vector<64x512xf32> to vector<8x512xf32>
    %115 = arith.truncf %109 : vector<8x128xf32> to vector<8x128xbf16>
    %c0_36 = arith.constant 0 : index
    %c0_37 = arith.constant 0 : index
    %116 = vector.load %arg4[%c0_36, %c0_37] : memref<128x512xbf16, #tpu.memory_space<vmem>>, vector<128x512xbf16>
    %cst_38 = arith.constant dense<0.000000e+00> : vector<8x512xf32>
    %117 = tpu.matmul %115, %116, %cst_38 {dimension_numbers = #tpu.dot_dimension_numbers<[1], [0], [0], [1], [0, 0, 1, 1], [], []>} : vector<8x128xbf16>, vector<128x512xbf16>, vector<8x512xf32> -> vector<8x512xf32>
    %118 = arith.addf %114, %117 : vector<8x512xf32>
    %119 = vector.extract_strided_slice %118 {offsets = [0, 0], sizes = [8, 128], strides = [1, 1]} : vector<8x512xf32> to vector<8x128xf32>
    %120 = arith.negf %119 : vector<8x128xf32>
    %121 = math.exp %120 : vector<8x128xf32>
    %cst_39 = arith.constant 1.000000e+00 : f32
    %122 = vector.broadcast %cst_39 : f32 to vector<8x128xf32>
    %123 = arith.addf %122, %121 : vector<8x128xf32>
    %124 = arith.divf %122, %123 : vector<8x128xf32>
    %125 = vector.extract_strided_slice %118 {offsets = [0, 128], sizes = [8, 128], strides = [1, 1]} : vector<8x512xf32> to vector<8x128xf32>
    %126 = arith.negf %125 : vector<8x128xf32>
    %127 = math.exp %126 : vector<8x128xf32>
    %cst_40 = arith.constant 1.000000e+00 : f32
    %128 = vector.broadcast %cst_40 : f32 to vector<8x128xf32>
    %129 = arith.addf %128, %127 : vector<8x128xf32>
    %130 = arith.divf %128, %129 : vector<8x128xf32>
    %131 = vector.extract_strided_slice %118 {offsets = [0, 256], sizes = [8, 128], strides = [1, 1]} : vector<8x512xf32> to vector<8x128xf32>
    %132 = math.tanh %131 : vector<8x128xf32>
    %133 = vector.extract_strided_slice %118 {offsets = [0, 384], sizes = [8, 128], strides = [1, 1]} : vector<8x512xf32> to vector<8x128xf32>
    %134 = arith.negf %133 : vector<8x128xf32>
    %135 = math.exp %134 : vector<8x128xf32>
    %cst_41 = arith.constant 1.000000e+00 : f32
    %136 = vector.broadcast %cst_41 : f32 to vector<8x128xf32>
    %137 = arith.addf %136, %135 : vector<8x128xf32>
    %138 = arith.divf %136, %137 : vector<8x128xf32>
    %139 = arith.mulf %130, %107 : vector<8x128xf32>
    %140 = arith.mulf %124, %132 : vector<8x128xf32>
    %141 = arith.addf %139, %140 : vector<8x128xf32>
    %142 = math.tanh %141 : vector<8x128xf32>
    %143 = arith.mulf %138, %142 : vector<8x128xf32>
    %144 = arith.truncf %143 : vector<8x128xf32> to vector<8x128xbf16>
    %c3 = arith.constant 3 : index
    %c0_42 = arith.constant 0 : index
    %c0_43 = arith.constant 0 : index
    %145 = vector.load %arg8[%c3, %c0_42, %c0_43] : memref<8x8x128xbf16, #tpu.memory_space<vmem>>, vector<1x8x128xbf16>
    %146 = vector.shape_cast %145 : vector<1x8x128xbf16> to vector<8x128xbf16>
    %147 = vector.shape_cast %144 : vector<8x128xbf16> to vector<1x8x128xbf16>
    tpu.vector_store %arg8[%c3, %c0_42, %c0_43], %147 {strides = array<i32>} : memref<8x8x128xbf16, #tpu.memory_space<vmem>>, vector<1x8x128xbf16>,
    %148 = vector.extract_strided_slice %9 {offsets = [32, 0], sizes = [8, 512], strides = [1, 1]} : vector<64x512xf32> to vector<8x512xf32>
    %149 = arith.truncf %143 : vector<8x128xf32> to vector<8x128xbf16>
    %c0_44 = arith.constant 0 : index
    %c0_45 = arith.constant 0 : index
    %150 = vector.load %arg4[%c0_44, %c0_45] : memref<128x512xbf16, #tpu.memory_space<vmem>>, vector<128x512xbf16>
    %cst_46 = arith.constant dense<0.000000e+00> : vector<8x512xf32>
    %151 = tpu.matmul %149, %150, %cst_46 {dimension_numbers = #tpu.dot_dimension_numbers<[1], [0], [0], [1], [0, 0, 1, 1], [], []>} : vector<8x128xbf16>, vector<128x512xbf16>, vector<8x512xf32> -> vector<8x512xf32>
    %152 = arith.addf %148, %151 : vector<8x512xf32>
    %153 = vector.extract_strided_slice %152 {offsets = [0, 0], sizes = [8, 128], strides = [1, 1]} : vector<8x512xf32> to vector<8x128xf32>
    %154 = arith.negf %153 : vector<8x128xf32>
    %155 = math.exp %154 : vector<8x128xf32>
    %cst_47 = arith.constant 1.000000e+00 : f32
    %156 = vector.broadcast %cst_47 : f32 to vector<8x128xf32>
    %157 = arith.addf %156, %155 : vector<8x128xf32>
    %158 = arith.divf %156, %157 : vector<8x128xf32>
    %159 = vector.extract_strided_slice %152 {offsets = [0, 128], sizes = [8, 128], strides = [1, 1]} : vector<8x512xf32> to vector<8x128xf32>
    %160 = arith.negf %159 : vector<8x128xf32>
    %161 = math.exp %160 : vector<8x128xf32>
    %cst_48 = arith.constant 1.000000e+00 : f32
    %162 = vector.broadcast %cst_48 : f32 to vector<8x128xf32>
    %163 = arith.addf %162, %161 : vector<8x128xf32>
    %164 = arith.divf %162, %163 : vector<8x128xf32>
    %165 = vector.extract_strided_slice %152 {offsets = [0, 256], sizes = [8, 128], strides = [1, 1]} : vector<8x512xf32> to vector<8x128xf32>
    %166 = math.tanh %165 : vector<8x128xf32>
    %167 = vector.extract_strided_slice %152 {offsets = [0, 384], sizes = [8, 128], strides = [1, 1]} : vector<8x512xf32> to vector<8x128xf32>
    %168 = arith.negf %167 : vector<8x128xf32>
    %169 = math.exp %168 : vector<8x128xf32>
    %cst_49 = arith.constant 1.000000e+00 : f32
    %170 = vector.broadcast %cst_49 : f32 to vector<8x128xf32>
    %171 = arith.addf %170, %169 : vector<8x128xf32>
    %172 = arith.divf %170, %171 : vector<8x128xf32>
    %173 = arith.mulf %164, %141 : vector<8x128xf32>
    %174 = arith.mulf %158, %166 : vector<8x128xf32>
    %175 = arith.addf %173, %174 : vector<8x128xf32>
    %176 = math.tanh %175 : vector<8x128xf32>
    %177 = arith.mulf %172, %176 : vector<8x128xf32>
    %178 = arith.truncf %177 : vector<8x128xf32> to vector<8x128xbf16>
    %c4 = arith.constant 4 : index
    %c0_50 = arith.constant 0 : index
    %c0_51 = arith.constant 0 : index
    %179 = vector.load %arg8[%c4, %c0_50, %c0_51] : memref<8x8x128xbf16, #tpu.memory_space<vmem>>, vector<1x8x128xbf16>
    %180 = vector.shape_cast %179 : vector<1x8x128xbf16> to vector<8x128xbf16>
    %181 = vector.shape_cast %178 : vector<8x128xbf16> to vector<1x8x128xbf16>
    tpu.vector_store %arg8[%c4, %c0_50, %c0_51], %181 {strides = array<i32>} : memref<8x8x128xbf16, #tpu.memory_space<vmem>>, vector<1x8x128xbf16>,
    %182 = vector.extract_strided_slice %9 {offsets = [40, 0], sizes = [8, 512], strides = [1, 1]} : vector<64x512xf32> to vector<8x512xf32>
    %183 = arith.truncf %177 : vector<8x128xf32> to vector<8x128xbf16>
    %c0_52 = arith.constant 0 : index
    %c0_53 = arith.constant 0 : index
    %184 = vector.load %arg4[%c0_52, %c0_53] : memref<128x512xbf16, #tpu.memory_space<vmem>>, vector<128x512xbf16>
    %cst_54 = arith.constant dense<0.000000e+00> : vector<8x512xf32>
    %185 = tpu.matmul %183, %184, %cst_54 {dimension_numbers = #tpu.dot_dimension_numbers<[1], [0], [0], [1], [0, 0, 1, 1], [], []>} : vector<8x128xbf16>, vector<128x512xbf16>, vector<8x512xf32> -> vector<8x512xf32>
    %186 = arith.addf %182, %185 : vector<8x512xf32>
    %187 = vector.extract_strided_slice %186 {offsets = [0, 0], sizes = [8, 128], strides = [1, 1]} : vector<8x512xf32> to vector<8x128xf32>
    %188 = arith.negf %187 : vector<8x128xf32>
    %189 = math.exp %188 : vector<8x128xf32>
    %cst_55 = arith.constant 1.000000e+00 : f32
    %190 = vector.broadcast %cst_55 : f32 to vector<8x128xf32>
    %191 = arith.addf %190, %189 : vector<8x128xf32>
    %192 = arith.divf %190, %191 : vector<8x128xf32>
    %193 = vector.extract_strided_slice %186 {offsets = [0, 128], sizes = [8, 128], strides = [1, 1]} : vector<8x512xf32> to vector<8x128xf32>
    %194 = arith.negf %193 : vector<8x128xf32>
    %195 = math.exp %194 : vector<8x128xf32>
    %cst_56 = arith.constant 1.000000e+00 : f32
    %196 = vector.broadcast %cst_56 : f32 to vector<8x128xf32>
    %197 = arith.addf %196, %195 : vector<8x128xf32>
    %198 = arith.divf %196, %197 : vector<8x128xf32>
    %199 = vector.extract_strided_slice %186 {offsets = [0, 256], sizes = [8, 128], strides = [1, 1]} : vector<8x512xf32> to vector<8x128xf32>
    %200 = math.tanh %199 : vector<8x128xf32>
    %201 = vector.extract_strided_slice %186 {offsets = [0, 384], sizes = [8, 128], strides = [1, 1]} : vector<8x512xf32> to vector<8x128xf32>
    %202 = arith.negf %201 : vector<8x128xf32>
    %203 = math.exp %202 : vector<8x128xf32>
    %cst_57 = arith.constant 1.000000e+00 : f32
    %204 = vector.broadcast %cst_57 : f32 to vector<8x128xf32>
    %205 = arith.addf %204, %203 : vector<8x128xf32>
    %206 = arith.divf %204, %205 : vector<8x128xf32>
    %207 = arith.mulf %198, %175 : vector<8x128xf32>
    %208 = arith.mulf %192, %200 : vector<8x128xf32>
    %209 = arith.addf %207, %208 : vector<8x128xf32>
    %210 = math.tanh %209 : vector<8x128xf32>
    %211 = arith.mulf %206, %210 : vector<8x128xf32>
    %212 = arith.truncf %211 : vector<8x128xf32> to vector<8x128xbf16>
    %c5 = arith.constant 5 : index
    %c0_58 = arith.constant 0 : index
    %c0_59 = arith.constant 0 : index
    %213 = vector.load %arg8[%c5, %c0_58, %c0_59] : memref<8x8x128xbf16, #tpu.memory_space<vmem>>, vector<1x8x128xbf16>
    %214 = vector.shape_cast %213 : vector<1x8x128xbf16> to vector<8x128xbf16>
    %215 = vector.shape_cast %212 : vector<8x128xbf16> to vector<1x8x128xbf16>
    tpu.vector_store %arg8[%c5, %c0_58, %c0_59], %215 {strides = array<i32>} : memref<8x8x128xbf16, #tpu.memory_space<vmem>>, vector<1x8x128xbf16>,
    %216 = vector.extract_strided_slice %9 {offsets = [48, 0], sizes = [8, 512], strides = [1, 1]} : vector<64x512xf32> to vector<8x512xf32>
    %217 = arith.truncf %211 : vector<8x128xf32> to vector<8x128xbf16>
    %c0_60 = arith.constant 0 : index
    %c0_61 = arith.constant 0 : index
    %218 = vector.load %arg4[%c0_60, %c0_61] : memref<128x512xbf16, #tpu.memory_space<vmem>>, vector<128x512xbf16>
    %cst_62 = arith.constant dense<0.000000e+00> : vector<8x512xf32>
    %219 = tpu.matmul %217, %218, %cst_62 {dimension_numbers = #tpu.dot_dimension_numbers<[1], [0], [0], [1], [0, 0, 1, 1], [], []>} : vector<8x128xbf16>, vector<128x512xbf16>, vector<8x512xf32> -> vector<8x512xf32>
    %220 = arith.addf %216, %219 : vector<8x512xf32>
    %221 = vector.extract_strided_slice %220 {offsets = [0, 0], sizes = [8, 128], strides = [1, 1]} : vector<8x512xf32> to vector<8x128xf32>
    %222 = arith.negf %221 : vector<8x128xf32>
    %223 = math.exp %222 : vector<8x128xf32>
    %cst_63 = arith.constant 1.000000e+00 : f32
    %224 = vector.broadcast %cst_63 : f32 to vector<8x128xf32>
    %225 = arith.addf %224, %223 : vector<8x128xf32>
    %226 = arith.divf %224, %225 : vector<8x128xf32>
    %227 = vector.extract_strided_slice %220 {offsets = [0, 128], sizes = [8, 128], strides = [1, 1]} : vector<8x512xf32> to vector<8x128xf32>
    %228 = arith.negf %227 : vector<8x128xf32>
    %229 = math.exp %228 : vector<8x128xf32>
    %cst_64 = arith.constant 1.000000e+00 : f32
    %230 = vector.broadcast %cst_64 : f32 to vector<8x128xf32>
    %231 = arith.addf %230, %229 : vector<8x128xf32>
    %232 = arith.divf %230, %231 : vector<8x128xf32>
    %233 = vector.extract_strided_slice %220 {offsets = [0, 256], sizes = [8, 128], strides = [1, 1]} : vector<8x512xf32> to vector<8x128xf32>
    %234 = math.tanh %233 : vector<8x128xf32>
    %235 = vector.extract_strided_slice %220 {offsets = [0, 384], sizes = [8, 128], strides = [1, 1]} : vector<8x512xf32> to vector<8x128xf32>
    %236 = arith.negf %235 : vector<8x128xf32>
    %237 = math.exp %236 : vector<8x128xf32>
    %cst_65 = arith.constant 1.000000e+00 : f32
    %238 = vector.broadcast %cst_65 : f32 to vector<8x128xf32>
    %239 = arith.addf %238, %237 : vector<8x128xf32>
    %240 = arith.divf %238, %239 : vector<8x128xf32>
    %241 = arith.mulf %232, %209 : vector<8x128xf32>
    %242 = arith.mulf %226, %234 : vector<8x128xf32>
    %243 = arith.addf %241, %242 : vector<8x128xf32>
    %244 = math.tanh %243 : vector<8x128xf32>
    %245 = arith.mulf %240, %244 : vector<8x128xf32>
    %246 = arith.truncf %245 : vector<8x128xf32> to vector<8x128xbf16>
    %c6 = arith.constant 6 : index
    %c0_66 = arith.constant 0 : index
    %c0_67 = arith.constant 0 : index
    %247 = vector.load %arg8[%c6, %c0_66, %c0_67] : memref<8x8x128xbf16, #tpu.memory_space<vmem>>, vector<1x8x128xbf16>
    %248 = vector.shape_cast %247 : vector<1x8x128xbf16> to vector<8x128xbf16>
    %249 = vector.shape_cast %246 : vector<8x128xbf16> to vector<1x8x128xbf16>
    tpu.vector_store %arg8[%c6, %c0_66, %c0_67], %249 {strides = array<i32>} : memref<8x8x128xbf16, #tpu.memory_space<vmem>>, vector<1x8x128xbf16>,
    %250 = vector.extract_strided_slice %9 {offsets = [56, 0], sizes = [8, 512], strides = [1, 1]} : vector<64x512xf32> to vector<8x512xf32>
    %251 = arith.truncf %245 : vector<8x128xf32> to vector<8x128xbf16>
    %c0_68 = arith.constant 0 : index
    %c0_69 = arith.constant 0 : index
    %252 = vector.load %arg4[%c0_68, %c0_69] : memref<128x512xbf16, #tpu.memory_space<vmem>>, vector<128x512xbf16>
    %cst_70 = arith.constant dense<0.000000e+00> : vector<8x512xf32>
    %253 = tpu.matmul %251, %252, %cst_70 {dimension_numbers = #tpu.dot_dimension_numbers<[1], [0], [0], [1], [0, 0, 1, 1], [], []>} : vector<8x128xbf16>, vector<128x512xbf16>, vector<8x512xf32> -> vector<8x512xf32>
    %254 = arith.addf %250, %253 : vector<8x512xf32>
    %255 = vector.extract_strided_slice %254 {offsets = [0, 0], sizes = [8, 128], strides = [1, 1]} : vector<8x512xf32> to vector<8x128xf32>
    %256 = arith.negf %255 : vector<8x128xf32>
    %257 = math.exp %256 : vector<8x128xf32>
    %cst_71 = arith.constant 1.000000e+00 : f32
    %258 = vector.broadcast %cst_71 : f32 to vector<8x128xf32>
    %259 = arith.addf %258, %257 : vector<8x128xf32>
    %260 = arith.divf %258, %259 : vector<8x128xf32>
    %261 = vector.extract_strided_slice %254 {offsets = [0, 128], sizes = [8, 128], strides = [1, 1]} : vector<8x512xf32> to vector<8x128xf32>
    %262 = arith.negf %261 : vector<8x128xf32>
    %263 = math.exp %262 : vector<8x128xf32>
    %cst_72 = arith.constant 1.000000e+00 : f32
    %264 = vector.broadcast %cst_72 : f32 to vector<8x128xf32>
    %265 = arith.addf %264, %263 : vector<8x128xf32>
    %266 = arith.divf %264, %265 : vector<8x128xf32>
    %267 = vector.extract_strided_slice %254 {offsets = [0, 256], sizes = [8, 128], strides = [1, 1]} : vector<8x512xf32> to vector<8x128xf32>
    %268 = math.tanh %267 : vector<8x128xf32>
    %269 = vector.extract_strided_slice %254 {offsets = [0, 384], sizes = [8, 128], strides = [1, 1]} : vector<8x512xf32> to vector<8x128xf32>
    %270 = arith.negf %269 : vector<8x128xf32>
    %271 = math.exp %270 : vector<8x128xf32>
    %cst_73 = arith.constant 1.000000e+00 : f32
    %272 = vector.broadcast %cst_73 : f32 to vector<8x128xf32>
    %273 = arith.addf %272, %271 : vector<8x128xf32>
    %274 = arith.divf %272, %273 : vector<8x128xf32>
    %275 = arith.mulf %266, %243 : vector<8x128xf32>
    %276 = arith.mulf %260, %268 : vector<8x128xf32>
    %277 = arith.addf %275, %276 : vector<8x128xf32>
    %278 = math.tanh %277 : vector<8x128xf32>
    %279 = arith.mulf %274, %278 : vector<8x128xf32>
    %280 = arith.truncf %279 : vector<8x128xf32> to vector<8x128xbf16>
    %c7 = arith.constant 7 : index
    %c0_74 = arith.constant 0 : index
    %c0_75 = arith.constant 0 : index
    %281 = vector.load %arg8[%c7, %c0_74, %c0_75] : memref<8x8x128xbf16, #tpu.memory_space<vmem>>, vector<1x8x128xbf16>
    %282 = vector.shape_cast %281 : vector<1x8x128xbf16> to vector<8x128xbf16>
    %283 = vector.shape_cast %280 : vector<8x128xbf16> to vector<1x8x128xbf16>
    tpu.vector_store %arg8[%c7, %c0_74, %c0_75], %283 {strides = array<i32>} : memref<8x8x128xbf16, #tpu.memory_space<vmem>>, vector<1x8x128xbf16>,
    %c0_i32_76 = arith.constant 0 : i32
    %284 = arith.cmpi eq, %arg1, %c0_i32_76 : i32
    %285 = arith.extui %284 : i1 to i32
    %c0_i32_77 = arith.constant 0 : i32
    %286 = arith.cmpi ne, %285, %c0_i32_77 : i32
    scf.if %286 {
      %c0_82 = arith.constant 0 : index
      %c0_83 = arith.constant 0 : index
      %289 = vector.load %arg9[%c0_82, %c0_83] : memref<8x128xf32, #tpu.memory_space<vmem>>, vector<8x128xf32>
      tpu.vector_store %arg9[%c0_82, %c0_83], %279 {strides = array<i32>} : memref<8x128xf32, #tpu.memory_space<vmem>>, vector<8x128xf32>,
      %c0_84 = arith.constant 0 : index
      %c0_85 = arith.constant 0 : index
      %290 = vector.load %arg10[%c0_84, %c0_85] : memref<8x128xf32, #tpu.memory_space<vmem>>, vector<8x128xf32>
      tpu.vector_store %arg10[%c0_84, %c0_85], %277 {strides = array<i32>} : memref<8x128xf32, #tpu.memory_space<vmem>>, vector<8x128xf32>,
    } else {
    }
    %c0_78 = arith.constant 0 : index
    %c0_79 = arith.constant 0 : index
    %287 = vector.load %arg11[%c0_78, %c0_79] : memref<8x128xf32, #tpu.memory_space<vmem>>, vector<8x128xf32>
    tpu.vector_store %arg11[%c0_78, %c0_79], %279 {strides = array<i32>} : memref<8x128xf32, #tpu.memory_space<vmem>>, vector<8x128xf32>,
    %c0_80 = arith.constant 0 : index
    %c0_81 = arith.constant 0 : index
    %288 = vector.load %arg12[%c0_80, %c0_81] : memref<8x128xf32, #tpu.memory_space<vmem>>, vector<8x128xf32>
    tpu.vector_store %arg12[%c0_80, %c0_81], %277 {strides = array<i32>} : memref<8x128xf32, #tpu.memory_space<vmem>>, vector<8x128xf32>,
    return
  }
  func.func @transform_0(%arg0: i32, %arg1: i32) -> (i32, i32, i32) {
    %c0_i32 = arith.constant 0 : i32
    %c0_i32_0 = arith.constant 0 : i32
    return %arg1, %arg0, %c0_i32 : i32, i32, i32
  }
  func.func @transform_1(%arg0: i32, %arg1: i32) -> (i32, i32) {
    %c0_i32 = arith.constant 0 : i32
    %c0_i32_0 = arith.constant 0 : i32
    %c0_i32_1 = arith.constant 0 : i32
    return %c0_i32, %c0_i32_0 : i32, i32
  }
  func.func @transform_2(%arg0: i32, %arg1: i32) -> (i32, i32) {
    %c0_i32 = arith.constant 0 : i32
    %c0_i32_0 = arith.constant 0 : i32
    %c0_i32_1 = arith.constant 0 : i32
    return %c0_i32, %c0_i32_0 : i32, i32
  }
  func.func @transform_3(%arg0: i32, %arg1: i32) -> (i32, i32) {
    %c0_i32 = arith.constant 0 : i32
    %c0_i32_0 = arith.constant 0 : i32
    %c0_i32_1 = arith.constant 0 : i32
    return %c0_i32, %c0_i32_0 : i32, i32
  }
  func.func @transform_4(%arg0: i32, %arg1: i32) -> (i32, i32) {
    %c0_i32 = arith.constant 0 : i32
    %c0_i32_0 = arith.constant 0 : i32
    return %arg0, %c0_i32 : i32, i32
  }
  func.func @transform_5(%arg0: i32, %arg1: i32) -> (i32, i32) {
    %c0_i32 = arith.constant 0 : i32
    %c0_i32_0 = arith.constant 0 : i32
    return %arg0, %c0_i32 : i32, i32
  }
  func.func @transform_6(%arg0: i32, %arg1: i32) -> (i32, i32, i32) {
    %c0_i32 = arith.constant 0 : i32
    %c0_i32_0 = arith.constant 0 : i32
    return %arg1, %arg0, %c0_i32 : i32, i32, i32
  }
  func.func @transform_7(%arg0: i32, %arg1: i32) -> (i32, i32) {
    %c0_i32 = arith.constant 0 : i32
    %c0_i32_0 = arith.constant 0 : i32
    return %arg0, %c0_i32 : i32, i32
  }
  func.func @transform_8(%arg0: i32, %arg1: i32) -> (i32, i32) {
    %c0_i32 = arith.constant 0 : i32
    %c0_i32_0 = arith.constant 0 : i32
    return %arg0, %c0_i32 : i32, i32
  }
}

</mosaic_0001>

<llo_original>
// kernel: tpu_custom_call.1
$region0: #{tpu_custom_call.1}
  #allocation0 [shape = 'u32[]', space=smem, size = 0x4, offset = 0x4, fixed_abs, tag = 'smem constant byte address 0x4 - core index']
  #allocation1 [shape = 'u32[72,128]{1,0:T(1,128)}', space=vmem, size = 0x9000, scoped, tag = 'internal scratch']
  #allocation2 [shape = 'f32[8,128]{1,0:T(8,128)}', space=vmem, size = 0x1000, scoped, tag = 'scratch operand']
  #allocation3 [shape = 'f32[8,128]{1,0:T(8,128)}', space=vmem, size = 0x1000, scoped, tag = 'scratch operand']
  %s0 = inlined_call_operand.hbm [shape: bf16[8,8,16], index: 0, kind: input, shape index: {}]
  %s1 = inlined_call_operand.hbm [shape: bf16[16,512], index: 1, kind: input, shape index: {}]
  %s2 = inlined_call_operand.hbm [shape: bf16[128,512], index: 2, kind: input, shape index: {}]
  %s3 = inlined_call_operand.hbm [shape: f32[1,512], index: 3, kind: input, shape index: {}]
  %s4 = inlined_call_operand.hbm [shape: f32[8,128], index: 4, kind: input, shape index: {}]
  %s5 = inlined_call_operand.hbm [shape: f32[8,128], index: 5, kind: input, shape index: {}]
  %s6 = inlined_call_operand.hbm [shape: bf16[8,8,128], index: 6, kind: output, shape index: {0}]
  %s7 = inlined_call_operand.hbm [shape: f32[8,128], index: 7, kind: output, shape index: {1}]
  %s8 = inlined_call_operand.hbm [shape: f32[8,128], index: 8, kind: output, shape index: {2}]
  %9 = xla_tuple %s6, %s7, %s8
  %s10 = sld [smem:[#allocation0]]
  $region82: #{tpu_custom_call.1} parent=0
    _
  %s12 = ssub.s32 1, %s10
  %s13 = scalar_select 0, %s12, %s10
  $region1: #{tpu_custom_call.1} parent=0
    #allocation4 [shape = 'u8[16384]{0}', space=vmem, size = 0x4000, scoped, tag = 'input window, operand 0, single buffered']
    #allocation5 [shape = 's32[1]{0}', space=sflag, size = 0x4, scoped, tag = 'scoped memory for tpu_custom_call.1']
    #allocation6 [shape = 's32[1]{0}', space=sflag, size = 0x4, scoped, tag = 'scoped memory for tpu_custom_call.1']
    #allocation7 [shape = 'u8[16384]{0}', space=vmem, size = 0x4000, scoped, tag = 'input window, operand 1, single buffered']
    #allocation8 [shape = 's32[1]{0}', space=sflag, size = 0x4, scoped, tag = 'scoped memory for tpu_custom_call.1']
    #allocation9 [shape = 'u8[131072]{0}', space=vmem, size = 0x20000, scoped, tag = 'input window, operand 2, single buffered']
    #allocation10 [shape = 'u8[2048]{0}', space=vmem, size = 0x800, scoped, tag = 'input window, operand 3, single buffered']
    #allocation11 [shape = 's32[1]{0}', space=sflag, size = 0x4, scoped, tag = 'scoped memory for tpu_custom_call.1']
    #allocation12 [shape = 'u8[4096]{0}', space=vmem, size = 0x1000, scoped, tag = 'input window, operand 4, single buffered']
    #allocation13 [shape = 'u8[4096]{0}', space=vmem, size = 0x1000, scoped, tag = 'input window, operand 5, single buffered']
    #allocation14 [shape = 's32[1]{0}', space=sflag, size = 0x4, scoped, tag = 'scoped memory for tpu_custom_call.1']
    #allocation15 [shape = 'u8[16384]{0}', space=vmem, size = 0x4000, scoped, tag = 'output window, operand 0, single buffered']
    #allocation16 [shape = 'u8[4096]{0}', space=vmem, size = 0x1000, scoped, tag = 'output window, operand 1, single buffered']
    #allocation17 [shape = 's32[1]{0}', space=sflag, size = 0x4, scoped, tag = 'scoped memory for tpu_custom_call.1']
    #allocation18 [shape = 'u8[4096]{0}', space=vmem, size = 0x1000, scoped, tag = 'output window, operand 2, single buffered']
    %14 = vsyncpa [#allocation5], 0
    %15 = vsyncpa [#allocation8], 0
    %16 = vsyncpa [#allocation11], 0
    %17 = vsyncpa [#allocation14], 0
    %18 = vsyncpa [#allocation6], 0
    %19 = vsyncpa [#allocation17], 0
    // Predicated region
    $region2: #{tpu_custom_call.1} parent=1 // pred_check
      _
    $region3: #{tpu_custom_call.1} parent=1 // pred_check_branch
      %21 = sbr.rel (0) target = $region5
    $region4: #{tpu_custom_call.1} parent=1 // pred_region
      %23 = vsyncadd [#allocation5], 0
      %s24 = sshll.u32 %s0, 4
      %s25 = int_to_ptr.hbm [resolvable:$true] %s24
      %s26 = sshll.u32 [#allocation4], 4
      %s27 = int_to_ptr.vmem [resolvable:$true] %s26
      %32 = dma.hbm_to_vmem [thread:$0]  %s25, 512, %s27, [#allocation5], 64, 64, 4
    $region5: #{tpu_custom_call.1} parent=1 // pred_fallthru
      _
    // Predicated region
    $region6: #{tpu_custom_call.1} parent=1 // pred_check
      _
    $region7: #{tpu_custom_call.1} parent=1 // pred_check_branch
      %34 = sbr.rel (0) target = $region9
    $region8: #{tpu_custom_call.1} parent=1 // pred_region
      %36 = vsyncadd [#allocation8], 0
      %s37 = sshll.u32 %s1, 4
      %s38 = int_to_ptr.hbm [resolvable:$true] %s37
      %s39 = sshll.u32 [#allocation7], 4
      %s40 = int_to_ptr.vmem [resolvable:$true] %s39
      %45 = dma.hbm_to_vmem [thread:$0]  %s38, 512, %s40, [#allocation8], 256, 256, 16
    $region9: #{tpu_custom_call.1} parent=1 // pred_fallthru
      _
    // Predicated region
    $region10: #{tpu_custom_call.1} parent=1 // pred_check
      _
    $region11: #{tpu_custom_call.1} parent=1 // pred_check_branch
      %47 = sbr.rel (0) target = $region13
    $region12: #{tpu_custom_call.1} parent=1 // pred_region
      %49 = vsyncadd [#allocation8], 0
      %s50 = sshll.u32 %s2, 4
      %s51 = int_to_ptr.hbm [resolvable:$true] %s50
      %s52 = sshll.u32 [#allocation9], 4
      %s53 = int_to_ptr.vmem [resolvable:$true] %s52
      %58 = dma.hbm_to_vmem [thread:$0]  %s51, 4096, %s53, [#allocation8], 256, 256, 16
    $region13: #{tpu_custom_call.1} parent=1 // pred_fallthru
      _
    // Predicated region
    $region14: #{tpu_custom_call.1} parent=1 // pred_check
      _
    $region15: #{tpu_custom_call.1} parent=1 // pred_check_branch
      %60 = sbr.rel (0) target = $region17
    $region16: #{tpu_custom_call.1} parent=1 // pred_region
      %62 = vsyncadd [#allocation11], 0
      %s64 = sshll.u32 %s3, 4
      %s65 = int_to_ptr.hbm [resolvable:$true] %s64
      %s66 = sshll.u32 [#allocation10], 4
      %s67 = int_to_ptr.vmem [resolvable:$true] %s66
      %69 = dma.hbm_to_vmem [thread:$0]  %s65, 64, %s67, [#allocation11]
    $region17: #{tpu_custom_call.1} parent=1 // pred_fallthru
      _
    // Predicated region
    $region18: #{tpu_custom_call.1} parent=1 // pred_check
      _
    $region19: #{tpu_custom_call.1} parent=1 // pred_check_branch
      %71 = sbr.rel (0) target = $region21
    $region20: #{tpu_custom_call.1} parent=1 // pred_region
      %73 = vsyncadd [#allocation11], 0
      %s75 = sshll.u32 %s4, 4
      %s76 = int_to_ptr.hbm [resolvable:$true] %s75
      %s77 = sshll.u32 [#allocation12], 4
      %s78 = int_to_ptr.vmem [resolvable:$true] %s77
      %80 = dma.hbm_to_vmem [thread:$0]  %s76, 128, %s78, [#allocation11]
    $region21: #{tpu_custom_call.1} parent=1 // pred_fallthru
      _
    // Predicated region
    $region22: #{tpu_custom_call.1} parent=1 // pred_check
      _
    $region23: #{tpu_custom_call.1} parent=1 // pred_check_branch
      %82 = sbr.rel (0) target = $region25
    $region24: #{tpu_custom_call.1} parent=1 // pred_region
      %84 = vsyncadd [#allocation14], 0
      %s86 = sshll.u32 %s5, 4
      %s87 = int_to_ptr.hbm [resolvable:$true] %s86
      %s88 = sshll.u32 [#allocation13], 4
      %s89 = int_to_ptr.vmem [resolvable:$true] %s88
      %91 = dma.hbm_to_vmem [thread:$0]  %s87, 128, %s89, [#allocation14]
    $region25: #{tpu_custom_call.1} parent=1 // pred_fallthru
      _
    // Predicated region
    $region26: #{tpu_custom_call.1} parent=1 // pred_check
      _
    $region27: #{tpu_custom_call.1} parent=1 // pred_check_branch
      %93 = sbr.rel (0) target = $region29
    $region28: #{tpu_custom_call.1} parent=1 // pred_region
      %95 = dma.done [#allocation5], 512
    $region29: #{tpu_custom_call.1} parent=1 // pred_fallthru
      _
    // Predicated region
    $region30: #{tpu_custom_call.1} parent=1 // pred_check
      _
    $region31: #{tpu_custom_call.1} parent=1 // pred_check_branch
      %97 = sbr.rel (0) target = $region33
    $region32: #{tpu_custom_call.1} parent=1 // pred_region
      %99 = dma.done [#allocation8], 512
    $region33: #{tpu_custom_call.1} parent=1 // pred_fallthru
      _
    // Predicated region
    $region34: #{tpu_custom_call.1} parent=1 // pred_check
      _
    $region35: #{tpu_custom_call.1} parent=1 // pred_check_branch
      %101 = sbr.rel (0) target = $region37
    $region36: #{tpu_custom_call.1} parent=1 // pred_region
      %103 = dma.done [#allocation8], 4096
    $region37: #{tpu_custom_call.1} parent=1 // pred_fallthru
      _
    // Predicated region
    $region38: #{tpu_custom_call.1} parent=1 // pred_check
      _
    $region39: #{tpu_custom_call.1} parent=1 // pred_check_branch
      %105 = sbr.rel (0) target = $region41
    $region40: #{tpu_custom_call.1} parent=1 // pred_region
      %107 = dma.done [#allocation11], 64
    $region41: #{tpu_custom_call.1} parent=1 // pred_fallthru
      _
    // Predicated region
    $region42: #{tpu_custom_call.1} parent=1 // pred_check
      _
    $region43: #{tpu_custom_call.1} parent=1 // pred_check_branch
      %109 = sbr.rel (0) target = $region45
    $region44: #{tpu_custom_call.1} parent=1 // pred_region
      %111 = dma.done [#allocation11], 128
    $region45: #{tpu_custom_call.1} parent=1 // pred_fallthru
      _
    // Predicated region
    $region46: #{tpu_custom_call.1} parent=1 // pred_check
      _
    $region47: #{tpu_custom_call.1} parent=1 // pred_check_branch
      %113 = sbr.rel (0) target = $region49
    $region48: #{tpu_custom_call.1} parent=1 // pred_region
      %115 = dma.done [#allocation14], 128
    $region49: #{tpu_custom_call.1} parent=1 // pred_fallthru
      _
    %p117 = scmp.eq.s32.totalorder 0, 0
    // Predicated region
    $region50: #{tpu_custom_call.1} parent=1 // pred_check
      %p118 = pneg %p117
    $region51: #{tpu_custom_call.1} parent=1 // pred_check_branch
      %120 = sbr.rel (%p118) target = $region53
    $region52: #{tpu_custom_call.1} parent=1 // pred_region
      %v121 = vld [vmem:[#allocation12] sm:$0xff]
      %122 = vst [vmem:[#allocation2] sm:$0xff] %v121
      %v123 = vld [vmem:[#allocation13] sm:$0xff]
      %124 = vst [vmem:[#allocation3] sm:$0xff] %v123
    $region53: #{tpu_custom_call.1} parent=1 // pred_fallthru
      _
    %v125 = vld [vmem:[#allocation4] sm:$0xf]
    %v126 = vld [vmem:[#allocation4 + $0x4] sm:$0xf]
    %v127 = vld [vmem:[#allocation4 + $0x8] sm:$0xf]
    %v128 = vld [vmem:[#allocation4 + $0xc] sm:$0xf]
    %v129 = vld [vmem:[#allocation4 + $0x10] sm:$0xf]
    %v130 = vld [vmem:[#allocation4 + $0x14] sm:$0xf]
    %v131 = vld [vmem:[#allocation4 + $0x18] sm:$0xf]
    %v132 = vld [vmem:[#allocation4 + $0x1c] sm:$0xf]
    %v133 = vld [vmem:[#allocation7] sm:$0xff]
    %v134 = vld [vmem:[#allocation7 + $0x8] sm:$0xff]
    %v135 = vld [vmem:[#allocation7 + $0x10] sm:$0xff]
    %v136 = vld [vmem:[#allocation7 + $0x18] sm:$0xff]
    %v137 = vld [vmem:[#allocation10] sm:$0xf]
    %v139 = vperm.slane %v137, 0
    %v140 = vperm.slane %v137, 1
    %v141 = vperm.slane %v137, 2
    %v142 = vperm.slane %v137, 3
    %v155 = vunpack.c.l.b16 %v125
    %v156 = vunpack.c.l.b16 %v126
    %v157 = vunpack.c.l.b16 %v127
    %v158 = vunpack.c.l.b16 %v128
    %v159 = vunpack.c.l.b16 %v129
    %v160 = vunpack.c.l.b16 %v130
    %v161 = vunpack.c.l.b16 %v131
    %v162 = vunpack.c.l.b16 %v132
    %v163 = vpack.c.b16 %v156, %v155
    %v164 = vpack.c.b16 %v158, %v157
    %v165 = vpack.c.b16 %v160, %v159
    %v166 = vpack.c.b16 %v162, %v161
    %v171 = vunpack.c.l.b16 %v133
    %v172 = vunpack.c.h.b16 %v133
    %v173 = vunpack.c.l.b16 %v134
    %v174 = vunpack.c.h.b16 %v134
    %v175 = vunpack.c.l.b16 %v135
    %v176 = vunpack.c.h.b16 %v135
    %v177 = vunpack.c.l.b16 %v136
    %v178 = vunpack.c.h.b16 %v136
    %v179 = vpack.c.b16 %v175, %v171
    %v180 = vpack.c.b16 %v176, %v172
    %v181 = vpack.c.b16 %v177, %v173
    %v182 = vpack.c.b16 %v178, %v174
    %vm187 = vcmask 130048
    %v189 = vsel %vm187, %v163, 0
    %v192 = vsel %vm187, %v164, 0
    %v195 = vsel %vm187, %v165, 0
    %v198 = vsel %vm187, %v166, 0
    %200 = vmatpush.bf16.msra.mxu0 0
    %201 = vmatpush.bf16.msra.mxu0 0
    %202 = vmatpush.bf16.msra.mxu0 0
    %203 = vmatpush.bf16.msra.mxu0 0
    %204 = vmatpush.bf16.msra.mxu0 0
    %205 = vmatpush.bf16.msra.mxu0 0
    %206 = vmatpush.bf16.msra.mxu0 0
    %207 = vmatpush.bf16.msra.mxu0 %v179
    %208 = vmatmul.bf16.gmra.mxu0 %v189
    %v209 = vpop.f32.mrf.mxu0
    %v210 = vadd.f32 %v139, %v209
    %v211 = vpop.f32.mrf.mxu0
    %v212 = vadd.f32 %v139, %v211
    %213 = vmatmul.bf16.gmra.mxu0 %v192
    %v214 = vpop.f32.mrf.mxu0
    %v215 = vadd.f32 %v139, %v214
    %v216 = vpop.f32.mrf.mxu0
    %v217 = vadd.f32 %v139, %v216
    %218 = vmatmul.bf16.gmra.mxu0 %v195
    %v219 = vpop.f32.mrf.mxu0
    %v220 = vadd.f32 %v139, %v219
    %v221 = vpop.f32.mrf.mxu0
    %v222 = vadd.f32 %v139, %v221
    %223 = vmatmul.bf16.gmra.mxu0 %v198
    %v224 = vpop.f32.mrf.mxu0
    %v225 = vadd.f32 %v139, %v224
    %v226 = vpop.f32.mrf.mxu0
    %v227 = vadd.f32 %v139, %v226
    %228 = vdwg.mxu0
    %229 = vmatpush.bf16.msra.mxu0 0
    %230 = vmatpush.bf16.msra.mxu0 0
    %231 = vmatpush.bf16.msra.mxu0 0
    %232 = vmatpush.bf16.msra.mxu0 0
    %233 = vmatpush.bf16.msra.mxu0 0
    %234 = vmatpush.bf16.msra.mxu0 0
    %235 = vmatpush.bf16.msra.mxu0 0
    %236 = vmatpush.bf16.msra.mxu0 %v180
    %237 = vmatmul.bf16.gmra.mxu0 %v189
    %v238 = vpop.f32.mrf.mxu0
    %v239 = vadd.f32 %v140, %v238
    %v240 = vpop.f32.mrf.mxu0
    %v241 = vadd.f32 %v140, %v240
    %242 = vmatmul.bf16.gmra.mxu0 %v192
    %v243 = vpop.f32.mrf.mxu0
    %v244 = vadd.f32 %v140, %v243
    %v245 = vpop.f32.mrf.mxu0
    %v246 = vadd.f32 %v140, %v245
    %247 = vmatmul.bf16.gmra.mxu0 %v195
    %v248 = vpop.f32.mrf.mxu0
    %v249 = vadd.f32 %v140, %v248
    %v250 = vpop.f32.mrf.mxu0
    %v251 = vadd.f32 %v140, %v250
    %252 = vmatmul.bf16.gmra.mxu0 %v198
    %v253 = vpop.f32.mrf.mxu0
    %v254 = vadd.f32 %v140, %v253
    %v255 = vpop.f32.mrf.mxu0
    %v256 = vadd.f32 %v140, %v255
    %257 = vdwg.mxu0
    %258 = vmatpush.bf16.msra.mxu0 0
    %259 = vmatpush.bf16.msra.mxu0 0
    %260 = vmatpush.bf16.msra.mxu0 0
    %261 = vmatpush.bf16.msra.mxu0 0
    %262 = vmatpush.bf16.msra.mxu0 0
    %263 = vmatpush.bf16.msra.mxu0 0
    %264 = vmatpush.bf16.msra.mxu0 0
    %265 = vmatpush.bf16.msra.mxu0 %v181
    %266 = vmatmul.bf16.gmra.mxu0 %v189
    %v267 = vpop.f32.mrf.mxu0
    %v268 = vadd.f32 %v141, %v267
    %v269 = vpop.f32.mrf.mxu0
    %v270 = vadd.f32 %v141, %v269
    %271 = vmatmul.bf16.gmra.mxu0 %v192
    %v272 = vpop.f32.mrf.mxu0
    %v273 = vadd.f32 %v141, %v272
    %v274 = vpop.f32.mrf.mxu0
    %v275 = vadd.f32 %v141, %v274
    %276 = vmatmul.bf16.gmra.mxu0 %v195
    %v277 = vpop.f32.mrf.mxu0
    %v278 = vadd.f32 %v141, %v277
    %v279 = vpop.f32.mrf.mxu0
    %v280 = vadd.f32 %v141, %v279
    %281 = vmatmul.bf16.gmra.mxu0 %v198
    %v282 = vpop.f32.mrf.mxu0
    %v283 = vadd.f32 %v141, %v282
    %v284 = vpop.f32.mrf.mxu0
    %v285 = vadd.f32 %v141, %v284
    %286 = vdwg.mxu0
    %287 = vmatpush.bf16.msra.mxu0 0
    %288 = vmatpush.bf16.msra.mxu0 0
    %289 = vmatpush.bf16.msra.mxu0 0
    %290 = vmatpush.bf16.msra.mxu0 0
    %291 = vmatpush.bf16.msra.mxu0 0
    %292 = vmatpush.bf16.msra.mxu0 0
    %293 = vmatpush.bf16.msra.mxu0 0
    %294 = vmatpush.bf16.msra.mxu0 %v182
    %295 = vmatmul.bf16.gmra.mxu0 %v189
    %v296 = vpop.f32.mrf.mxu0
    %v297 = vadd.f32 %v142, %v296
    %v298 = vpop.f32.mrf.mxu0
    %v299 = vadd.f32 %v142, %v298
    %300 = vmatmul.bf16.gmra.mxu0 %v192
    %v301 = vpop.f32.mrf.mxu0
    %v302 = vadd.f32 %v142, %v301
    %v303 = vpop.f32.mrf.mxu0
    %v304 = vadd.f32 %v142, %v303
    %305 = vmatmul.bf16.gmra.mxu0 %v195
    %v306 = vpop.f32.mrf.mxu0
    %v307 = vadd.f32 %v142, %v306
    %v308 = vpop.f32.mrf.mxu0
    %v309 = vadd.f32 %v142, %v308
    %310 = vmatmul.bf16.gmra.mxu0 %v198
    %v311 = vpop.f32.mrf.mxu0
    %v312 = vadd.f32 %v142, %v311
    %v313 = vpop.f32.mrf.mxu0
    %v314 = vadd.f32 %v142, %v313
    %315 = vdwg.mxu0
    %v316 = vld [vmem:[#allocation2] sm:$0xff]
    %v317 = vld [vmem:[#allocation3] sm:$0xff]
    %v318 = vpack.c.bf16 %v316, %v316
    %v319 = vld [vmem:[#allocation9] sm:$0xff]
    %v320 = vld [vmem:[#allocation9 + $0x8] sm:$0xff]
    %v321 = vld [vmem:[#allocation9 + $0x10] sm:$0xff]
    %v322 = vld [vmem:[#allocation9 + $0x18] sm:$0xff]
    %v323 = vld [vmem:[#allocation9 + $0x20] sm:$0xff]
    %v324 = vld [vmem:[#allocation9 + $0x28] sm:$0xff]
    %v325 = vld [vmem:[#allocation9 + $0x30] sm:$0xff]
    %v326 = vld [vmem:[#allocation9 + $0x38] sm:$0xff]
    %v327 = vld [vmem:[#allocation9 + $0x40] sm:$0xff]
    %v328 = vld [vmem:[#allocation9 + $0x48] sm:$0xff]
    %v329 = vld [vmem:[#allocation9 + $0x50] sm:$0xff]
    %v330 = vld [vmem:[#allocation9 + $0x58] sm:$0xff]
    %v331 = vld [vmem:[#allocation9 + $0x60] sm:$0xff]
    %v332 = vld [vmem:[#allocation9 + $0x68] sm:$0xff]
    %v333 = vld [vmem:[#allocation9 + $0x70] sm:$0xff]
    %v334 = vld [vmem:[#allocation9 + $0x78] sm:$0xff]
    %v335 = vld [vmem:[#allocation9 + $0x80] sm:$0xff]
    %v336 = vld [vmem:[#allocation9 + $0x88] sm:$0xff]
    %v337 = vld [vmem:[#allocation9 + $0x90] sm:$0xff]
    %v338 = vld [vmem:[#allocation9 + $0x98] sm:$0xff]
    %v339 = vld [vmem:[#allocation9 + $0xa0] sm:$0xff]
    %v340 = vld [vmem:[#allocation9 + $0xa8] sm:$0xff]
    %v341 = vld [vmem:[#allocation9 + $0xb0] sm:$0xff]
    %v342 = vld [vmem:[#allocation9 + $0xb8] sm:$0xff]
    %v343 = vld [vmem:[#allocation9 + $0xc0] sm:$0xff]
    %v344 = vld [vmem:[#allocation9 + $0xc8] sm:$0xff]
    %v345 = vld [vmem:[#allocation9 + $0xd0] sm:$0xff]
    %v346 = vld [vmem:[#allocation9 + $0xd8] sm:$0xff]
    %v347 = vld [vmem:[#allocation9 + $0xe0] sm:$0xff]
    %v348 = vld [vmem:[#allocation9 + $0xe8] sm:$0xff]
    %v349 = vld [vmem:[#allocation9 + $0xf0] sm:$0xff]
    %v350 = vld [vmem:[#allocation9 + $0xf8] sm:$0xff]
    %v383 = vunpack.c.l.b16 %v319
    %v384 = vunpack.c.h.b16 %v319
    %v385 = vunpack.c.l.b16 %v320
    %v386 = vunpack.c.h.b16 %v320
    %v387 = vunpack.c.l.b16 %v321
    %v388 = vunpack.c.h.b16 %v321
    %v389 = vunpack.c.l.b16 %v322
    %v390 = vunpack.c.h.b16 %v322
    %v391 = vunpack.c.l.b16 %v323
    %v392 = vunpack.c.h.b16 %v323
    %v393 = vunpack.c.l.b16 %v324
    %v394 = vunpack.c.h.b16 %v324
    %v395 = vunpack.c.l.b16 %v325
    %v396 = vunpack.c.h.b16 %v325
    %v397 = vunpack.c.l.b16 %v326
    %v398 = vunpack.c.h.b16 %v326
    %v399 = vunpack.c.l.b16 %v327
    %v400 = vunpack.c.h.b16 %v327
    %v401 = vunpack.c.l.b16 %v328
    %v402 = vunpack.c.h.b16 %v328
    %v403 = vunpack.c.l.b16 %v329
    %v404 = vunpack.c.h.b16 %v329
    %v405 = vunpack.c.l.b16 %v330
    %v406 = vunpack.c.h.b16 %v330
    %v407 = vunpack.c.l.b16 %v331
    %v408 = vunpack.c.h.b16 %v331
    %v409 = vunpack.c.l.b16 %v332
    %v410 = vunpack.c.h.b16 %v332
    %v411 = vunpack.c.l.b16 %v333
    %v412 = vunpack.c.h.b16 %v333
    %v413 = vunpack.c.l.b16 %v334
    %v414 = vunpack.c.h.b16 %v334
    %v415 = vunpack.c.l.b16 %v335
    %v416 = vunpack.c.h.b16 %v335
    %v417 = vunpack.c.l.b16 %v336
    %v418 = vunpack.c.h.b16 %v336
    %v419 = vunpack.c.l.b16 %v337
    %v420 = vunpack.c.h.b16 %v337
    %v421 = vunpack.c.l.b16 %v338
    %v422 = vunpack.c.h.b16 %v338
    %v423 = vunpack.c.l.b16 %v339
    %v424 = vunpack.c.h.b16 %v339
    %v425 = vunpack.c.l.b16 %v340
    %v426 = vunpack.c.h.b16 %v340
    %v427 = vunpack.c.l.b16 %v341
    %v428 = vunpack.c.h.b16 %v341
    %v429 = vunpack.c.l.b16 %v342
    %v430 = vunpack.c.h.b16 %v342
    %v431 = vunpack.c.l.b16 %v343
    %v432 = vunpack.c.h.b16 %v343
    %v433 = vunpack.c.l.b16 %v344
    %v434 = vunpack.c.h.b16 %v344
    %v435 = vunpack.c.l.b16 %v345
    %v436 = vunpack.c.h.b16 %v345
    %v437 = vunpack.c.l.b16 %v346
    %v438 = vunpack.c.h.b16 %v346
    %v439 = vunpack.c.l.b16 %v347
    %v440 = vunpack.c.h.b16 %v347
    %v441 = vunpack.c.l.b16 %v348
    %v442 = vunpack.c.h.b16 %v348
    %v443 = vunpack.c.l.b16 %v349
    %v444 = vunpack.c.h.b16 %v349
    %v445 = vunpack.c.l.b16 %v350
    %v446 = vunpack.c.h.b16 %v350
    %v447 = vpack.c.b16 %v387, %v383
    %v448 = vpack.c.b16 %v388, %v384
    %v449 = vpack.c.b16 %v389, %v385
    %v450 = vpack.c.b16 %v390, %v386
    %v451 = vpack.c.b16 %v395, %v391
    %v452 = vpack.c.b16 %v396, %v392
    %v453 = vpack.c.b16 %v397, %v393
    %v454 = vpack.c.b16 %v398, %v394
    %v455 = vpack.c.b16 %v403, %v399
    %v456 = vpack.c.b16 %v404, %v400
    %v457 = vpack.c.b16 %v405, %v401
    %v458 = vpack.c.b16 %v406, %v402
    %v459 = vpack.c.b16 %v411, %v407
    %v460 = vpack.c.b16 %v412, %v408
    %v461 = vpack.c.b16 %v413, %v409
    %v462 = vpack.c.b16 %v414, %v410
    %v463 = vpack.c.b16 %v419, %v415
    %v464 = vpack.c.b16 %v420, %v416
    %v465 = vpack.c.b16 %v421, %v417
    %v466 = vpack.c.b16 %v422, %v418
    %v467 = vpack.c.b16 %v427, %v423
    %v468 = vpack.c.b16 %v428, %v424
    %v469 = vpack.c.b16 %v429, %v425
    %v470 = vpack.c.b16 %v430, %v426
    %v471 = vpack.c.b16 %v435, %v431
    %v472 = vpack.c.b16 %v436, %v432
    %v473 = vpack.c.b16 %v437, %v433
    %v474 = vpack.c.b16 %v438, %v434
    %v475 = vpack.c.b16 %v443, %v439
    %v476 = vpack.c.b16 %v444, %v440
    %v477 = vpack.c.b16 %v445, %v441
    %v478 = vpack.c.b16 %v446, %v442
    %511 = vmatpush.bf16.msra.mxu0 %v475
    %512 = vmatpush.bf16.msra.mxu0 %v471
    %513 = vmatpush.bf16.msra.mxu0 %v467
    %514 = vmatpush.bf16.msra.mxu0 %v463
    %515 = vmatpush.bf16.msra.mxu0 %v459
    %516 = vmatpush.bf16.msra.mxu0 %v455
    %517 = vmatpush.bf16.msra.mxu0 %v451
    %518 = vmatpush.bf16.msra.mxu0 %v447
    %519 = vmatmul.bf16.gmra.mxu0 %v318
    %v520 = vpop.f32.mrf.mxu0
    %v521 = vadd.f32 0.0, %v520
    %v522 = vpop.f32.mrf.mxu0
    %523 = vdwg.mxu0
    %524 = vmatpush.bf16.msra.mxu0 %v476
    %525 = vmatpush.bf16.msra.mxu0 %v472
    %526 = vmatpush.bf16.msra.mxu0 %v468
    %527 = vmatpush.bf16.msra.mxu0 %v464
    %528 = vmatpush.bf16.msra.mxu0 %v460
    %529 = vmatpush.bf16.msra.mxu0 %v456
    %530 = vmatpush.bf16.msra.mxu0 %v452
    %531 = vmatpush.bf16.msra.mxu0 %v448
    %532 = vmatmul.bf16.gmra.mxu0 %v318
    %v533 = vpop.f32.mrf.mxu0
    %v534 = vadd.f32 0.0, %v533
    %v535 = vpop.f32.mrf.mxu0
    %536 = vdwg.mxu0
    %537 = vmatpush.bf16.msra.mxu0 %v477
    %538 = vmatpush.bf16.msra.mxu0 %v473
    %539 = vmatpush.bf16.msra.mxu0 %v469
    %540 = vmatpush.bf16.msra.mxu0 %v465
    %541 = vmatpush.bf16.msra.mxu0 %v461
    %542 = vmatpush.bf16.msra.mxu0 %v457
    %543 = vmatpush.bf16.msra.mxu0 %v453
    %544 = vmatpush.bf16.msra.mxu0 %v449
    %545 = vmatmul.bf16.gmra.mxu0 %v318
    %v546 = vpop.f32.mrf.mxu0
    %v547 = vadd.f32 0.0, %v546
    %v548 = vpop.f32.mrf.mxu0
    %549 = vdwg.mxu0
    %550 = vmatpush.bf16.msra.mxu0 %v478
    %551 = vmatpush.bf16.msra.mxu0 %v474
    %552 = vmatpush.bf16.msra.mxu0 %v470
    %553 = vmatpush.bf16.msra.mxu0 %v466
    %554 = vmatpush.bf16.msra.mxu0 %v462
    %555 = vmatpush.bf16.msra.mxu0 %v458
    %556 = vmatpush.bf16.msra.mxu0 %v454
    %557 = vmatpush.bf16.msra.mxu0 %v450
    %558 = vmatmul.bf16.gmra.mxu0 %v318
    %v559 = vpop.f32.mrf.mxu0
    %v560 = vadd.f32 0.0, %v559
    %v561 = vpop.f32.mrf.mxu0
    %562 = vdwg.mxu0
    %v563 = vadd.f32 %v210, %v521
    %v564 = vadd.f32 %v239, %v534
    %v565 = vadd.f32 %v268, %v547
    %v566 = vadd.f32 %v297, %v560
    %v567 = vxor.u32 %v563, 2147483648
    %v568 = vmul.f32 %v567, 1.442695
    %v569 = vpow.pop %v568
    %v570 = vadd.f32 %v569, 1.0
    %v571 = vrcp.pop %v570
    %v572 = vmul.f32 %v570, %v571
    %v573 = vsub.f32 1.0, %v572
    %v574 = vmul.f32 %v571, %v573
    %v575 = vadd.f32 %v571, %v574
    %vm576 = vweird.f32 %v570
    %vm577 = vweird.f32 %v571
    %vm578 = vmor %vm576, %vm577
    %v579 = vsel %vm578, %v571, %v575
    %v580 = vand.u32 2147483647, %v570
    %vm581 = vcmp.eq.f32.partialorder %v580, 8.507059e+37
    %v582 = vand.u32 %v570, 2147483648
    %v583 = vor.u32 1.1754944e-38, %v582
    %v584 = vsel %vm581, %v583, %v579
    %v585 = vmul.f32 1.0, %v584
    %v586 = vxor.u32 %v564, 2147483648
    %v587 = vmul.f32 %v586, 1.442695
    %v588 = vpow.pop %v587
    %v589 = vadd.f32 %v588, 1.0
    %v590 = vrcp.pop %v589
    %v591 = vmul.f32 %v589, %v590
    %v592 = vsub.f32 1.0, %v591
    %v593 = vmul.f32 %v590, %v592
    %v594 = vadd.f32 %v590, %v593
    %vm595 = vweird.f32 %v589
    %vm596 = vweird.f32 %v590
    %vm597 = vmor %vm595, %vm596
    %v598 = vsel %vm597, %v590, %v594
    %v599 = vand.u32 2147483647, %v589
    %vm600 = vcmp.eq.f32.partialorder %v599, 8.507059e+37
    %v601 = vand.u32 %v589, 2147483648
    %v602 = vor.u32 1.1754944e-38, %v601
    %v603 = vsel %vm600, %v602, %v598
    %v604 = vmul.f32 1.0, %v603
    %v605 = vtanh.pop %v565
    %v606 = vxor.u32 %v566, 2147483648
    %v607 = vmul.f32 %v606, 1.442695
    %v608 = vpow.pop %v607
    %v609 = vadd.f32 %v608, 1.0
    %v610 = vrcp.pop %v609
    %v611 = vmul.f32 %v609, %v610
    %v612 = vsub.f32 1.0, %v611
    %v613 = vmul.f32 %v610, %v612
    %v614 = vadd.f32 %v610, %v613
    %vm615 = vweird.f32 %v609
    %vm616 = vweird.f32 %v610
    %vm617 = vmor %vm615, %vm616
    %v618 = vsel %vm617, %v610, %v614
    %v619 = vand.u32 2147483647, %v609
    %vm620 = vcmp.eq.f32.partialorder %v619, 8.507059e+37
    %v621 = vand.u32 %v609, 2147483648
    %v622 = vor.u32 1.1754944e-38, %v621
    %v623 = vsel %vm620, %v622, %v618
    %v624 = vmul.f32 1.0, %v623
    %v625 = vmul.f32 %v604, %v317
    %v626 = vmul.f32 %v585, %v605
    %v627 = vadd.f32 %v625, %v626
    %v628 = vtanh.pop %v627
    %v629 = vmul.f32 %v624, %v628
    %v630 = vpack.c.bf16 %v629, %v629
    %631 = vst [vmem:[#allocation15] sm:$0xf] %v630
    %v632 = vld [vmem:[#allocation9] sm:$0xff]
    %v633 = vld [vmem:[#allocation9 + $0x8] sm:$0xff]
    %v634 = vld [vmem:[#allocation9 + $0x10] sm:$0xff]
    %v635 = vld [vmem:[#allocation9 + $0x18] sm:$0xff]
    %v636 = vld [vmem:[#allocation9 + $0x20] sm:$0xff]
    %v637 = vld [vmem:[#allocation9 + $0x28] sm:$0xff]
    %v638 = vld [vmem:[#allocation9 + $0x30] sm:$0xff]
    %v639 = vld [vmem:[#allocation9 + $0x38] sm:$0xff]
    %v640 = vld [vmem:[#allocation9 + $0x40] sm:$0xff]
    %v641 = vld [vmem:[#allocation9 + $0x48] sm:$0xff]
    %v642 = vld [vmem:[#allocation9 + $0x50] sm:$0xff]
    %v643 = vld [vmem:[#allocation9 + $0x58] sm:$0xff]
    %v644 = vld [vmem:[#allocation9 + $0x60] sm:$0xff]
    %v645 = vld [vmem:[#allocation9 + $0x68] sm:$0xff]
    %v646 = vld [vmem:[#allocation9 + $0x70] sm:$0xff]
    %v647 = vld [vmem:[#allocation9 + $0x78] sm:$0xff]
    %v648 = vld [vmem:[#allocation9 + $0x80] sm:$0xff]
    %v649 = vld [vmem:[#allocation9 + $0x88] sm:$0xff]
    %v650 = vld [vmem:[#allocation9 + $0x90] sm:$0xff]
    %v651 = vld [vmem:[#allocation9 + $0x98] sm:$0xff]
    %v652 = vld [vmem:[#allocation9 + $0xa0] sm:$0xff]
    %v653 = vld [vmem:[#allocation9 + $0xa8] sm:$0xff]
    %v654 = vld [vmem:[#allocation9 + $0xb0] sm:$0xff]
    %v655 = vld [vmem:[#allocation9 + $0xb8] sm:$0xff]
    %v656 = vld [vmem:[#allocation9 + $0xc0] sm:$0xff]
    %v657 = vld [vmem:[#allocation9 + $0xc8] sm:$0xff]
    %v658 = vld [vmem:[#allocation9 + $0xd0] sm:$0xff]
    %v659 = vld [vmem:[#allocation9 + $0xd8] sm:$0xff]
    %v660 = vld [vmem:[#allocation9 + $0xe0] sm:$0xff]
    %v661 = vld [vmem:[#allocation9 + $0xe8] sm:$0xff]
    %v662 = vld [vmem:[#allocation9 + $0xf0] sm:$0xff]
    %v663 = vld [vmem:[#allocation9 + $0xf8] sm:$0xff]
    %v696 = vunpack.c.l.b16 %v632
    %v697 = vunpack.c.h.b16 %v632
    %v698 = vunpack.c.l.b16 %v633
    %v699 = vunpack.c.h.b16 %v633
    %v700 = vunpack.c.l.b16 %v634
    %v701 = vunpack.c.h.b16 %v634
    %v702 = vunpack.c.l.b16 %v635
    %v703 = vunpack.c.h.b16 %v635
    %v704 = vunpack.c.l.b16 %v636
    %v705 = vunpack.c.h.b16 %v636
    %v706 = vunpack.c.l.b16 %v637
    %v707 = vunpack.c.h.b16 %v637
    %v708 = vunpack.c.l.b16 %v638
    %v709 = vunpack.c.h.b16 %v638
    %v710 = vunpack.c.l.b16 %v639
    %v711 = vunpack.c.h.b16 %v639
    %v712 = vunpack.c.l.b16 %v640
    %v713 = vunpack.c.h.b16 %v640
    %v714 = vunpack.c.l.b16 %v641
    %v715 = vunpack.c.h.b16 %v641
    %v716 = vunpack.c.l.b16 %v642
    %v717 = vunpack.c.h.b16 %v642
    %v718 = vunpack.c.l.b16 %v643
    %v719 = vunpack.c.h.b16 %v643
    %v720 = vunpack.c.l.b16 %v644
    %v721 = vunpack.c.h.b16 %v644
    %v722 = vunpack.c.l.b16 %v645
    %v723 = vunpack.c.h.b16 %v645
    %v724 = vunpack.c.l.b16 %v646
    %v725 = vunpack.c.h.b16 %v646
    %v726 = vunpack.c.l.b16 %v647
    %v727 = vunpack.c.h.b16 %v647
    %v728 = vunpack.c.l.b16 %v648
    %v729 = vunpack.c.h.b16 %v648
    %v730 = vunpack.c.l.b16 %v649
    %v731 = vunpack.c.h.b16 %v649
    %v732 = vunpack.c.l.b16 %v650
    %v733 = vunpack.c.h.b16 %v650
    %v734 = vunpack.c.l.b16 %v651
    %v735 = vunpack.c.h.b16 %v651
    %v736 = vunpack.c.l.b16 %v652
    %v737 = vunpack.c.h.b16 %v652
    %v738 = vunpack.c.l.b16 %v653
    %v739 = vunpack.c.h.b16 %v653
    %v740 = vunpack.c.l.b16 %v654
    %v741 = vunpack.c.h.b16 %v654
    %v742 = vunpack.c.l.b16 %v655
    %v743 = vunpack.c.h.b16 %v655
    %v744 = vunpack.c.l.b16 %v656
    %v745 = vunpack.c.h.b16 %v656
    %v746 = vunpack.c.l.b16 %v657
    %v747 = vunpack.c.h.b16 %v657
    %v748 = vunpack.c.l.b16 %v658
    %v749 = vunpack.c.h.b16 %v658
    %v750 = vunpack.c.l.b16 %v659
    %v751 = vunpack.c.h.b16 %v659
    %v752 = vunpack.c.l.b16 %v660
    %v753 = vunpack.c.h.b16 %v660
    %v754 = vunpack.c.l.b16 %v661
    %v755 = vunpack.c.h.b16 %v661
    %v756 = vunpack.c.l.b16 %v662
    %v757 = vunpack.c.h.b16 %v662
    %v758 = vunpack.c.l.b16 %v663
    %v759 = vunpack.c.h.b16 %v663
    %v760 = vpack.c.b16 %v700, %v696
    %v761 = vpack.c.b16 %v701, %v697
    %v762 = vpack.c.b16 %v702, %v698
    %v763 = vpack.c.b16 %v703, %v699
    %v764 = vpack.c.b16 %v708, %v704
    %v765 = vpack.c.b16 %v709, %v705
    %v766 = vpack.c.b16 %v710, %v706
    %v767 = vpack.c.b16 %v711, %v707
    %v768 = vpack.c.b16 %v716, %v712
    %v769 = vpack.c.b16 %v717, %v713
    %v770 = vpack.c.b16 %v718, %v714
    %v771 = vpack.c.b16 %v719, %v715
    %v772 = vpack.c.b16 %v724, %v720
    %v773 = vpack.c.b16 %v725, %v721
    %v774 = vpack.c.b16 %v726, %v722
    %v775 = vpack.c.b16 %v727, %v723
    %v776 = vpack.c.b16 %v732, %v728
    %v777 = vpack.c.b16 %v733, %v729
    %v778 = vpack.c.b16 %v734, %v730
    %v779 = vpack.c.b16 %v735, %v731
    %v780 = vpack.c.b16 %v740, %v736
    %v781 = vpack.c.b16 %v741, %v737
    %v782 = vpack.c.b16 %v742, %v738
    %v783 = vpack.c.b16 %v743, %v739
    %v784 = vpack.c.b16 %v748, %v744
    %v785 = vpack.c.b16 %v749, %v745
    %v786 = vpack.c.b16 %v750, %v746
    %v787 = vpack.c.b16 %v751, %v747
    %v788 = vpack.c.b16 %v756, %v752
    %v789 = vpack.c.b16 %v757, %v753
    %v790 = vpack.c.b16 %v758, %v754
    %v791 = vpack.c.b16 %v759, %v755
    %824 = vmatpush.bf16.msra.mxu0 %v788
    %825 = vmatpush.bf16.msra.mxu0 %v784
    %826 = vmatpush.bf16.msra.mxu0 %v780
    %827 = vmatpush.bf16.msra.mxu0 %v776
    %828 = vmatpush.bf16.msra.mxu0 %v772
    %829 = vmatpush.bf16.msra.mxu0 %v768
    %830 = vmatpush.bf16.msra.mxu0 %v764
    %831 = vmatpush.bf16.msra.mxu0 %v760
    %832 = vmatmul.bf16.gmra.mxu0 %v630
    %v833 = vpop.f32.mrf.mxu0
    %v834 = vadd.f32 0.0, %v833
    %v835 = vpop.f32.mrf.mxu0
    %836 = vdwg.mxu0
    %837 = vmatpush.bf16.msra.mxu0 %v789
    %838 = vmatpush.bf16.msra.mxu0 %v785
    %839 = vmatpush.bf16.msra.mxu0 %v781
    %840 = vmatpush.bf16.msra.mxu0 %v777
    %841 = vmatpush.bf16.msra.mxu0 %v773
    %842 = vmatpush.bf16.msra.mxu0 %v769
    %843 = vmatpush.bf16.msra.mxu0 %v765
    %844 = vmatpush.bf16.msra.mxu0 %v761
    %845 = vmatmul.bf16.gmra.mxu0 %v630
    %v846 = vpop.f32.mrf.mxu0
    %v847 = vadd.f32 0.0, %v846
    %v848 = vpop.f32.mrf.mxu0
    %849 = vdwg.mxu0
    %850 = vmatpush.bf16.msra.mxu0 %v790
    %851 = vmatpush.bf16.msra.mxu0 %v786
    %852 = vmatpush.bf16.msra.mxu0 %v782
    %853 = vmatpush.bf16.msra.mxu0 %v778
    %854 = vmatpush.bf16.msra.mxu0 %v774
    %855 = vmatpush.bf16.msra.mxu0 %v770
    %856 = vmatpush.bf16.msra.mxu0 %v766
    %857 = vmatpush.bf16.msra.mxu0 %v762
    %858 = vmatmul.bf16.gmra.mxu0 %v630
    %v859 = vpop.f32.mrf.mxu0
    %v860 = vadd.f32 0.0, %v859
    %v861 = vpop.f32.mrf.mxu0
    %862 = vdwg.mxu0
    %863 = vmatpush.bf16.msra.mxu0 %v791
    %864 = vmatpush.bf16.msra.mxu0 %v787
    %865 = vmatpush.bf16.msra.mxu0 %v783
    %866 = vmatpush.bf16.msra.mxu0 %v779
    %867 = vmatpush.bf16.msra.mxu0 %v775
    %868 = vmatpush.bf16.msra.mxu0 %v771
    %869 = vmatpush.bf16.msra.mxu0 %v767
    %870 = vmatpush.bf16.msra.mxu0 %v763
    %871 = vmatmul.bf16.gmra.mxu0 %v630
    %v872 = vpop.f32.mrf.mxu0
    %v873 = vadd.f32 0.0, %v872
    %v874 = vpop.f32.mrf.mxu0
    %875 = vdwg.mxu0
    %v876 = vadd.f32 %v212, %v834
    %v877 = vadd.f32 %v241, %v847
    %v878 = vadd.f32 %v270, %v860
    %v879 = vadd.f32 %v299, %v873
    %v880 = vxor.u32 %v876, 2147483648
    %v881 = vmul.f32 %v880, 1.442695
    %v882 = vpow.pop %v881
    %v883 = vadd.f32 %v882, 1.0
    %v884 = vrcp.pop %v883
    %v885 = vmul.f32 %v883, %v884
    %v886 = vsub.f32 1.0, %v885
    %v887 = vmul.f32 %v884, %v886
    %v888 = vadd.f32 %v884, %v887
    %vm889 = vweird.f32 %v883
    %vm890 = vweird.f32 %v884
    %vm891 = vmor %vm889, %vm890
    %v892 = vsel %vm891, %v884, %v888
    %v893 = vand.u32 2147483647, %v883
    %vm894 = vcmp.eq.f32.partialorder %v893, 8.507059e+37
    %v895 = vand.u32 %v883, 2147483648
    %v896 = vor.u32 1.1754944e-38, %v895
    %v897 = vsel %vm894, %v896, %v892
    %v898 = vmul.f32 1.0, %v897
    %v899 = vxor.u32 %v877, 2147483648
    %v900 = vmul.f32 %v899, 1.442695
    %v901 = vpow.pop %v900
    %v902 = vadd.f32 %v901, 1.0
    %v903 = vrcp.pop %v902
    %v904 = vmul.f32 %v902, %v903
    %v905 = vsub.f32 1.0, %v904
    %v906 = vmul.f32 %v903, %v905
    %v907 = vadd.f32 %v903, %v906
    %vm908 = vweird.f32 %v902
    %vm909 = vweird.f32 %v903
    %vm910 = vmor %vm908, %vm909
    %v911 = vsel %vm910, %v903, %v907
    %v912 = vand.u32 2147483647, %v902
    %vm913 = vcmp.eq.f32.partialorder %v912, 8.507059e+37
    %v914 = vand.u32 %v902, 2147483648
    %v915 = vor.u32 1.1754944e-38, %v914
    %v916 = vsel %vm913, %v915, %v911
    %v917 = vmul.f32 1.0, %v916
    %v918 = vtanh.pop %v878
    %v919 = vxor.u32 %v879, 2147483648
    %v920 = vmul.f32 %v919, 1.442695
    %v921 = vpow.pop %v920
    %v922 = vadd.f32 %v921, 1.0
    %v923 = vrcp.pop %v922
    %v924 = vmul.f32 %v922, %v923
    %v925 = vsub.f32 1.0, %v924
    %v926 = vmul.f32 %v923, %v925
    %v927 = vadd.f32 %v923, %v926
    %vm928 = vweird.f32 %v922
    %vm929 = vweird.f32 %v923
    %vm930 = vmor %vm928, %vm929
    %v931 = vsel %vm930, %v923, %v927
    %v932 = vand.u32 2147483647, %v922
    %vm933 = vcmp.eq.f32.partialorder %v932, 8.507059e+37
    %v934 = vand.u32 %v922, 2147483648
    %v935 = vor.u32 1.1754944e-38, %v934
    %v936 = vsel %vm933, %v935, %v931
    %v937 = vmul.f32 1.0, %v936
    %v938 = vmul.f32 %v917, %v627
    %v939 = vmul.f32 %v898, %v918
    %v940 = vadd.f32 %v938, %v939
    %v941 = vtanh.pop %v940
    %v942 = vmul.f32 %v937, %v941
    %v943 = vpack.c.bf16 %v942, %v942
    %s944 = scalar_lea.vmem [#allocation15], 4
    %945 = vst [vmem:[%s944] sm:$0xf] %v943
    %v946 = vld [vmem:[#allocation9] sm:$0xff]
    %v947 = vld [vmem:[#allocation9 + $0x8] sm:$0xff]
    %v948 = vld [vmem:[#allocation9 + $0x10] sm:$0xff]
    %v949 = vld [vmem:[#allocation9 + $0x18] sm:$0xff]
    %v950 = vld [vmem:[#allocation9 + $0x20] sm:$0xff]
    %v951 = vld [vmem:[#allocation9 + $0x28] sm:$0xff]
    %v952 = vld [vmem:[#allocation9 + $0x30] sm:$0xff]
    %v953 = vld [vmem:[#allocation9 + $0x38] sm:$0xff]
    %v954 = vld [vmem:[#allocation9 + $0x40] sm:$0xff]
    %v955 = vld [vmem:[#allocation9 + $0x48] sm:$0xff]
    %v956 = vld [vmem:[#allocation9 + $0x50] sm:$0xff]
    %v957 = vld [vmem:[#allocation9 + $0x58] sm:$0xff]
    %v958 = vld [vmem:[#allocation9 + $0x60] sm:$0xff]
    %v959 = vld [vmem:[#allocation9 + $0x68] sm:$0xff]
    %v960 = vld [vmem:[#allocation9 + $0x70] sm:$0xff]
    %v961 = vld [vmem:[#allocation9 + $0x78] sm:$0xff]
    %v962 = vld [vmem:[#allocation9 + $0x80] sm:$0xff]
    %v963 = vld [vmem:[#allocation9 + $0x88] sm:$0xff]
    %v964 = vld [vmem:[#allocation9 + $0x90] sm:$0xff]
    %v965 = vld [vmem:[#allocation9 + $0x98] sm:$0xff]
    %v966 = vld [vmem:[#allocation9 + $0xa0] sm:$0xff]
    %v967 = vld [vmem:[#allocation9 + $0xa8] sm:$0xff]
    %v968 = vld [vmem:[#allocation9 + $0xb0] sm:$0xff]
    %v969 = vld [vmem:[#allocation9 + $0xb8] sm:$0xff]
    %v970 = vld [vmem:[#allocation9 + $0xc0] sm:$0xff]
    %v971 = vld [vmem:[#allocation9 + $0xc8] sm:$0xff]
    %v972 = vld [vmem:[#allocation9 + $0xd0] sm:$0xff]
    %v973 = vld [vmem:[#allocation9 + $0xd8] sm:$0xff]
    %v974 = vld [vmem:[#allocation9 + $0xe0] sm:$0xff]
    %v975 = vld [vmem:[#allocation9 + $0xe8] sm:$0xff]
    %v976 = vld [vmem:[#allocation9 + $0xf0] sm:$0xff]
    %v977 = vld [vmem:[#allocation9 + $0xf8] sm:$0xff]
    %v1010 = vunpack.c.l.b16 %v946
    %v1011 = vunpack.c.h.b16 %v946
    %v1012 = vunpack.c.l.b16 %v947
    %v1013 = vunpack.c.h.b16 %v947
    %v1014 = vunpack.c.l.b16 %v948
    %v1015 = vunpack.c.h.b16 %v948
    %v1016 = vunpack.c.l.b16 %v949
    %v1017 = vunpack.c.h.b16 %v949
    %v1018 = vunpack.c.l.b16 %v950
    %v1019 = vunpack.c.h.b16 %v950
    %v1020 = vunpack.c.l.b16 %v951
    %v1021 = vunpack.c.h.b16 %v951
    %v1022 = vunpack.c.l.b16 %v952
    %v1023 = vunpack.c.h.b16 %v952
    %v1024 = vunpack.c.l.b16 %v953
    %v1025 = vunpack.c.h.b16 %v953
    %v1026 = vunpack.c.l.b16 %v954
    %v1027 = vunpack.c.h.b16 %v954
    %v1028 = vunpack.c.l.b16 %v955
    %v1029 = vunpack.c.h.b16 %v955
    %v1030 = vunpack.c.l.b16 %v956
    %v1031 = vunpack.c.h.b16 %v956
    %v1032 = vunpack.c.l.b16 %v957
    %v1033 = vunpack.c.h.b16 %v957
    %v1034 = vunpack.c.l.b16 %v958
    %v1035 = vunpack.c.h.b16 %v958
    %v1036 = vunpack.c.l.b16 %v959
    %v1037 = vunpack.c.h.b16 %v959
    %v1038 = vunpack.c.l.b16 %v960
    %v1039 = vunpack.c.h.b16 %v960
    %v1040 = vunpack.c.l.b16 %v961
    %v1041 = vunpack.c.h.b16 %v961
    %v1042 = vunpack.c.l.b16 %v962
    %v1043 = vunpack.c.h.b16 %v962
    %v1044 = vunpack.c.l.b16 %v963
    %v1045 = vunpack.c.h.b16 %v963
    %v1046 = vunpack.c.l.b16 %v964
    %v1047 = vunpack.c.h.b16 %v964
    %v1048 = vunpack.c.l.b16 %v965
    %v1049 = vunpack.c.h.b16 %v965
    %v1050 = vunpack.c.l.b16 %v966
    %v1051 = vunpack.c.h.b16 %v966
    %v1052 = vunpack.c.l.b16 %v967
    %v1053 = vunpack.c.h.b16 %v967
    %v1054 = vunpack.c.l.b16 %v968
    %v1055 = vunpack.c.h.b16 %v968
    %v1056 = vunpack.c.l.b16 %v969
    %v1057 = vunpack.c.h.b16 %v969
    %v1058 = vunpack.c.l.b16 %v970
    %v1059 = vunpack.c.h.b16 %v970
    %v1060 = vunpack.c.l.b16 %v971
    %v1061 = vunpack.c.h.b16 %v971
    %v1062 = vunpack.c.l.b16 %v972
    %v1063 = vunpack.c.h.b16 %v972
    %v1064 = vunpack.c.l.b16 %v973
    %v1065 = vunpack.c.h.b16 %v973
    %v1066 = vunpack.c.l.b16 %v974
    %v1067 = vunpack.c.h.b16 %v974
    %v1068 = vunpack.c.l.b16 %v975
    %v1069 = vunpack.c.h.b16 %v975
    %v1070 = vunpack.c.l.b16 %v976
    %v1071 = vunpack.c.h.b16 %v976
    %v1072 = vunpack.c.l.b16 %v977
    %v1073 = vunpack.c.h.b16 %v977
    %v1074 = vpack.c.b16 %v1014, %v1010
    %v1075 = vpack.c.b16 %v1015, %v1011
    %v1076 = vpack.c.b16 %v1016, %v1012
    %v1077 = vpack.c.b16 %v1017, %v1013
    %v1078 = vpack.c.b16 %v1022, %v1018
    %v1079 = vpack.c.b16 %v1023, %v1019
    %v1080 = vpack.c.b16 %v1024, %v1020
    %v1081 = vpack.c.b16 %v1025, %v1021
    %v1082 = vpack.c.b16 %v1030, %v1026
    %v1083 = vpack.c.b16 %v1031, %v1027
    %v1084 = vpack.c.b16 %v1032, %v1028
    %v1085 = vpack.c.b16 %v1033, %v1029
    %v1086 = vpack.c.b16 %v1038, %v1034
    %v1087 = vpack.c.b16 %v1039, %v1035
    %v1088 = vpack.c.b16 %v1040, %v1036
    %v1089 = vpack.c.b16 %v1041, %v1037
    %v1090 = vpack.c.b16 %v1046, %v1042
    %v1091 = vpack.c.b16 %v1047, %v1043
    %v1092 = vpack.c.b16 %v1048, %v1044
    %v1093 = vpack.c.b16 %v1049, %v1045
    %v1094 = vpack.c.b16 %v1054, %v1050
    %v1095 = vpack.c.b16 %v1055, %v1051
    %v1096 = vpack.c.b16 %v1056, %v1052
    %v1097 = vpack.c.b16 %v1057, %v1053
    %v1098 = vpack.c.b16 %v1062, %v1058
    %v1099 = vpack.c.b16 %v1063, %v1059
    %v1100 = vpack.c.b16 %v1064, %v1060
    %v1101 = vpack.c.b16 %v1065, %v1061
    %v1102 = vpack.c.b16 %v1070, %v1066
    %v1103 = vpack.c.b16 %v1071, %v1067
    %v1104 = vpack.c.b16 %v1072, %v1068
    %v1105 = vpack.c.b16 %v1073, %v1069
    %1138 = vmatpush.bf16.msra.mxu0 %v1102
    %1139 = vmatpush.bf16.msra.mxu0 %v1098
    %1140 = vmatpush.bf16.msra.mxu0 %v1094
    %1141 = vmatpush.bf16.msra.mxu0 %v1090
    %1142 = vmatpush.bf16.msra.mxu0 %v1086
    %1143 = vmatpush.bf16.msra.mxu0 %v1082
    %1144 = vmatpush.bf16.msra.mxu0 %v1078
    %1145 = vmatpush.bf16.msra.mxu0 %v1074
    %1146 = vmatmul.bf16.gmra.mxu0 %v943
    %v1147 = vpop.f32.mrf.mxu0
    %v1148 = vadd.f32 0.0, %v1147
    %v1149 = vpop.f32.mrf.mxu0
    %1150 = vdwg.mxu0
    %1151 = vmatpush.bf16.msra.mxu0 %v1103
    %1152 = vmatpush.bf16.msra.mxu0 %v1099
    %1153 = vmatpush.bf16.msra.mxu0 %v1095
    %1154 = vmatpush.bf16.msra.mxu0 %v1091
    %1155 = vmatpush.bf16.msra.mxu0 %v1087
    %1156 = vmatpush.bf16.msra.mxu0 %v1083
    %1157 = vmatpush.bf16.msra.mxu0 %v1079
    %1158 = vmatpush.bf16.msra.mxu0 %v1075
    %1159 = vmatmul.bf16.gmra.mxu0 %v943
    %v1160 = vpop.f32.mrf.mxu0
    %v1161 = vadd.f32 0.0, %v1160
    %v1162 = vpop.f32.mrf.mxu0
    %1163 = vdwg.mxu0
    %1164 = vmatpush.bf16.msra.mxu0 %v1104
    %1165 = vmatpush.bf16.msra.mxu0 %v1100
    %1166 = vmatpush.bf16.msra.mxu0 %v1096
    %1167 = vmatpush.bf16.msra.mxu0 %v1092
    %1168 = vmatpush.bf16.msra.mxu0 %v1088
    %1169 = vmatpush.bf16.msra.mxu0 %v1084
    %1170 = vmatpush.bf16.msra.mxu0 %v1080
    %1171 = vmatpush.bf16.msra.mxu0 %v1076
    %1172 = vmatmul.bf16.gmra.mxu0 %v943
    %v1173 = vpop.f32.mrf.mxu0
    %v1174 = vadd.f32 0.0, %v1173
    %v1175 = vpop.f32.mrf.mxu0
    %1176 = vdwg.mxu0
    %1177 = vmatpush.bf16.msra.mxu0 %v1105
    %1178 = vmatpush.bf16.msra.mxu0 %v1101
    %1179 = vmatpush.bf16.msra.mxu0 %v1097
    %1180 = vmatpush.bf16.msra.mxu0 %v1093
    %1181 = vmatpush.bf16.msra.mxu0 %v1089
    %1182 = vmatpush.bf16.msra.mxu0 %v1085
    %1183 = vmatpush.bf16.msra.mxu0 %v1081
    %1184 = vmatpush.bf16.msra.mxu0 %v1077
    %1185 = vmatmul.bf16.gmra.mxu0 %v943
    %v1186 = vpop.f32.mrf.mxu0
    %v1187 = vadd.f32 0.0, %v1186
    %v1188 = vpop.f32.mrf.mxu0
    %1189 = vdwg.mxu0
    %v1190 = vadd.f32 %v215, %v1148
    %v1191 = vadd.f32 %v244, %v1161
    %v1192 = vadd.f32 %v273, %v1174
    %v1193 = vadd.f32 %v302, %v1187
    %v1194 = vxor.u32 %v1190, 2147483648
    %v1195 = vmul.f32 %v1194, 1.442695
    %v1196 = vpow.pop %v1195
    %v1197 = vadd.f32 %v1196, 1.0
    %v1198 = vrcp.pop %v1197
    %v1199 = vmul.f32 %v1197, %v1198
    %v1200 = vsub.f32 1.0, %v1199
    %v1201 = vmul.f32 %v1198, %v1200
    %v1202 = vadd.f32 %v1198, %v1201
    %vm1203 = vweird.f32 %v1197
    %vm1204 = vweird.f32 %v1198
    %vm1205 = vmor %vm1203, %vm1204
    %v1206 = vsel %vm1205, %v1198, %v1202
    %v1207 = vand.u32 2147483647, %v1197
    %vm1208 = vcmp.eq.f32.partialorder %v1207, 8.507059e+37
    %v1209 = vand.u32 %v1197, 2147483648
    %v1210 = vor.u32 1.1754944e-38, %v1209
    %v1211 = vsel %vm1208, %v1210, %v1206
    %v1212 = vmul.f32 1.0, %v1211
    %v1213 = vxor.u32 %v1191, 2147483648
    %v1214 = vmul.f32 %v1213, 1.442695
    %v1215 = vpow.pop %v1214
    %v1216 = vadd.f32 %v1215, 1.0
    %v1217 = vrcp.pop %v1216
    %v1218 = vmul.f32 %v1216, %v1217
    %v1219 = vsub.f32 1.0, %v1218
    %v1220 = vmul.f32 %v1217, %v1219
    %v1221 = vadd.f32 %v1217, %v1220
    %vm1222 = vweird.f32 %v1216
    %vm1223 = vweird.f32 %v1217
    %vm1224 = vmor %vm1222, %vm1223
    %v1225 = vsel %vm1224, %v1217, %v1221
    %v1226 = vand.u32 2147483647, %v1216
    %vm1227 = vcmp.eq.f32.partialorder %v1226, 8.507059e+37
    %v1228 = vand.u32 %v1216, 2147483648
    %v1229 = vor.u32 1.1754944e-38, %v1228
    %v1230 = vsel %vm1227, %v1229, %v1225
    %v1231 = vmul.f32 1.0, %v1230
    %v1232 = vtanh.pop %v1192
    %v1233 = vxor.u32 %v1193, 2147483648
    %v1234 = vmul.f32 %v1233, 1.442695
    %v1235 = vpow.pop %v1234
    %v1236 = vadd.f32 %v1235, 1.0
    %v1237 = vrcp.pop %v1236
    %v1238 = vmul.f32 %v1236, %v1237
    %v1239 = vsub.f32 1.0, %v1238
    %v1240 = vmul.f32 %v1237, %v1239
    %v1241 = vadd.f32 %v1237, %v1240
    %vm1242 = vweird.f32 %v1236
    %vm1243 = vweird.f32 %v1237
    %vm1244 = vmor %vm1242, %vm1243
    %v1245 = vsel %vm1244, %v1237, %v1241
    %v1246 = vand.u32 2147483647, %v1236
    %vm1247 = vcmp.eq.f32.partialorder %v1246, 8.507059e+37
    %v1248 = vand.u32 %v1236, 2147483648
    %v1249 = vor.u32 1.1754944e-38, %v1248
    %v1250 = vsel %vm1247, %v1249, %v1245
    %v1251 = vmul.f32 1.0, %v1250
    %v1252 = vmul.f32 %v1231, %v940
    %v1253 = vmul.f32 %v1212, %v1232
    %v1254 = vadd.f32 %v1252, %v1253
    %v1255 = vtanh.pop %v1254
    %v1256 = vmul.f32 %v1251, %v1255
    %v1257 = vpack.c.bf16 %v1256, %v1256
    %s1258 = scalar_lea.vmem [#allocation15], 8
    %1259 = vst [vmem:[%s1258] sm:$0xf] %v1257
    %v1260 = vld [vmem:[#allocation9] sm:$0xff]
    %v1261 = vld [vmem:[#allocation9 + $0x8] sm:$0xff]
    %v1262 = vld [vmem:[#allocation9 + $0x10] sm:$0xff]
    %v1263 = vld [vmem:[#allocation9 + $0x18] sm:$0xff]
    %v1264 = vld [vmem:[#allocation9 + $0x20] sm:$0xff]
    %v1265 = vld [vmem:[#allocation9 + $0x28] sm:$0xff]
    %v1266 = vld [vmem:[#allocation9 + $0x30] sm:$0xff]
    %v1267 = vld [vmem:[#allocation9 + $0x38] sm:$0xff]
    %v1268 = vld [vmem:[#allocation9 + $0x40] sm:$0xff]
    %v1269 = vld [vmem:[#allocation9 + $0x48] sm:$0xff]
    %v1270 = vld [vmem:[#allocation9 + $0x50] sm:$0xff]
    %v1271 = vld [vmem:[#allocation9 + $0x58] sm:$0xff]
    %v1272 = vld [vmem:[#allocation9 + $0x60] sm:$0xff]
    %v1273 = vld [vmem:[#allocation9 + $0x68] sm:$0xff]
    %v1274 = vld [vmem:[#allocation9 + $0x70] sm:$0xff]
    %v1275 = vld [vmem:[#allocation9 + $0x78] sm:$0xff]
    %v1276 = vld [vmem:[#allocation9 + $0x80] sm:$0xff]
    %v1277 = vld [vmem:[#allocation9 + $0x88] sm:$0xff]
    %v1278 = vld [vmem:[#allocation9 + $0x90] sm:$0xff]
    %v1279 = vld [vmem:[#allocation9 + $0x98] sm:$0xff]
    %v1280 = vld [vmem:[#allocation9 + $0xa0] sm:$0xff]
    %v1281 = vld [vmem:[#allocation9 + $0xa8] sm:$0xff]
    %v1282 = vld [vmem:[#allocation9 + $0xb0] sm:$0xff]
    %v1283 = vld [vmem:[#allocation9 + $0xb8] sm:$0xff]
    %v1284 = vld [vmem:[#allocation9 + $0xc0] sm:$0xff]
    %v1285 = vld [vmem:[#allocation9 + $0xc8] sm:$0xff]
    %v1286 = vld [vmem:[#allocation9 + $0xd0] sm:$0xff]
    %v1287 = vld [vmem:[#allocation9 + $0xd8] sm:$0xff]
    %v1288 = vld [vmem:[#allocation9 + $0xe0] sm:$0xff]
    %v1289 = vld [vmem:[#allocation9 + $0xe8] sm:$0xff]
    %v1290 = vld [vmem:[#allocation9 + $0xf0] sm:$0xff]
    %v1291 = vld [vmem:[#allocation9 + $0xf8] sm:$0xff]
    %v1324 = vunpack.c.l.b16 %v1260
    %v1325 = vunpack.c.h.b16 %v1260
    %v1326 = vunpack.c.l.b16 %v1261
    %v1327 = vunpack.c.h.b16 %v1261
    %v1328 = vunpack.c.l.b16 %v1262
    %v1329 = vunpack.c.h.b16 %v1262
    %v1330 = vunpack.c.l.b16 %v1263
    %v1331 = vunpack.c.h.b16 %v1263
    %v1332 = vunpack.c.l.b16 %v1264
    %v1333 = vunpack.c.h.b16 %v1264
    %v1334 = vunpack.c.l.b16 %v1265
    %v1335 = vunpack.c.h.b16 %v1265
    %v1336 = vunpack.c.l.b16 %v1266
    %v1337 = vunpack.c.h.b16 %v1266
    %v1338 = vunpack.c.l.b16 %v1267
    %v1339 = vunpack.c.h.b16 %v1267
    %v1340 = vunpack.c.l.b16 %v1268
    %v1341 = vunpack.c.h.b16 %v1268
    %v1342 = vunpack.c.l.b16 %v1269
    %v1343 = vunpack.c.h.b16 %v1269
    %v1344 = vunpack.c.l.b16 %v1270
    %v1345 = vunpack.c.h.b16 %v1270
    %v1346 = vunpack.c.l.b16 %v1271
    %v1347 = vunpack.c.h.b16 %v1271
    %v1348 = vunpack.c.l.b16 %v1272
    %v1349 = vunpack.c.h.b16 %v1272
    %v1350 = vunpack.c.l.b16 %v1273
    %v1351 = vunpack.c.h.b16 %v1273
    %v1352 = vunpack.c.l.b16 %v1274
    %v1353 = vunpack.c.h.b16 %v1274
    %v1354 = vunpack.c.l.b16 %v1275
    %v1355 = vunpack.c.h.b16 %v1275
    %v1356 = vunpack.c.l.b16 %v1276
    %v1357 = vunpack.c.h.b16 %v1276
    %v1358 = vunpack.c.l.b16 %v1277
    %v1359 = vunpack.c.h.b16 %v1277
    %v1360 = vunpack.c.l.b16 %v1278
    %v1361 = vunpack.c.h.b16 %v1278
    %v1362 = vunpack.c.l.b16 %v1279
    %v1363 = vunpack.c.h.b16 %v1279
    %v1364 = vunpack.c.l.b16 %v1280
    %v1365 = vunpack.c.h.b16 %v1280
    %v1366 = vunpack.c.l.b16 %v1281
    %v1367 = vunpack.c.h.b16 %v1281
    %v1368 = vunpack.c.l.b16 %v1282
    %v1369 = vunpack.c.h.b16 %v1282
    %v1370 = vunpack.c.l.b16 %v1283
    %v1371 = vunpack.c.h.b16 %v1283
    %v1372 = vunpack.c.l.b16 %v1284
    %v1373 = vunpack.c.h.b16 %v1284
    %v1374 = vunpack.c.l.b16 %v1285
    %v1375 = vunpack.c.h.b16 %v1285
    %v1376 = vunpack.c.l.b16 %v1286
    %v1377 = vunpack.c.h.b16 %v1286
    %v1378 = vunpack.c.l.b16 %v1287
    %v1379 = vunpack.c.h.b16 %v1287
    %v1380 = vunpack.c.l.b16 %v1288
    %v1381 = vunpack.c.h.b16 %v1288
    %v1382 = vunpack.c.l.b16 %v1289
    %v1383 = vunpack.c.h.b16 %v1289
    %v1384 = vunpack.c.l.b16 %v1290
    %v1385 = vunpack.c.h.b16 %v1290
    %v1386 = vunpack.c.l.b16 %v1291
    %v1387 = vunpack.c.h.b16 %v1291
    %v1388 = vpack.c.b16 %v1328, %v1324
    %v1389 = vpack.c.b16 %v1329, %v1325
    %v1390 = vpack.c.b16 %v1330, %v1326
    %v1391 = vpack.c.b16 %v1331, %v1327
    %v1392 = vpack.c.b16 %v1336, %v1332
    %v1393 = vpack.c.b16 %v1337, %v1333
    %v1394 = vpack.c.b16 %v1338, %v1334
    %v1395 = vpack.c.b16 %v1339, %v1335
    %v1396 = vpack.c.b16 %v1344, %v1340
    %v1397 = vpack.c.b16 %v1345, %v1341
    %v1398 = vpack.c.b16 %v1346, %v1342
    %v1399 = vpack.c.b16 %v1347, %v1343
    %v1400 = vpack.c.b16 %v1352, %v1348
    %v1401 = vpack.c.b16 %v1353, %v1349
    %v1402 = vpack.c.b16 %v1354, %v1350
    %v1403 = vpack.c.b16 %v1355, %v1351
    %v1404 = vpack.c.b16 %v1360, %v1356
    %v1405 = vpack.c.b16 %v1361, %v1357
    %v1406 = vpack.c.b16 %v1362, %v1358
    %v1407 = vpack.c.b16 %v1363, %v1359
    %v1408 = vpack.c.b16 %v1368, %v1364
    %v1409 = vpack.c.b16 %v1369, %v1365
    %v1410 = vpack.c.b16 %v1370, %v1366
    %v1411 = vpack.c.b16 %v1371, %v1367
    %v1412 = vpack.c.b16 %v1376, %v1372
    %v1413 = vpack.c.b16 %v1377, %v1373
    %v1414 = vpack.c.b16 %v1378, %v1374
    %v1415 = vpack.c.b16 %v1379, %v1375
    %v1416 = vpack.c.b16 %v1384, %v1380
    %v1417 = vpack.c.b16 %v1385, %v1381
    %v1418 = vpack.c.b16 %v1386, %v1382
    %v1419 = vpack.c.b16 %v1387, %v1383
    %1452 = vmatpush.bf16.msra.mxu0 %v1416
    %1453 = vmatpush.bf16.msra.mxu0 %v1412
    %1454 = vmatpush.bf16.msra.mxu0 %v1408
    %1455 = vmatpush.bf16.msra.mxu0 %v1404
    %1456 = vmatpush.bf16.msra.mxu0 %v1400
    %1457 = vmatpush.bf16.msra.mxu0 %v1396
    %1458 = vmatpush.bf16.msra.mxu0 %v1392
    %1459 = vmatpush.bf16.msra.mxu0 %v1388
    %1460 = vmatmul.bf16.gmra.mxu0 %v1257
    %v1461 = vpop.f32.mrf.mxu0
    %v1462 = vadd.f32 0.0, %v1461
    %v1463 = vpop.f32.mrf.mxu0
    %1464 = vdwg.mxu0
    %1465 = vmatpush.bf16.msra.mxu0 %v1417
    %1466 = vmatpush.bf16.msra.mxu0 %v1413
    %1467 = vmatpush.bf16.msra.mxu0 %v1409
    %1468 = vmatpush.bf16.msra.mxu0 %v1405
    %1469 = vmatpush.bf16.msra.mxu0 %v1401
    %1470 = vmatpush.bf16.msra.mxu0 %v1397
    %1471 = vmatpush.bf16.msra.mxu0 %v1393
    %1472 = vmatpush.bf16.msra.mxu0 %v1389
    %1473 = vmatmul.bf16.gmra.mxu0 %v1257
    %v1474 = vpop.f32.mrf.mxu0
    %v1475 = vadd.f32 0.0, %v1474
    %v1476 = vpop.f32.mrf.mxu0
    %1477 = vdwg.mxu0
    %1478 = vmatpush.bf16.msra.mxu0 %v1418
    %1479 = vmatpush.bf16.msra.mxu0 %v1414
    %1480 = vmatpush.bf16.msra.mxu0 %v1410
    %1481 = vmatpush.bf16.msra.mxu0 %v1406
    %1482 = vmatpush.bf16.msra.mxu0 %v1402
    %1483 = vmatpush.bf16.msra.mxu0 %v1398
    %1484 = vmatpush.bf16.msra.mxu0 %v1394
    %1485 = vmatpush.bf16.msra.mxu0 %v1390
    %1486 = vmatmul.bf16.gmra.mxu0 %v1257
    %v1487 = vpop.f32.mrf.mxu0
    %v1488 = vadd.f32 0.0, %v1487
    %v1489 = vpop.f32.mrf.mxu0
    %1490 = vdwg.mxu0
    %1491 = vmatpush.bf16.msra.mxu0 %v1419
    %1492 = vmatpush.bf16.msra.mxu0 %v1415
    %1493 = vmatpush.bf16.msra.mxu0 %v1411
    %1494 = vmatpush.bf16.msra.mxu0 %v1407
    %1495 = vmatpush.bf16.msra.mxu0 %v1403
    %1496 = vmatpush.bf16.msra.mxu0 %v1399
    %1497 = vmatpush.bf16.msra.mxu0 %v1395
    %1498 = vmatpush.bf16.msra.mxu0 %v1391
    %1499 = vmatmul.bf16.gmra.mxu0 %v1257
    %v1500 = vpop.f32.mrf.mxu0
    %v1501 = vadd.f32 0.0, %v1500
    %v1502 = vpop.f32.mrf.mxu0
    %1503 = vdwg.mxu0
    %v1504 = vadd.f32 %v217, %v1462
    %v1505 = vadd.f32 %v246, %v1475
    %v1506 = vadd.f32 %v275, %v1488
    %v1507 = vadd.f32 %v304, %v1501
    %v1508 = vxor.u32 %v1504, 2147483648
    %v1509 = vmul.f32 %v1508, 1.442695
    %v1510 = vpow.pop %v1509
    %v1511 = vadd.f32 %v1510, 1.0
    %v1512 = vrcp.pop %v1511
    %v1513 = vmul.f32 %v1511, %v1512
    %v1514 = vsub.f32 1.0, %v1513
    %v1515 = vmul.f32 %v1512, %v1514
    %v1516 = vadd.f32 %v1512, %v1515
    %vm1517 = vweird.f32 %v1511
    %vm1518 = vweird.f32 %v1512
    %vm1519 = vmor %vm1517, %vm1518
    %v1520 = vsel %vm1519, %v1512, %v1516
    %v1521 = vand.u32 2147483647, %v1511
    %vm1522 = vcmp.eq.f32.partialorder %v1521, 8.507059e+37
    %v1523 = vand.u32 %v1511, 2147483648
    %v1524 = vor.u32 1.1754944e-38, %v1523
    %v1525 = vsel %vm1522, %v1524, %v1520
    %v1526 = vmul.f32 1.0, %v1525
    %v1527 = vxor.u32 %v1505, 2147483648
    %v1528 = vmul.f32 %v1527, 1.442695
    %v1529 = vpow.pop %v1528
    %v1530 = vadd.f32 %v1529, 1.0
    %v1531 = vrcp.pop %v1530
    %v1532 = vmul.f32 %v1530, %v1531
    %v1533 = vsub.f32 1.0, %v1532
    %v1534 = vmul.f32 %v1531, %v1533
    %v1535 = vadd.f32 %v1531, %v1534
    %vm1536 = vweird.f32 %v1530
    %vm1537 = vweird.f32 %v1531
    %vm1538 = vmor %vm1536, %vm1537
    %v1539 = vsel %vm1538, %v1531, %v1535
    %v1540 = vand.u32 2147483647, %v1530
    %vm1541 = vcmp.eq.f32.partialorder %v1540, 8.507059e+37
    %v1542 = vand.u32 %v1530, 2147483648
    %v1543 = vor.u32 1.1754944e-38, %v1542
    %v1544 = vsel %vm1541, %v1543, %v1539
    %v1545 = vmul.f32 1.0, %v1544
    %v1546 = vtanh.pop %v1506
    %v1547 = vxor.u32 %v1507, 2147483648
    %v1548 = vmul.f32 %v1547, 1.442695
    %v1549 = vpow.pop %v1548
    %v1550 = vadd.f32 %v1549, 1.0
    %v1551 = vrcp.pop %v1550
    %v1552 = vmul.f32 %v1550, %v1551
    %v1553 = vsub.f32 1.0, %v1552
    %v1554 = vmul.f32 %v1551, %v1553
    %v1555 = vadd.f32 %v1551, %v1554
    %vm1556 = vweird.f32 %v1550
    %vm1557 = vweird.f32 %v1551
    %vm1558 = vmor %vm1556, %vm1557
    %v1559 = vsel %vm1558, %v1551, %v1555
    %v1560 = vand.u32 2147483647, %v1550
    %vm1561 = vcmp.eq.f32.partialorder %v1560, 8.507059e+37
    %v1562 = vand.u32 %v1550, 2147483648
    %v1563 = vor.u32 1.1754944e-38, %v1562
    %v1564 = vsel %vm1561, %v1563, %v1559
    %v1565 = vmul.f32 1.0, %v1564
    %v1566 = vmul.f32 %v1545, %v1254
    %v1567 = vmul.f32 %v1526, %v1546
    %v1568 = vadd.f32 %v1566, %v1567
    %v1569 = vtanh.pop %v1568
    %v1570 = vmul.f32 %v1565, %v1569
    %v1571 = vpack.c.bf16 %v1570, %v1570
    %s1572 = scalar_lea.vmem [#allocation15], 12
    %1573 = vst [vmem:[%s1572] sm:$0xf] %v1571
    %v1574 = vld [vmem:[#allocation9] sm:$0xff]
    %v1575 = vld [vmem:[#allocation9 + $0x8] sm:$0xff]
    %v1576 = vld [vmem:[#allocation9 + $0x10] sm:$0xff]
    %v1577 = vld [vmem:[#allocation9 + $0x18] sm:$0xff]
    %v1578 = vld [vmem:[#allocation9 + $0x20] sm:$0xff]
    %v1579 = vld [vmem:[#allocation9 + $0x28] sm:$0xff]
    %v1580 = vld [vmem:[#allocation9 + $0x30] sm:$0xff]
    %v1581 = vld [vmem:[#allocation9 + $0x38] sm:$0xff]
    %v1582 = vld [vmem:[#allocation9 + $0x40] sm:$0xff]
    %v1583 = vld [vmem:[#allocation9 + $0x48] sm:$0xff]
    %v1584 = vld [vmem:[#allocation9 + $0x50] sm:$0xff]
    %v1585 = vld [vmem:[#allocation9 + $0x58] sm:$0xff]
    %v1586 = vld [vmem:[#allocation9 + $0x60] sm:$0xff]
    %v1587 = vld [vmem:[#allocation9 + $0x68] sm:$0xff]
    %v1588 = vld [vmem:[#allocation9 + $0x70] sm:$0xff]
    %v1589 = vld [vmem:[#allocation9 + $0x78] sm:$0xff]
    %v1590 = vld [vmem:[#allocation9 + $0x80] sm:$0xff]
    %v1591 = vld [vmem:[#allocation9 + $0x88] sm:$0xff]
    %v1592 = vld [vmem:[#allocation9 + $0x90] sm:$0xff]
    %v1593 = vld [vmem:[#allocation9 + $0x98] sm:$0xff]
    %v1594 = vld [vmem:[#allocation9 + $0xa0] sm:$0xff]
    %v1595 = vld [vmem:[#allocation9 + $0xa8] sm:$0xff]
    %v1596 = vld [vmem:[#allocation9 + $0xb0] sm:$0xff]
    %v1597 = vld [vmem:[#allocation9 + $0xb8] sm:$0xff]
    %v1598 = vld [vmem:[#allocation9 + $0xc0] sm:$0xff]
    %v1599 = vld [vmem:[#allocation9 + $0xc8] sm:$0xff]
    %v1600 = vld [vmem:[#allocation9 + $0xd0] sm:$0xff]
    %v1601 = vld [vmem:[#allocation9 + $0xd8] sm:$0xff]
    %v1602 = vld [vmem:[#allocation9 + $0xe0] sm:$0xff]
    %v1603 = vld [vmem:[#allocation9 + $0xe8] sm:$0xff]
    %v1604 = vld [vmem:[#allocation9 + $0xf0] sm:$0xff]
    %v1605 = vld [vmem:[#allocation9 + $0xf8] sm:$0xff]
    %v1638 = vunpack.c.l.b16 %v1574
    %v1639 = vunpack.c.h.b16 %v1574
    %v1640 = vunpack.c.l.b16 %v1575
    %v1641 = vunpack.c.h.b16 %v1575
    %v1642 = vunpack.c.l.b16 %v1576
    %v1643 = vunpack.c.h.b16 %v1576
    %v1644 = vunpack.c.l.b16 %v1577
    %v1645 = vunpack.c.h.b16 %v1577
    %v1646 = vunpack.c.l.b16 %v1578
    %v1647 = vunpack.c.h.b16 %v1578
    %v1648 = vunpack.c.l.b16 %v1579
    %v1649 = vunpack.c.h.b16 %v1579
    %v1650 = vunpack.c.l.b16 %v1580
    %v1651 = vunpack.c.h.b16 %v1580
    %v1652 = vunpack.c.l.b16 %v1581
    %v1653 = vunpack.c.h.b16 %v1581
    %v1654 = vunpack.c.l.b16 %v1582
    %v1655 = vunpack.c.h.b16 %v1582
    %v1656 = vunpack.c.l.b16 %v1583
    %v1657 = vunpack.c.h.b16 %v1583
    %v1658 = vunpack.c.l.b16 %v1584
    %v1659 = vunpack.c.h.b16 %v1584
    %v1660 = vunpack.c.l.b16 %v1585
    %v1661 = vunpack.c.h.b16 %v1585
    %v1662 = vunpack.c.l.b16 %v1586
    %v1663 = vunpack.c.h.b16 %v1586
    %v1664 = vunpack.c.l.b16 %v1587
    %v1665 = vunpack.c.h.b16 %v1587
    %v1666 = vunpack.c.l.b16 %v1588
    %v1667 = vunpack.c.h.b16 %v1588
    %v1668 = vunpack.c.l.b16 %v1589
    %v1669 = vunpack.c.h.b16 %v1589
    %v1670 = vunpack.c.l.b16 %v1590
    %v1671 = vunpack.c.h.b16 %v1590
    %v1672 = vunpack.c.l.b16 %v1591
    %v1673 = vunpack.c.h.b16 %v1591
    %v1674 = vunpack.c.l.b16 %v1592
    %v1675 = vunpack.c.h.b16 %v1592
    %v1676 = vunpack.c.l.b16 %v1593
    %v1677 = vunpack.c.h.b16 %v1593
    %v1678 = vunpack.c.l.b16 %v1594
    %v1679 = vunpack.c.h.b16 %v1594
    %v1680 = vunpack.c.l.b16 %v1595
    %v1681 = vunpack.c.h.b16 %v1595
    %v1682 = vunpack.c.l.b16 %v1596
    %v1683 = vunpack.c.h.b16 %v1596
    %v1684 = vunpack.c.l.b16 %v1597
    %v1685 = vunpack.c.h.b16 %v1597
    %v1686 = vunpack.c.l.b16 %v1598
    %v1687 = vunpack.c.h.b16 %v1598
    %v1688 = vunpack.c.l.b16 %v1599
    %v1689 = vunpack.c.h.b16 %v1599
    %v1690 = vunpack.c.l.b16 %v1600
    %v1691 = vunpack.c.h.b16 %v1600
    %v1692 = vunpack.c.l.b16 %v1601
    %v1693 = vunpack.c.h.b16 %v1601
    %v1694 = vunpack.c.l.b16 %v1602
    %v1695 = vunpack.c.h.b16 %v1602
    %v1696 = vunpack.c.l.b16 %v1603
    %v1697 = vunpack.c.h.b16 %v1603
    %v1698 = vunpack.c.l.b16 %v1604
    %v1699 = vunpack.c.h.b16 %v1604
    %v1700 = vunpack.c.l.b16 %v1605
    %v1701 = vunpack.c.h.b16 %v1605
    %v1702 = vpack.c.b16 %v1642, %v1638
    %v1703 = vpack.c.b16 %v1643, %v1639
    %v1704 = vpack.c.b16 %v1644, %v1640
    %v1705 = vpack.c.b16 %v1645, %v1641
    %v1706 = vpack.c.b16 %v1650, %v1646
    %v1707 = vpack.c.b16 %v1651, %v1647
    %v1708 = vpack.c.b16 %v1652, %v1648
    %v1709 = vpack.c.b16 %v1653, %v1649
    %v1710 = vpack.c.b16 %v1658, %v1654
    %v1711 = vpack.c.b16 %v1659, %v1655
    %v1712 = vpack.c.b16 %v1660, %v1656
    %v1713 = vpack.c.b16 %v1661, %v1657
    %v1714 = vpack.c.b16 %v1666, %v1662
    %v1715 = vpack.c.b16 %v1667, %v1663
    %v1716 = vpack.c.b16 %v1668, %v1664
    %v1717 = vpack.c.b16 %v1669, %v1665
    %v1718 = vpack.c.b16 %v1674, %v1670
    %v1719 = vpack.c.b16 %v1675, %v1671
    %v1720 = vpack.c.b16 %v1676, %v1672
    %v1721 = vpack.c.b16 %v1677, %v1673
    %v1722 = vpack.c.b16 %v1682, %v1678
    %v1723 = vpack.c.b16 %v1683, %v1679
    %v1724 = vpack.c.b16 %v1684, %v1680
    %v1725 = vpack.c.b16 %v1685, %v1681
    %v1726 = vpack.c.b16 %v1690, %v1686
    %v1727 = vpack.c.b16 %v1691, %v1687
    %v1728 = vpack.c.b16 %v1692, %v1688
    %v1729 = vpack.c.b16 %v1693, %v1689
    %v1730 = vpack.c.b16 %v1698, %v1694
    %v1731 = vpack.c.b16 %v1699, %v1695
    %v1732 = vpack.c.b16 %v1700, %v1696
    %v1733 = vpack.c.b16 %v1701, %v1697
    %1766 = vmatpush.bf16.msra.mxu0 %v1730
    %1767 = vmatpush.bf16.msra.mxu0 %v1726
    %1768 = vmatpush.bf16.msra.mxu0 %v1722
    %1769 = vmatpush.bf16.msra.mxu0 %v1718
    %1770 = vmatpush.bf16.msra.mxu0 %v1714
    %1771 = vmatpush.bf16.msra.mxu0 %v1710
    %1772 = vmatpush.bf16.msra.mxu0 %v1706
    %1773 = vmatpush.bf16.msra.mxu0 %v1702
    %1774 = vmatmul.bf16.gmra.mxu0 %v1571
    %v1775 = vpop.f32.mrf.mxu0
    %v1776 = vadd.f32 0.0, %v1775
    %v1777 = vpop.f32.mrf.mxu0
    %1778 = vdwg.mxu0
    %1779 = vmatpush.bf16.msra.mxu0 %v1731
    %1780 = vmatpush.bf16.msra.mxu0 %v1727
    %1781 = vmatpush.bf16.msra.mxu0 %v1723
    %1782 = vmatpush.bf16.msra.mxu0 %v1719
    %1783 = vmatpush.bf16.msra.mxu0 %v1715
    %1784 = vmatpush.bf16.msra.mxu0 %v1711
    %1785 = vmatpush.bf16.msra.mxu0 %v1707
    %1786 = vmatpush.bf16.msra.mxu0 %v1703
    %1787 = vmatmul.bf16.gmra.mxu0 %v1571
    %v1788 = vpop.f32.mrf.mxu0
    %v1789 = vadd.f32 0.0, %v1788
    %v1790 = vpop.f32.mrf.mxu0
    %1791 = vdwg.mxu0
    %1792 = vmatpush.bf16.msra.mxu0 %v1732
    %1793 = vmatpush.bf16.msra.mxu0 %v1728
    %1794 = vmatpush.bf16.msra.mxu0 %v1724
    %1795 = vmatpush.bf16.msra.mxu0 %v1720
    %1796 = vmatpush.bf16.msra.mxu0 %v1716
    %1797 = vmatpush.bf16.msra.mxu0 %v1712
    %1798 = vmatpush.bf16.msra.mxu0 %v1708
    %1799 = vmatpush.bf16.msra.mxu0 %v1704
    %1800 = vmatmul.bf16.gmra.mxu0 %v1571
    %v1801 = vpop.f32.mrf.mxu0
    %v1802 = vadd.f32 0.0, %v1801
    %v1803 = vpop.f32.mrf.mxu0
    %1804 = vdwg.mxu0
    %1805 = vmatpush.bf16.msra.mxu0 %v1733
    %1806 = vmatpush.bf16.msra.mxu0 %v1729
    %1807 = vmatpush.bf16.msra.mxu0 %v1725
    %1808 = vmatpush.bf16.msra.mxu0 %v1721
    %1809 = vmatpush.bf16.msra.mxu0 %v1717
    %1810 = vmatpush.bf16.msra.mxu0 %v1713
    %1811 = vmatpush.bf16.msra.mxu0 %v1709
    %1812 = vmatpush.bf16.msra.mxu0 %v1705
    %1813 = vmatmul.bf16.gmra.mxu0 %v1571
    %v1814 = vpop.f32.mrf.mxu0
    %v1815 = vadd.f32 0.0, %v1814
    %v1816 = vpop.f32.mrf.mxu0
    %1817 = vdwg.mxu0
    %v1818 = vadd.f32 %v220, %v1776
    %v1819 = vadd.f32 %v249, %v1789
    %v1820 = vadd.f32 %v278, %v1802
    %v1821 = vadd.f32 %v307, %v1815
    %v1822 = vxor.u32 %v1818, 2147483648
    %v1823 = vmul.f32 %v1822, 1.442695
    %v1824 = vpow.pop %v1823
    %v1825 = vadd.f32 %v1824, 1.0
    %v1826 = vrcp.pop %v1825
    %v1827 = vmul.f32 %v1825, %v1826
    %v1828 = vsub.f32 1.0, %v1827
    %v1829 = vmul.f32 %v1826, %v1828
    %v1830 = vadd.f32 %v1826, %v1829
    %vm1831 = vweird.f32 %v1825
    %vm1832 = vweird.f32 %v1826
    %vm1833 = vmor %vm1831, %vm1832
    %v1834 = vsel %vm1833, %v1826, %v1830
    %v1835 = vand.u32 2147483647, %v1825
    %vm1836 = vcmp.eq.f32.partialorder %v1835, 8.507059e+37
    %v1837 = vand.u32 %v1825, 2147483648
    %v1838 = vor.u32 1.1754944e-38, %v1837
    %v1839 = vsel %vm1836, %v1838, %v1834
    %v1840 = vmul.f32 1.0, %v1839
    %v1841 = vxor.u32 %v1819, 2147483648
    %v1842 = vmul.f32 %v1841, 1.442695
    %v1843 = vpow.pop %v1842
    %v1844 = vadd.f32 %v1843, 1.0
    %v1845 = vrcp.pop %v1844
    %v1846 = vmul.f32 %v1844, %v1845
    %v1847 = vsub.f32 1.0, %v1846
    %v1848 = vmul.f32 %v1845, %v1847
    %v1849 = vadd.f32 %v1845, %v1848
    %vm1850 = vweird.f32 %v1844
    %vm1851 = vweird.f32 %v1845
    %vm1852 = vmor %vm1850, %vm1851
    %v1853 = vsel %vm1852, %v1845, %v1849
    %v1854 = vand.u32 2147483647, %v1844
    %vm1855 = vcmp.eq.f32.partialorder %v1854, 8.507059e+37
    %v1856 = vand.u32 %v1844, 2147483648
    %v1857 = vor.u32 1.1754944e-38, %v1856
    %v1858 = vsel %vm1855, %v1857, %v1853
    %v1859 = vmul.f32 1.0, %v1858
    %v1860 = vtanh.pop %v1820
    %v1861 = vxor.u32 %v1821, 2147483648
    %v1862 = vmul.f32 %v1861, 1.442695
    %v1863 = vpow.pop %v1862
    %v1864 = vadd.f32 %v1863, 1.0
    %v1865 = vrcp.pop %v1864
    %v1866 = vmul.f32 %v1864, %v1865
    %v1867 = vsub.f32 1.0, %v1866
    %v1868 = vmul.f32 %v1865, %v1867
    %v1869 = vadd.f32 %v1865, %v1868
    %vm1870 = vweird.f32 %v1864
    %vm1871 = vweird.f32 %v1865
    %vm1872 = vmor %vm1870, %vm1871
    %v1873 = vsel %vm1872, %v1865, %v1869
    %v1874 = vand.u32 2147483647, %v1864
    %vm1875 = vcmp.eq.f32.partialorder %v1874, 8.507059e+37
    %v1876 = vand.u32 %v1864, 2147483648
    %v1877 = vor.u32 1.1754944e-38, %v1876
    %v1878 = vsel %vm1875, %v1877, %v1873
    %v1879 = vmul.f32 1.0, %v1878
    %v1880 = vmul.f32 %v1859, %v1568
    %v1881 = vmul.f32 %v1840, %v1860
    %v1882 = vadd.f32 %v1880, %v1881
    %v1883 = vtanh.pop %v1882
    %v1884 = vmul.f32 %v1879, %v1883
    %v1885 = vpack.c.bf16 %v1884, %v1884
    %s1886 = scalar_lea.vmem [#allocation15], 16
    %1887 = vst [vmem:[%s1886] sm:$0xf] %v1885
    %v1888 = vld [vmem:[#allocation9] sm:$0xff]
    %v1889 = vld [vmem:[#allocation9 + $0x8] sm:$0xff]
    %v1890 = vld [vmem:[#allocation9 + $0x10] sm:$0xff]
    %v1891 = vld [vmem:[#allocation9 + $0x18] sm:$0xff]
    %v1892 = vld [vmem:[#allocation9 + $0x20] sm:$0xff]
    %v1893 = vld [vmem:[#allocation9 + $0x28] sm:$0xff]
    %v1894 = vld [vmem:[#allocation9 + $0x30] sm:$0xff]
    %v1895 = vld [vmem:[#allocation9 + $0x38] sm:$0xff]
    %v1896 = vld [vmem:[#allocation9 + $0x40] sm:$0xff]
    %v1897 = vld [vmem:[#allocation9 + $0x48] sm:$0xff]
    %v1898 = vld [vmem:[#allocation9 + $0x50] sm:$0xff]
    %v1899 = vld [vmem:[#allocation9 + $0x58] sm:$0xff]
    %v1900 = vld [vmem:[#allocation9 + $0x60] sm:$0xff]
    %v1901 = vld [vmem:[#allocation9 + $0x68] sm:$0xff]
    %v1902 = vld [vmem:[#allocation9 + $0x70] sm:$0xff]
    %v1903 = vld [vmem:[#allocation9 + $0x78] sm:$0xff]
    %v1904 = vld [vmem:[#allocation9 + $0x80] sm:$0xff]
    %v1905 = vld [vmem:[#allocation9 + $0x88] sm:$0xff]
    %v1906 = vld [vmem:[#allocation9 + $0x90] sm:$0xff]
    %v1907 = vld [vmem:[#allocation9 + $0x98] sm:$0xff]
    %v1908 = vld [vmem:[#allocation9 + $0xa0] sm:$0xff]
    %v1909 = vld [vmem:[#allocation9 + $0xa8] sm:$0xff]
    %v1910 = vld [vmem:[#allocation9 + $0xb0] sm:$0xff]
    %v1911 = vld [vmem:[#allocation9 + $0xb8] sm:$0xff]
    %v1912 = vld [vmem:[#allocation9 + $0xc0] sm:$0xff]
    %v1913 = vld [vmem:[#allocation9 + $0xc8] sm:$0xff]
    %v1914 = vld [vmem:[#allocation9 + $0xd0] sm:$0xff]
    %v1915 = vld [vmem:[#allocation9 + $0xd8] sm:$0xff]
    %v1916 = vld [vmem:[#allocation9 + $0xe0] sm:$0xff]
    %v1917 = vld [vmem:[#allocation9 + $0xe8] sm:$0xff]
    %v1918 = vld [vmem:[#allocation9 + $0xf0] sm:$0xff]
    %v1919 = vld [vmem:[#allocation9 + $0xf8] sm:$0xff]
    %v1952 = vunpack.c.l.b16 %v1888
    %v1953 = vunpack.c.h.b16 %v1888
    %v1954 = vunpack.c.l.b16 %v1889
    %v1955 = vunpack.c.h.b16 %v1889
    %v1956 = vunpack.c.l.b16 %v1890
    %v1957 = vunpack.c.h.b16 %v1890
    %v1958 = vunpack.c.l.b16 %v1891
    %v1959 = vunpack.c.h.b16 %v1891
    %v1960 = vunpack.c.l.b16 %v1892
    %v1961 = vunpack.c.h.b16 %v1892
    %v1962 = vunpack.c.l.b16 %v1893
    %v1963 = vunpack.c.h.b16 %v1893
    %v1964 = vunpack.c.l.b16 %v1894
    %v1965 = vunpack.c.h.b16 %v1894
    %v1966 = vunpack.c.l.b16 %v1895
    %v1967 = vunpack.c.h.b16 %v1895
    %v1968 = vunpack.c.l.b16 %v1896
    %v1969 = vunpack.c.h.b16 %v1896
    %v1970 = vunpack.c.l.b16 %v1897
    %v1971 = vunpack.c.h.b16 %v1897
    %v1972 = vunpack.c.l.b16 %v1898
    %v1973 = vunpack.c.h.b16 %v1898
    %v1974 = vunpack.c.l.b16 %v1899
    %v1975 = vunpack.c.h.b16 %v1899
    %v1976 = vunpack.c.l.b16 %v1900
    %v1977 = vunpack.c.h.b16 %v1900
    %v1978 = vunpack.c.l.b16 %v1901
    %v1979 = vunpack.c.h.b16 %v1901
    %v1980 = vunpack.c.l.b16 %v1902
    %v1981 = vunpack.c.h.b16 %v1902
    %v1982 = vunpack.c.l.b16 %v1903
    %v1983 = vunpack.c.h.b16 %v1903
    %v1984 = vunpack.c.l.b16 %v1904
    %v1985 = vunpack.c.h.b16 %v1904
    %v1986 = vunpack.c.l.b16 %v1905
    %v1987 = vunpack.c.h.b16 %v1905
    %v1988 = vunpack.c.l.b16 %v1906
    %v1989 = vunpack.c.h.b16 %v1906
    %v1990 = vunpack.c.l.b16 %v1907
    %v1991 = vunpack.c.h.b16 %v1907
    %v1992 = vunpack.c.l.b16 %v1908
    %v1993 = vunpack.c.h.b16 %v1908
    %v1994 = vunpack.c.l.b16 %v1909
    %v1995 = vunpack.c.h.b16 %v1909
    %v1996 = vunpack.c.l.b16 %v1910
    %v1997 = vunpack.c.h.b16 %v1910
    %v1998 = vunpack.c.l.b16 %v1911
    %v1999 = vunpack.c.h.b16 %v1911
    %v2000 = vunpack.c.l.b16 %v1912
    %v2001 = vunpack.c.h.b16 %v1912
    %v2002 = vunpack.c.l.b16 %v1913
    %v2003 = vunpack.c.h.b16 %v1913
    %v2004 = vunpack.c.l.b16 %v1914
    %v2005 = vunpack.c.h.b16 %v1914
    %v2006 = vunpack.c.l.b16 %v1915
    %v2007 = vunpack.c.h.b16 %v1915
    %v2008 = vunpack.c.l.b16 %v1916
    %v2009 = vunpack.c.h.b16 %v1916
    %v2010 = vunpack.c.l.b16 %v1917
    %v2011 = vunpack.c.h.b16 %v1917
    %v2012 = vunpack.c.l.b16 %v1918
    %v2013 = vunpack.c.h.b16 %v1918
    %v2014 = vunpack.c.l.b16 %v1919
    %v2015 = vunpack.c.h.b16 %v1919
    %v2016 = vpack.c.b16 %v1956, %v1952
    %v2017 = vpack.c.b16 %v1957, %v1953
    %v2018 = vpack.c.b16 %v1958, %v1954
    %v2019 = vpack.c.b16 %v1959, %v1955
    %v2020 = vpack.c.b16 %v1964, %v1960
    %v2021 = vpack.c.b16 %v1965, %v1961
    %v2022 = vpack.c.b16 %v1966, %v1962
    %v2023 = vpack.c.b16 %v1967, %v1963
    %v2024 = vpack.c.b16 %v1972, %v1968
    %v2025 = vpack.c.b16 %v1973, %v1969
    %v2026 = vpack.c.b16 %v1974, %v1970
    %v2027 = vpack.c.b16 %v1975, %v1971
    %v2028 = vpack.c.b16 %v1980, %v1976
    %v2029 = vpack.c.b16 %v1981, %v1977
    %v2030 = vpack.c.b16 %v1982, %v1978
    %v2031 = vpack.c.b16 %v1983, %v1979
    %v2032 = vpack.c.b16 %v1988, %v1984
    %v2033 = vpack.c.b16 %v1989, %v1985
    %v2034 = vpack.c.b16 %v1990, %v1986
    %v2035 = vpack.c.b16 %v1991, %v1987
    %v2036 = vpack.c.b16 %v1996, %v1992
    %v2037 = vpack.c.b16 %v1997, %v1993
    %v2038 = vpack.c.b16 %v1998, %v1994
    %v2039 = vpack.c.b16 %v1999, %v1995
    %v2040 = vpack.c.b16 %v2004, %v2000
    %v2041 = vpack.c.b16 %v2005, %v2001
    %v2042 = vpack.c.b16 %v2006, %v2002
    %v2043 = vpack.c.b16 %v2007, %v2003
    %v2044 = vpack.c.b16 %v2012, %v2008
    %v2045 = vpack.c.b16 %v2013, %v2009
    %v2046 = vpack.c.b16 %v2014, %v2010
    %v2047 = vpack.c.b16 %v2015, %v2011
    %2080 = vmatpush.bf16.msra.mxu0 %v2044
    %2081 = vmatpush.bf16.msra.mxu0 %v2040
    %2082 = vmatpush.bf16.msra.mxu0 %v2036
    %2083 = vmatpush.bf16.msra.mxu0 %v2032
    %2084 = vmatpush.bf16.msra.mxu0 %v2028
    %2085 = vmatpush.bf16.msra.mxu0 %v2024
    %2086 = vmatpush.bf16.msra.mxu0 %v2020
    %2087 = vmatpush.bf16.msra.mxu0 %v2016
    %2088 = vmatmul.bf16.gmra.mxu0 %v1885
    %v2089 = vpop.f32.mrf.mxu0
    %v2090 = vadd.f32 0.0, %v2089
    %v2091 = vpop.f32.mrf.mxu0
    %2092 = vdwg.mxu0
    %2093 = vmatpush.bf16.msra.mxu0 %v2045
    %2094 = vmatpush.bf16.msra.mxu0 %v2041
    %2095 = vmatpush.bf16.msra.mxu0 %v2037
    %2096 = vmatpush.bf16.msra.mxu0 %v2033
    %2097 = vmatpush.bf16.msra.mxu0 %v2029
    %2098 = vmatpush.bf16.msra.mxu0 %v2025
    %2099 = vmatpush.bf16.msra.mxu0 %v2021
    %2100 = vmatpush.bf16.msra.mxu0 %v2017
    %2101 = vmatmul.bf16.gmra.mxu0 %v1885
    %v2102 = vpop.f32.mrf.mxu0
    %v2103 = vadd.f32 0.0, %v2102
    %v2104 = vpop.f32.mrf.mxu0
    %2105 = vdwg.mxu0
    %2106 = vmatpush.bf16.msra.mxu0 %v2046
    %2107 = vmatpush.bf16.msra.mxu0 %v2042
    %2108 = vmatpush.bf16.msra.mxu0 %v2038
    %2109 = vmatpush.bf16.msra.mxu0 %v2034
    %2110 = vmatpush.bf16.msra.mxu0 %v2030
    %2111 = vmatpush.bf16.msra.mxu0 %v2026
    %2112 = vmatpush.bf16.msra.mxu0 %v2022
    %2113 = vmatpush.bf16.msra.mxu0 %v2018
    %2114 = vmatmul.bf16.gmra.mxu0 %v1885
    %v2115 = vpop.f32.mrf.mxu0
    %v2116 = vadd.f32 0.0, %v2115
    %v2117 = vpop.f32.mrf.mxu0
    %2118 = vdwg.mxu0
    %2119 = vmatpush.bf16.msra.mxu0 %v2047
    %2120 = vmatpush.bf16.msra.mxu0 %v2043
    %2121 = vmatpush.bf16.msra.mxu0 %v2039
    %2122 = vmatpush.bf16.msra.mxu0 %v2035
    %2123 = vmatpush.bf16.msra.mxu0 %v2031
    %2124 = vmatpush.bf16.msra.mxu0 %v2027
    %2125 = vmatpush.bf16.msra.mxu0 %v2023
    %2126 = vmatpush.bf16.msra.mxu0 %v2019
    %2127 = vmatmul.bf16.gmra.mxu0 %v1885
    %v2128 = vpop.f32.mrf.mxu0
    %v2129 = vadd.f32 0.0, %v2128
    %v2130 = vpop.f32.mrf.mxu0
    %2131 = vdwg.mxu0
    %v2132 = vadd.f32 %v222, %v2090
    %v2133 = vadd.f32 %v251, %v2103
    %v2134 = vadd.f32 %v280, %v2116
    %v2135 = vadd.f32 %v309, %v2129
    %v2136 = vxor.u32 %v2132, 2147483648
    %v2137 = vmul.f32 %v2136, 1.442695
    %v2138 = vpow.pop %v2137
    %v2139 = vadd.f32 %v2138, 1.0
    %v2140 = vrcp.pop %v2139
    %v2141 = vmul.f32 %v2139, %v2140
    %v2142 = vsub.f32 1.0, %v2141
    %v2143 = vmul.f32 %v2140, %v2142
    %v2144 = vadd.f32 %v2140, %v2143
    %vm2145 = vweird.f32 %v2139
    %vm2146 = vweird.f32 %v2140
    %vm2147 = vmor %vm2145, %vm2146
    %v2148 = vsel %vm2147, %v2140, %v2144
    %v2149 = vand.u32 2147483647, %v2139
    %vm2150 = vcmp.eq.f32.partialorder %v2149, 8.507059e+37
    %v2151 = vand.u32 %v2139, 2147483648
    %v2152 = vor.u32 1.1754944e-38, %v2151
    %v2153 = vsel %vm2150, %v2152, %v2148
    %v2154 = vmul.f32 1.0, %v2153
    %v2155 = vxor.u32 %v2133, 2147483648
    %v2156 = vmul.f32 %v2155, 1.442695
    %v2157 = vpow.pop %v2156
    %v2158 = vadd.f32 %v2157, 1.0
    %v2159 = vrcp.pop %v2158
    %v2160 = vmul.f32 %v2158, %v2159
    %v2161 = vsub.f32 1.0, %v2160
    %v2162 = vmul.f32 %v2159, %v2161
    %v2163 = vadd.f32 %v2159, %v2162
    %vm2164 = vweird.f32 %v2158
    %vm2165 = vweird.f32 %v2159
    %vm2166 = vmor %vm2164, %vm2165
    %v2167 = vsel %vm2166, %v2159, %v2163
    %v2168 = vand.u32 2147483647, %v2158
    %vm2169 = vcmp.eq.f32.partialorder %v2168, 8.507059e+37
    %v2170 = vand.u32 %v2158, 2147483648
    %v2171 = vor.u32 1.1754944e-38, %v2170
    %v2172 = vsel %vm2169, %v2171, %v2167
    %v2173 = vmul.f32 1.0, %v2172
    %v2174 = vtanh.pop %v2134
    %v2175 = vxor.u32 %v2135, 2147483648
    %v2176 = vmul.f32 %v2175, 1.442695
    %v2177 = vpow.pop %v2176
    %v2178 = vadd.f32 %v2177, 1.0
    %v2179 = vrcp.pop %v2178
    %v2180 = vmul.f32 %v2178, %v2179
    %v2181 = vsub.f32 1.0, %v2180
    %v2182 = vmul.f32 %v2179, %v2181
    %v2183 = vadd.f32 %v2179, %v2182
    %vm2184 = vweird.f32 %v2178
    %vm2185 = vweird.f32 %v2179
    %vm2186 = vmor %vm2184, %vm2185
    %v2187 = vsel %vm2186, %v2179, %v2183
    %v2188 = vand.u32 2147483647, %v2178
    %vm2189 = vcmp.eq.f32.partialorder %v2188, 8.507059e+37
    %v2190 = vand.u32 %v2178, 2147483648
    %v2191 = vor.u32 1.1754944e-38, %v2190
    %v2192 = vsel %vm2189, %v2191, %v2187
    %v2193 = vmul.f32 1.0, %v2192
    %v2194 = vmul.f32 %v2173, %v1882
    %v2195 = vmul.f32 %v2154, %v2174
    %v2196 = vadd.f32 %v2194, %v2195
    %v2197 = vtanh.pop %v2196
    %v2198 = vmul.f32 %v2193, %v2197
    %v2199 = vpack.c.bf16 %v2198, %v2198
    %s2200 = scalar_lea.vmem [#allocation15], 20
    %2201 = vst [vmem:[%s2200] sm:$0xf] %v2199
    %v2202 = vld [vmem:[#allocation9] sm:$0xff]
    %v2203 = vld [vmem:[#allocation9 + $0x8] sm:$0xff]
    %v2204 = vld [vmem:[#allocation9 + $0x10] sm:$0xff]
    %v2205 = vld [vmem:[#allocation9 + $0x18] sm:$0xff]
    %v2206 = vld [vmem:[#allocation9 + $0x20] sm:$0xff]
    %v2207 = vld [vmem:[#allocation9 + $0x28] sm:$0xff]
    %v2208 = vld [vmem:[#allocation9 + $0x30] sm:$0xff]
    %v2209 = vld [vmem:[#allocation9 + $0x38] sm:$0xff]
    %v2210 = vld [vmem:[#allocation9 + $0x40] sm:$0xff]
    %v2211 = vld [vmem:[#allocation9 + $0x48] sm:$0xff]
    %v2212 = vld [vmem:[#allocation9 + $0x50] sm:$0xff]
    %v2213 = vld [vmem:[#allocation9 + $0x58] sm:$0xff]
    %v2214 = vld [vmem:[#allocation9 + $0x60] sm:$0xff]
    %v2215 = vld [vmem:[#allocation9 + $0x68] sm:$0xff]
    %v2216 = vld [vmem:[#allocation9 + $0x70] sm:$0xff]
    %v2217 = vld [vmem:[#allocation9 + $0x78] sm:$0xff]
    %v2218 = vld [vmem:[#allocation9 + $0x80] sm:$0xff]
    %v2219 = vld [vmem:[#allocation9 + $0x88] sm:$0xff]
    %v2220 = vld [vmem:[#allocation9 + $0x90] sm:$0xff]
    %v2221 = vld [vmem:[#allocation9 + $0x98] sm:$0xff]
    %v2222 = vld [vmem:[#allocation9 + $0xa0] sm:$0xff]
    %v2223 = vld [vmem:[#allocation9 + $0xa8] sm:$0xff]
    %v2224 = vld [vmem:[#allocation9 + $0xb0] sm:$0xff]
    %v2225 = vld [vmem:[#allocation9 + $0xb8] sm:$0xff]
    %v2226 = vld [vmem:[#allocation9 + $0xc0] sm:$0xff]
    %v2227 = vld [vmem:[#allocation9 + $0xc8] sm:$0xff]
    %v2228 = vld [vmem:[#allocation9 + $0xd0] sm:$0xff]
    %v2229 = vld [vmem:[#allocation9 + $0xd8] sm:$0xff]
    %v2230 = vld [vmem:[#allocation9 + $0xe0] sm:$0xff]
    %v2231 = vld [vmem:[#allocation9 + $0xe8] sm:$0xff]
    %v2232 = vld [vmem:[#allocation9 + $0xf0] sm:$0xff]
    %v2233 = vld [vmem:[#allocation9 + $0xf8] sm:$0xff]
    %v2266 = vunpack.c.l.b16 %v2202
    %v2267 = vunpack.c.h.b16 %v2202
    %v2268 = vunpack.c.l.b16 %v2203
    %v2269 = vunpack.c.h.b16 %v2203
    %v2270 = vunpack.c.l.b16 %v2204
    %v2271 = vunpack.c.h.b16 %v2204
    %v2272 = vunpack.c.l.b16 %v2205
    %v2273 = vunpack.c.h.b16 %v2205
    %v2274 = vunpack.c.l.b16 %v2206
    %v2275 = vunpack.c.h.b16 %v2206
    %v2276 = vunpack.c.l.b16 %v2207
    %v2277 = vunpack.c.h.b16 %v2207
    %v2278 = vunpack.c.l.b16 %v2208
    %v2279 = vunpack.c.h.b16 %v2208
    %v2280 = vunpack.c.l.b16 %v2209
    %v2281 = vunpack.c.h.b16 %v2209
    %v2282 = vunpack.c.l.b16 %v2210
    %v2283 = vunpack.c.h.b16 %v2210
    %v2284 = vunpack.c.l.b16 %v2211
    %v2285 = vunpack.c.h.b16 %v2211
    %v2286 = vunpack.c.l.b16 %v2212
    %v2287 = vunpack.c.h.b16 %v2212
    %v2288 = vunpack.c.l.b16 %v2213
    %v2289 = vunpack.c.h.b16 %v2213
    %v2290 = vunpack.c.l.b16 %v2214
    %v2291 = vunpack.c.h.b16 %v2214
    %v2292 = vunpack.c.l.b16 %v2215
    %v2293 = vunpack.c.h.b16 %v2215
    %v2294 = vunpack.c.l.b16 %v2216
    %v2295 = vunpack.c.h.b16 %v2216
    %v2296 = vunpack.c.l.b16 %v2217
    %v2297 = vunpack.c.h.b16 %v2217
    %v2298 = vunpack.c.l.b16 %v2218
    %v2299 = vunpack.c.h.b16 %v2218
    %v2300 = vunpack.c.l.b16 %v2219
    %v2301 = vunpack.c.h.b16 %v2219
    %v2302 = vunpack.c.l.b16 %v2220
    %v2303 = vunpack.c.h.b16 %v2220
    %v2304 = vunpack.c.l.b16 %v2221
    %v2305 = vunpack.c.h.b16 %v2221
    %v2306 = vunpack.c.l.b16 %v2222
    %v2307 = vunpack.c.h.b16 %v2222
    %v2308 = vunpack.c.l.b16 %v2223
    %v2309 = vunpack.c.h.b16 %v2223
    %v2310 = vunpack.c.l.b16 %v2224
    %v2311 = vunpack.c.h.b16 %v2224
    %v2312 = vunpack.c.l.b16 %v2225
    %v2313 = vunpack.c.h.b16 %v2225
    %v2314 = vunpack.c.l.b16 %v2226
    %v2315 = vunpack.c.h.b16 %v2226
    %v2316 = vunpack.c.l.b16 %v2227
    %v2317 = vunpack.c.h.b16 %v2227
    %v2318 = vunpack.c.l.b16 %v2228
    %v2319 = vunpack.c.h.b16 %v2228
    %v2320 = vunpack.c.l.b16 %v2229
    %v2321 = vunpack.c.h.b16 %v2229
    %v2322 = vunpack.c.l.b16 %v2230
    %v2323 = vunpack.c.h.b16 %v2230
    %v2324 = vunpack.c.l.b16 %v2231
    %v2325 = vunpack.c.h.b16 %v2231
    %v2326 = vunpack.c.l.b16 %v2232
    %v2327 = vunpack.c.h.b16 %v2232
    %v2328 = vunpack.c.l.b16 %v2233
    %v2329 = vunpack.c.h.b16 %v2233
    %v2330 = vpack.c.b16 %v2270, %v2266
    %v2331 = vpack.c.b16 %v2271, %v2267
    %v2332 = vpack.c.b16 %v2272, %v2268
    %v2333 = vpack.c.b16 %v2273, %v2269
    %v2334 = vpack.c.b16 %v2278, %v2274
    %v2335 = vpack.c.b16 %v2279, %v2275
    %v2336 = vpack.c.b16 %v2280, %v2276
    %v2337 = vpack.c.b16 %v2281, %v2277
    %v2338 = vpack.c.b16 %v2286, %v2282
    %v2339 = vpack.c.b16 %v2287, %v2283
    %v2340 = vpack.c.b16 %v2288, %v2284
    %v2341 = vpack.c.b16 %v2289, %v2285
    %v2342 = vpack.c.b16 %v2294, %v2290
    %v2343 = vpack.c.b16 %v2295, %v2291
    %v2344 = vpack.c.b16 %v2296, %v2292
    %v2345 = vpack.c.b16 %v2297, %v2293
    %v2346 = vpack.c.b16 %v2302, %v2298
    %v2347 = vpack.c.b16 %v2303, %v2299
    %v2348 = vpack.c.b16 %v2304, %v2300
    %v2349 = vpack.c.b16 %v2305, %v2301
    %v2350 = vpack.c.b16 %v2310, %v2306
    %v2351 = vpack.c.b16 %v2311, %v2307
    %v2352 = vpack.c.b16 %v2312, %v2308
    %v2353 = vpack.c.b16 %v2313, %v2309
    %v2354 = vpack.c.b16 %v2318, %v2314
    %v2355 = vpack.c.b16 %v2319, %v2315
    %v2356 = vpack.c.b16 %v2320, %v2316
    %v2357 = vpack.c.b16 %v2321, %v2317
    %v2358 = vpack.c.b16 %v2326, %v2322
    %v2359 = vpack.c.b16 %v2327, %v2323
    %v2360 = vpack.c.b16 %v2328, %v2324
    %v2361 = vpack.c.b16 %v2329, %v2325
    %2394 = vmatpush.bf16.msra.mxu0 %v2358
    %2395 = vmatpush.bf16.msra.mxu0 %v2354
    %2396 = vmatpush.bf16.msra.mxu0 %v2350
    %2397 = vmatpush.bf16.msra.mxu0 %v2346
    %2398 = vmatpush.bf16.msra.mxu0 %v2342
    %2399 = vmatpush.bf16.msra.mxu0 %v2338
    %2400 = vmatpush.bf16.msra.mxu0 %v2334
    %2401 = vmatpush.bf16.msra.mxu0 %v2330
    %2402 = vmatmul.bf16.gmra.mxu0 %v2199
    %v2403 = vpop.f32.mrf.mxu0
    %v2404 = vadd.f32 0.0, %v2403
    %v2405 = vpop.f32.mrf.mxu0
    %2406 = vdwg.mxu0
    %2407 = vmatpush.bf16.msra.mxu0 %v2359
    %2408 = vmatpush.bf16.msra.mxu0 %v2355
    %2409 = vmatpush.bf16.msra.mxu0 %v2351
    %2410 = vmatpush.bf16.msra.mxu0 %v2347
    %2411 = vmatpush.bf16.msra.mxu0 %v2343
    %2412 = vmatpush.bf16.msra.mxu0 %v2339
    %2413 = vmatpush.bf16.msra.mxu0 %v2335
    %2414 = vmatpush.bf16.msra.mxu0 %v2331
    %2415 = vmatmul.bf16.gmra.mxu0 %v2199
    %v2416 = vpop.f32.mrf.mxu0
    %v2417 = vadd.f32 0.0, %v2416
    %v2418 = vpop.f32.mrf.mxu0
    %2419 = vdwg.mxu0
    %2420 = vmatpush.bf16.msra.mxu0 %v2360
    %2421 = vmatpush.bf16.msra.mxu0 %v2356
    %2422 = vmatpush.bf16.msra.mxu0 %v2352
    %2423 = vmatpush.bf16.msra.mxu0 %v2348
    %2424 = vmatpush.bf16.msra.mxu0 %v2344
    %2425 = vmatpush.bf16.msra.mxu0 %v2340
    %2426 = vmatpush.bf16.msra.mxu0 %v2336
    %2427 = vmatpush.bf16.msra.mxu0 %v2332
    %2428 = vmatmul.bf16.gmra.mxu0 %v2199
    %v2429 = vpop.f32.mrf.mxu0
    %v2430 = vadd.f32 0.0, %v2429
    %v2431 = vpop.f32.mrf.mxu0
    %2432 = vdwg.mxu0
    %2433 = vmatpush.bf16.msra.mxu0 %v2361
    %2434 = vmatpush.bf16.msra.mxu0 %v2357
    %2435 = vmatpush.bf16.msra.mxu0 %v2353
    %2436 = vmatpush.bf16.msra.mxu0 %v2349
    %2437 = vmatpush.bf16.msra.mxu0 %v2345
    %2438 = vmatpush.bf16.msra.mxu0 %v2341
    %2439 = vmatpush.bf16.msra.mxu0 %v2337
    %2440 = vmatpush.bf16.msra.mxu0 %v2333
    %2441 = vmatmul.bf16.gmra.mxu0 %v2199
    %v2442 = vpop.f32.mrf.mxu0
    %v2443 = vadd.f32 0.0, %v2442
    %v2444 = vpop.f32.mrf.mxu0
    %2445 = vdwg.mxu0
    %v2446 = vadd.f32 %v225, %v2404
    %v2447 = vadd.f32 %v254, %v2417
    %v2448 = vadd.f32 %v283, %v2430
    %v2449 = vadd.f32 %v312, %v2443
    %v2450 = vxor.u32 %v2446, 2147483648
    %v2451 = vmul.f32 %v2450, 1.442695
    %v2452 = vpow.pop %v2451
    %v2453 = vadd.f32 %v2452, 1.0
    %v2454 = vrcp.pop %v2453
    %v2455 = vmul.f32 %v2453, %v2454
    %v2456 = vsub.f32 1.0, %v2455
    %v2457 = vmul.f32 %v2454, %v2456
    %v2458 = vadd.f32 %v2454, %v2457
    %vm2459 = vweird.f32 %v2453
    %vm2460 = vweird.f32 %v2454
    %vm2461 = vmor %vm2459, %vm2460
    %v2462 = vsel %vm2461, %v2454, %v2458
    %v2463 = vand.u32 2147483647, %v2453
    %vm2464 = vcmp.eq.f32.partialorder %v2463, 8.507059e+37
    %v2465 = vand.u32 %v2453, 2147483648
    %v2466 = vor.u32 1.1754944e-38, %v2465
    %v2467 = vsel %vm2464, %v2466, %v2462
    %v2468 = vmul.f32 1.0, %v2467
    %v2469 = vxor.u32 %v2447, 2147483648
    %v2470 = vmul.f32 %v2469, 1.442695
    %v2471 = vpow.pop %v2470
    %v2472 = vadd.f32 %v2471, 1.0
    %v2473 = vrcp.pop %v2472
    %v2474 = vmul.f32 %v2472, %v2473
    %v2475 = vsub.f32 1.0, %v2474
    %v2476 = vmul.f32 %v2473, %v2475
    %v2477 = vadd.f32 %v2473, %v2476
    %vm2478 = vweird.f32 %v2472
    %vm2479 = vweird.f32 %v2473
    %vm2480 = vmor %vm2478, %vm2479
    %v2481 = vsel %vm2480, %v2473, %v2477
    %v2482 = vand.u32 2147483647, %v2472
    %vm2483 = vcmp.eq.f32.partialorder %v2482, 8.507059e+37
    %v2484 = vand.u32 %v2472, 2147483648
    %v2485 = vor.u32 1.1754944e-38, %v2484
    %v2486 = vsel %vm2483, %v2485, %v2481
    %v2487 = vmul.f32 1.0, %v2486
    %v2488 = vtanh.pop %v2448
    %v2489 = vxor.u32 %v2449, 2147483648
    %v2490 = vmul.f32 %v2489, 1.442695
    %v2491 = vpow.pop %v2490
    %v2492 = vadd.f32 %v2491, 1.0
    %v2493 = vrcp.pop %v2492
    %v2494 = vmul.f32 %v2492, %v2493
    %v2495 = vsub.f32 1.0, %v2494
    %v2496 = vmul.f32 %v2493, %v2495
    %v2497 = vadd.f32 %v2493, %v2496
    %vm2498 = vweird.f32 %v2492
    %vm2499 = vweird.f32 %v2493
    %vm2500 = vmor %vm2498, %vm2499
    %v2501 = vsel %vm2500, %v2493, %v2497
    %v2502 = vand.u32 2147483647, %v2492
    %vm2503 = vcmp.eq.f32.partialorder %v2502, 8.507059e+37
    %v2504 = vand.u32 %v2492, 2147483648
    %v2505 = vor.u32 1.1754944e-38, %v2504
    %v2506 = vsel %vm2503, %v2505, %v2501
    %v2507 = vmul.f32 1.0, %v2506
    %v2508 = vmul.f32 %v2487, %v2196
    %v2509 = vmul.f32 %v2468, %v2488
    %v2510 = vadd.f32 %v2508, %v2509
    %v2511 = vtanh.pop %v2510
    %v2512 = vmul.f32 %v2507, %v2511
    %v2513 = vpack.c.bf16 %v2512, %v2512
    %s2514 = scalar_lea.vmem [#allocation15], 24
    %2515 = vst [vmem:[%s2514] sm:$0xf] %v2513
    %v2516 = vld [vmem:[#allocation9] sm:$0xff]
    %v2517 = vld [vmem:[#allocation9 + $0x8] sm:$0xff]
    %v2518 = vld [vmem:[#allocation9 + $0x10] sm:$0xff]
    %v2519 = vld [vmem:[#allocation9 + $0x18] sm:$0xff]
    %v2520 = vld [vmem:[#allocation9 + $0x20] sm:$0xff]
    %v2521 = vld [vmem:[#allocation9 + $0x28] sm:$0xff]
    %v2522 = vld [vmem:[#allocation9 + $0x30] sm:$0xff]
    %v2523 = vld [vmem:[#allocation9 + $0x38] sm:$0xff]
    %v2524 = vld [vmem:[#allocation9 + $0x40] sm:$0xff]
    %v2525 = vld [vmem:[#allocation9 + $0x48] sm:$0xff]
    %v2526 = vld [vmem:[#allocation9 + $0x50] sm:$0xff]
    %v2527 = vld [vmem:[#allocation9 + $0x58] sm:$0xff]
    %v2528 = vld [vmem:[#allocation9 + $0x60] sm:$0xff]
    %v2529 = vld [vmem:[#allocation9 + $0x68] sm:$0xff]
    %v2530 = vld [vmem:[#allocation9 + $0x70] sm:$0xff]
    %v2531 = vld [vmem:[#allocation9 + $0x78] sm:$0xff]
    %v2532 = vld [vmem:[#allocation9 + $0x80] sm:$0xff]
    %v2533 = vld [vmem:[#allocation9 + $0x88] sm:$0xff]
    %v2534 = vld [vmem:[#allocation9 + $0x90] sm:$0xff]
    %v2535 = vld [vmem:[#allocation9 + $0x98] sm:$0xff]
    %v2536 = vld [vmem:[#allocation9 + $0xa0] sm:$0xff]
    %v2537 = vld [vmem:[#allocation9 + $0xa8] sm:$0xff]
    %v2538 = vld [vmem:[#allocation9 + $0xb0] sm:$0xff]
    %v2539 = vld [vmem:[#allocation9 + $0xb8] sm:$0xff]
    %v2540 = vld [vmem:[#allocation9 + $0xc0] sm:$0xff]
    %v2541 = vld [vmem:[#allocation9 + $0xc8] sm:$0xff]
    %v2542 = vld [vmem:[#allocation9 + $0xd0] sm:$0xff]
    %v2543 = vld [vmem:[#allocation9 + $0xd8] sm:$0xff]
    %v2544 = vld [vmem:[#allocation9 + $0xe0] sm:$0xff]
    %v2545 = vld [vmem:[#allocation9 + $0xe8] sm:$0xff]
    %v2546 = vld [vmem:[#allocation9 + $0xf0] sm:$0xff]
    %v2547 = vld [vmem:[#allocation9 + $0xf8] sm:$0xff]
    %v2580 = vunpack.c.l.b16 %v2516
    %v2581 = vunpack.c.h.b16 %v2516
    %v2582 = vunpack.c.l.b16 %v2517
    %v2583 = vunpack.c.h.b16 %v2517
    %v2584 = vunpack.c.l.b16 %v2518
    %v2585 = vunpack.c.h.b16 %v2518
    %v2586 = vunpack.c.l.b16 %v2519
    %v2587 = vunpack.c.h.b16 %v2519
    %v2588 = vunpack.c.l.b16 %v2520
    %v2589 = vunpack.c.h.b16 %v2520
    %v2590 = vunpack.c.l.b16 %v2521
    %v2591 = vunpack.c.h.b16 %v2521
    %v2592 = vunpack.c.l.b16 %v2522
    %v2593 = vunpack.c.h.b16 %v2522
    %v2594 = vunpack.c.l.b16 %v2523
    %v2595 = vunpack.c.h.b16 %v2523
    %v2596 = vunpack.c.l.b16 %v2524
    %v2597 = vunpack.c.h.b16 %v2524
    %v2598 = vunpack.c.l.b16 %v2525
    %v2599 = vunpack.c.h.b16 %v2525
    %v2600 = vunpack.c.l.b16 %v2526
    %v2601 = vunpack.c.h.b16 %v2526
    %v2602 = vunpack.c.l.b16 %v2527
    %v2603 = vunpack.c.h.b16 %v2527
    %v2604 = vunpack.c.l.b16 %v2528
    %v2605 = vunpack.c.h.b16 %v2528
    %v2606 = vunpack.c.l.b16 %v2529
    %v2607 = vunpack.c.h.b16 %v2529
    %v2608 = vunpack.c.l.b16 %v2530
    %v2609 = vunpack.c.h.b16 %v2530
    %v2610 = vunpack.c.l.b16 %v2531
    %v2611 = vunpack.c.h.b16 %v2531
    %v2612 = vunpack.c.l.b16 %v2532
    %v2613 = vunpack.c.h.b16 %v2532
    %v2614 = vunpack.c.l.b16 %v2533
    %v2615 = vunpack.c.h.b16 %v2533
    %v2616 = vunpack.c.l.b16 %v2534
    %v2617 = vunpack.c.h.b16 %v2534
    %v2618 = vunpack.c.l.b16 %v2535
    %v2619 = vunpack.c.h.b16 %v2535
    %v2620 = vunpack.c.l.b16 %v2536
    %v2621 = vunpack.c.h.b16 %v2536
    %v2622 = vunpack.c.l.b16 %v2537
    %v2623 = vunpack.c.h.b16 %v2537
    %v2624 = vunpack.c.l.b16 %v2538
    %v2625 = vunpack.c.h.b16 %v2538
    %v2626 = vunpack.c.l.b16 %v2539
    %v2627 = vunpack.c.h.b16 %v2539
    %v2628 = vunpack.c.l.b16 %v2540
    %v2629 = vunpack.c.h.b16 %v2540
    %v2630 = vunpack.c.l.b16 %v2541
    %v2631 = vunpack.c.h.b16 %v2541
    %v2632 = vunpack.c.l.b16 %v2542
    %v2633 = vunpack.c.h.b16 %v2542
    %v2634 = vunpack.c.l.b16 %v2543
    %v2635 = vunpack.c.h.b16 %v2543
    %v2636 = vunpack.c.l.b16 %v2544
    %v2637 = vunpack.c.h.b16 %v2544
    %v2638 = vunpack.c.l.b16 %v2545
    %v2639 = vunpack.c.h.b16 %v2545
    %v2640 = vunpack.c.l.b16 %v2546
    %v2641 = vunpack.c.h.b16 %v2546
    %v2642 = vunpack.c.l.b16 %v2547
    %v2643 = vunpack.c.h.b16 %v2547
    %v2644 = vpack.c.b16 %v2584, %v2580
    %v2645 = vpack.c.b16 %v2585, %v2581
    %v2646 = vpack.c.b16 %v2586, %v2582
    %v2647 = vpack.c.b16 %v2587, %v2583
    %v2648 = vpack.c.b16 %v2592, %v2588
    %v2649 = vpack.c.b16 %v2593, %v2589
    %v2650 = vpack.c.b16 %v2594, %v2590
    %v2651 = vpack.c.b16 %v2595, %v2591
    %v2652 = vpack.c.b16 %v2600, %v2596
    %v2653 = vpack.c.b16 %v2601, %v2597
    %v2654 = vpack.c.b16 %v2602, %v2598
    %v2655 = vpack.c.b16 %v2603, %v2599
    %v2656 = vpack.c.b16 %v2608, %v2604
    %v2657 = vpack.c.b16 %v2609, %v2605
    %v2658 = vpack.c.b16 %v2610, %v2606
    %v2659 = vpack.c.b16 %v2611, %v2607
    %v2660 = vpack.c.b16 %v2616, %v2612
    %v2661 = vpack.c.b16 %v2617, %v2613
    %v2662 = vpack.c.b16 %v2618, %v2614
    %v2663 = vpack.c.b16 %v2619, %v2615
    %v2664 = vpack.c.b16 %v2624, %v2620
    %v2665 = vpack.c.b16 %v2625, %v2621
    %v2666 = vpack.c.b16 %v2626, %v2622
    %v2667 = vpack.c.b16 %v2627, %v2623
    %v2668 = vpack.c.b16 %v2632, %v2628
    %v2669 = vpack.c.b16 %v2633, %v2629
    %v2670 = vpack.c.b16 %v2634, %v2630
    %v2671 = vpack.c.b16 %v2635, %v2631
    %v2672 = vpack.c.b16 %v2640, %v2636
    %v2673 = vpack.c.b16 %v2641, %v2637
    %v2674 = vpack.c.b16 %v2642, %v2638
    %v2675 = vpack.c.b16 %v2643, %v2639
    %2708 = vmatpush.bf16.msra.mxu0 %v2672
    %2709 = vmatpush.bf16.msra.mxu0 %v2668
    %2710 = vmatpush.bf16.msra.mxu0 %v2664
    %2711 = vmatpush.bf16.msra.mxu0 %v2660
    %2712 = vmatpush.bf16.msra.mxu0 %v2656
    %2713 = vmatpush.bf16.msra.mxu0 %v2652
    %2714 = vmatpush.bf16.msra.mxu0 %v2648
    %2715 = vmatpush.bf16.msra.mxu0 %v2644
    %2716 = vmatmul.bf16.gmra.mxu0 %v2513
    %v2717 = vpop.f32.mrf.mxu0
    %v2718 = vadd.f32 0.0, %v2717
    %v2719 = vpop.f32.mrf.mxu0
    %2720 = vdwg.mxu0
    %2721 = vmatpush.bf16.msra.mxu0 %v2673
    %2722 = vmatpush.bf16.msra.mxu0 %v2669
    %2723 = vmatpush.bf16.msra.mxu0 %v2665
    %2724 = vmatpush.bf16.msra.mxu0 %v2661
    %2725 = vmatpush.bf16.msra.mxu0 %v2657
    %2726 = vmatpush.bf16.msra.mxu0 %v2653
    %2727 = vmatpush.bf16.msra.mxu0 %v2649
    %2728 = vmatpush.bf16.msra.mxu0 %v2645
    %2729 = vmatmul.bf16.gmra.mxu0 %v2513
    %v2730 = vpop.f32.mrf.mxu0
    %v2731 = vadd.f32 0.0, %v2730
    %v2732 = vpop.f32.mrf.mxu0
    %2733 = vdwg.mxu0
    %2734 = vmatpush.bf16.msra.mxu0 %v2674
    %2735 = vmatpush.bf16.msra.mxu0 %v2670
    %2736 = vmatpush.bf16.msra.mxu0 %v2666
    %2737 = vmatpush.bf16.msra.mxu0 %v2662
    %2738 = vmatpush.bf16.msra.mxu0 %v2658
    %2739 = vmatpush.bf16.msra.mxu0 %v2654
    %2740 = vmatpush.bf16.msra.mxu0 %v2650
    %2741 = vmatpush.bf16.msra.mxu0 %v2646
    %2742 = vmatmul.bf16.gmra.mxu0 %v2513
    %v2743 = vpop.f32.mrf.mxu0
    %v2744 = vadd.f32 0.0, %v2743
    %v2745 = vpop.f32.mrf.mxu0
    %2746 = vdwg.mxu0
    %2747 = vmatpush.bf16.msra.mxu0 %v2675
    %2748 = vmatpush.bf16.msra.mxu0 %v2671
    %2749 = vmatpush.bf16.msra.mxu0 %v2667
    %2750 = vmatpush.bf16.msra.mxu0 %v2663
    %2751 = vmatpush.bf16.msra.mxu0 %v2659
    %2752 = vmatpush.bf16.msra.mxu0 %v2655
    %2753 = vmatpush.bf16.msra.mxu0 %v2651
    %2754 = vmatpush.bf16.msra.mxu0 %v2647
    %2755 = vmatmul.bf16.gmra.mxu0 %v2513
    %v2756 = vpop.f32.mrf.mxu0
    %v2757 = vadd.f32 0.0, %v2756
    %v2758 = vpop.f32.mrf.mxu0
    %2759 = vdwg.mxu0
    %v2760 = vadd.f32 %v227, %v2718
    %v2761 = vadd.f32 %v256, %v2731
    %v2762 = vadd.f32 %v285, %v2744
    %v2763 = vadd.f32 %v314, %v2757
    %v2764 = vxor.u32 %v2760, 2147483648
    %v2765 = vmul.f32 %v2764, 1.442695
    %v2766 = vpow.pop %v2765
    %v2767 = vadd.f32 %v2766, 1.0
    %v2768 = vrcp.pop %v2767
    %v2769 = vmul.f32 %v2767, %v2768
    %v2770 = vsub.f32 1.0, %v2769
    %v2771 = vmul.f32 %v2768, %v2770
    %v2772 = vadd.f32 %v2768, %v2771
    %vm2773 = vweird.f32 %v2767
    %vm2774 = vweird.f32 %v2768
    %vm2775 = vmor %vm2773, %vm2774
    %v2776 = vsel %vm2775, %v2768, %v2772
    %v2777 = vand.u32 2147483647, %v2767
    %vm2778 = vcmp.eq.f32.partialorder %v2777, 8.507059e+37
    %v2779 = vand.u32 %v2767, 2147483648
    %v2780 = vor.u32 1.1754944e-38, %v2779
    %v2781 = vsel %vm2778, %v2780, %v2776
    %v2782 = vmul.f32 1.0, %v2781
    %v2783 = vxor.u32 %v2761, 2147483648
    %v2784 = vmul.f32 %v2783, 1.442695
    %v2785 = vpow.pop %v2784
    %v2786 = vadd.f32 %v2785, 1.0
    %v2787 = vrcp.pop %v2786
    %v2788 = vmul.f32 %v2786, %v2787
    %v2789 = vsub.f32 1.0, %v2788
    %v2790 = vmul.f32 %v2787, %v2789
    %v2791 = vadd.f32 %v2787, %v2790
    %vm2792 = vweird.f32 %v2786
    %vm2793 = vweird.f32 %v2787
    %vm2794 = vmor %vm2792, %vm2793
    %v2795 = vsel %vm2794, %v2787, %v2791
    %v2796 = vand.u32 2147483647, %v2786
    %vm2797 = vcmp.eq.f32.partialorder %v2796, 8.507059e+37
    %v2798 = vand.u32 %v2786, 2147483648
    %v2799 = vor.u32 1.1754944e-38, %v2798
    %v2800 = vsel %vm2797, %v2799, %v2795
    %v2801 = vmul.f32 1.0, %v2800
    %v2802 = vtanh.pop %v2762
    %v2803 = vxor.u32 %v2763, 2147483648
    %v2804 = vmul.f32 %v2803, 1.442695
    %v2805 = vpow.pop %v2804
    %v2806 = vadd.f32 %v2805, 1.0
    %v2807 = vrcp.pop %v2806
    %v2808 = vmul.f32 %v2806, %v2807
    %v2809 = vsub.f32 1.0, %v2808
    %v2810 = vmul.f32 %v2807, %v2809
    %v2811 = vadd.f32 %v2807, %v2810
    %vm2812 = vweird.f32 %v2806
    %vm2813 = vweird.f32 %v2807
    %vm2814 = vmor %vm2812, %vm2813
    %v2815 = vsel %vm2814, %v2807, %v2811
    %v2816 = vand.u32 2147483647, %v2806
    %vm2817 = vcmp.eq.f32.partialorder %v2816, 8.507059e+37
    %v2818 = vand.u32 %v2806, 2147483648
    %v2819 = vor.u32 1.1754944e-38, %v2818
    %v2820 = vsel %vm2817, %v2819, %v2815
    %v2821 = vmul.f32 1.0, %v2820
    %v2822 = vmul.f32 %v2801, %v2510
    %v2823 = vmul.f32 %v2782, %v2802
    %v2824 = vadd.f32 %v2822, %v2823
    %v2825 = vtanh.pop %v2824
    %v2826 = vmul.f32 %v2821, %v2825
    %v2827 = vpack.c.bf16 %v2826, %v2826
    %s2828 = scalar_lea.vmem [#allocation15], 28
    %2829 = vst [vmem:[%s2828] sm:$0xf] %v2827
    // Predicated region
    $region54: #{tpu_custom_call.1} parent=1 // pred_check
      %p2830 = pneg %p117
    $region55: #{tpu_custom_call.1} parent=1 // pred_check_branch
      %2832 = sbr.rel (%p2830) target = $region57
    $region56: #{tpu_custom_call.1} parent=1 // pred_region
      %2833 = vst [vmem:[#allocation16] sm:$0xff] %v2826
      %2834 = vst [vmem:[#allocation18] sm:$0xff] %v2824
    $region57: #{tpu_custom_call.1} parent=1 // pred_fallthru
      _
    %2835 = vst [vmem:[#allocation2] sm:$0xff] %v2826
    %2836 = vst [vmem:[#allocation3] sm:$0xff] %v2824
    // Predicated region
    $region58: #{tpu_custom_call.1} parent=1 // pred_check
      _
    $region59: #{tpu_custom_call.1} parent=1 // pred_check_branch
      %2838 = sbr.rel (0) target = $region61
    $region60: #{tpu_custom_call.1} parent=1 // pred_region
      %2840 = vsyncadd [#allocation6], 0
      %s2841 = sshll.u32 [#allocation15], 4
      %s2842 = int_to_ptr.vmem [resolvable:$true] %s2841
      %s2843 = sshll.u32 %s6, 4
      %s2844 = int_to_ptr.hbm [resolvable:$true] %s2843
      %2849 = dma.vmem_to_hbm [thread:$0]  %s2842, 512, %s2844, [#allocation6], 64, 64, 4
    $region61: #{tpu_custom_call.1} parent=1 // pred_fallthru
      _
    // Predicated region
    $region62: #{tpu_custom_call.1} parent=1 // pred_check
      _
    $region63: #{tpu_custom_call.1} parent=1 // pred_check_branch
      %2851 = sbr.rel (0) target = $region65
    $region64: #{tpu_custom_call.1} parent=1 // pred_region
      %2853 = vsyncadd [#allocation17], 0
      %s2855 = sshll.u32 [#allocation16], 4
      %s2856 = int_to_ptr.vmem [resolvable:$true] %s2855
      %s2857 = sshll.u32 %s7, 4
      %s2858 = int_to_ptr.hbm [resolvable:$true] %s2857
      %2860 = dma.vmem_to_hbm [thread:$0]  %s2856, 128, %s2858, [#allocation17]
    $region65: #{tpu_custom_call.1} parent=1 // pred_fallthru
      _
    // Predicated region
    $region66: #{tpu_custom_call.1} parent=1 // pred_check
      _
    $region67: #{tpu_custom_call.1} parent=1 // pred_check_branch
      %2862 = sbr.rel (0) target = $region69
    $region68: #{tpu_custom_call.1} parent=1 // pred_region
      %2864 = vsyncadd [#allocation17], 0
      %s2866 = sshll.u32 [#allocation18], 4
      %s2867 = int_to_ptr.vmem [resolvable:$true] %s2866
      %s2868 = sshll.u32 %s8, 4
      %s2869 = int_to_ptr.hbm [resolvable:$true] %s2868
      %2871 = dma.vmem_to_hbm [thread:$0]  %s2867, 128, %s2869, [#allocation17]
    $region69: #{tpu_custom_call.1} parent=1 // pred_fallthru
      _
    // Predicated region
    $region70: #{tpu_custom_call.1} parent=1 // pred_check
      _
    $region71: #{tpu_custom_call.1} parent=1 // pred_check_branch
      %2873 = sbr.rel (0) target = $region73
    $region72: #{tpu_custom_call.1} parent=1 // pred_region
      %2875 = dma.done [#allocation6], 512
    $region73: #{tpu_custom_call.1} parent=1 // pred_fallthru
      _
    // Predicated region
    $region74: #{tpu_custom_call.1} parent=1 // pred_check
      _
    $region75: #{tpu_custom_call.1} parent=1 // pred_check_branch
      %2877 = sbr.rel (0) target = $region77
    $region76: #{tpu_custom_call.1} parent=1 // pred_region
      %2879 = dma.done [#allocation17], 128
    $region77: #{tpu_custom_call.1} parent=1 // pred_fallthru
      _
    // Predicated region
    $region78: #{tpu_custom_call.1} parent=1 // pred_check
      _
    $region79: #{tpu_custom_call.1} parent=1 // pred_check_branch
      %2881 = sbr.rel (0) target = $region81
    $region80: #{tpu_custom_call.1} parent=1 // pred_region
      %2883 = dma.done [#allocation17], 128
    $region81: #{tpu_custom_call.1} parent=1 // pred_fallthru
      _
    %2884 = vsyncpa [#allocation5], 1
    %2885 = vsyncpa [#allocation8], 1
    %2886 = vsyncpa [#allocation11], 1
    %2887 = vsyncpa [#allocation14], 1
    %2888 = vsyncpa [#allocation6], 1
    %2889 = vsyncpa [#allocation17], 1

</llo_original>
